<compile_context>
chip_gen: v6e
topology: v6e:2x2x1
jax: 0.10.0
libtpu: 0.0.40
codegen_flags: <defaults>
</compile_context>

<pallas_src>
import functools

import jax
import jax.numpy as jnp
from jax.experimental import pallas as pl
from jax.experimental.pallas import tpu as pltpu


# -----------------------------------------------------------------------------
# Pallas kernel: fused single-modality VAE forward; grid=(2,) over modalities
# -----------------------------------------------------------------------------
def _fused_mcvae_kernel(x_ref, eps_ref,
                        enc_fc_w, enc_fc_b, enc_head_w, enc_head_b,
                        dec_fc_w, dec_fc_b, dec_out_w, dec_out_b,
                        recon_ref, z_ref, mu_ref, logvar_ref, *, latent_dim):
    """One grid step == one modality. All intermediates (h, mu, logvar, z)
    stay in VMEM/vregs; nothing round-trips HBM.

    encoder:   h = relu(x @ W1 + b1);  [mu | logvar] = h @ Wh + bh
    sample:    z_enc  = mu + eps0 * exp(0.5*logvar)   (encoder's own z)
               z_comb = mu + eps1 * exp(0.5*logvar)   (LatentCombiner re-sample)
    decoder:   recon = relu(z_comb @ W3 + b3) @ W4 + b4
    """
    # ---- encoder fc (bf16 MXU inputs, f32 accumulation) ----
    x = x_ref[0].astype(jnp.bfloat16)
    h = jnp.dot(x, enc_fc_w[0], preferred_element_type=jnp.float32)
    h = jnp.maximum(h + enc_fc_b[0], 0.0)

    # ---- mu/logvar head in f32 (feeds exp(0.5*logvar); avoid bf16 drift) ----
    ml = (jnp.dot(h, enc_head_w[0], preferred_element_type=jnp.float32)
          + enc_head_b[0])
    mu = ml[:, :latent_dim]          # lane-aligned split (latent_dim % 128 == 0)
    logvar = ml[:, latent_dim:]

    # ---- reparameterize twice in f32 (encoder z + combiner z) ----
    std = jnp.exp(0.5 * logvar)
    eps = eps_ref[0]                                   # (B, 2*latent)
    z_enc = mu + eps[:, :latent_dim] * std
    z_comb = mu + eps[:, latent_dim:] * std

    # ---- decoder on the combiner sample ----
    h2 = jnp.dot(z_comb.astype(jnp.bfloat16), dec_fc_w[0],
                 preferred_element_type=jnp.float32)
    h2 = jnp.maximum(h2 + dec_fc_b[0], 0.0)
    recon = (jnp.dot(h2.astype(jnp.bfloat16), dec_out_w[0],
                     preferred_element_type=jnp.float32) + dec_out_b[0])

    recon_ref[0] = recon.astype(recon_ref.dtype)
    z_ref[0] = z_enc.astype(z_ref.dtype)
    mu_ref[0] = mu.astype(mu_ref.dtype)
    logvar_ref[0] = logvar.astype(logvar_ref.dtype)


def mcvae_pallas_forward(stacked, x_stacked, eps, *, latent_pad):
    """stacked: dict of [2, ...] padded params; x_stacked: [2, B, in_dim_pad];
    eps: [2, B, 2*latent_pad]. Returns (recon, z, mu, logvar), each [2, B, .]."""
    M, B, in_dim = x_stacked.shape
    hidden = stacked["enc_fc_w"].shape[2]

    args = (x_stacked, eps,
            stacked["enc_fc_w"], stacked["enc_fc_b"],
            stacked["enc_head_w"], stacked["enc_head_b"],
            stacked["dec_fc_w"], stacked["dec_fc_b"],
            stacked["dec_out_w"], stacked["dec_out_b"])

    def spec(a):
        # Per-modality slab: block (1, R, C), grid index selects the modality.
        return pl.BlockSpec((1,) + a.shape[1:], lambda m: (m, 0, 0))

    in_specs = [spec(a) for a in args]
    out_specs = (
        pl.BlockSpec((1, B, in_dim), lambda m: (m, 0, 0)),
        pl.BlockSpec((1, B, latent_pad), lambda m: (m, 0, 0)),
        pl.BlockSpec((1, B, latent_pad), lambda m: (m, 0, 0)),
        pl.BlockSpec((1, B, latent_pad), lambda m: (m, 0, 0)),
    )
    out_shape = (
        jax.ShapeDtypeStruct((M, B, in_dim), jnp.float32),       # recon (flat)
        jax.ShapeDtypeStruct((M, B, latent_pad), jnp.float32),   # encoder z
        jax.ShapeDtypeStruct((M, B, latent_pad), jnp.float32),   # mu
        jax.ShapeDtypeStruct((M, B, latent_pad), jnp.float32),   # logvar
    )

    # Advisory cost so XLA schedules the fused call sensibly.
    flops = 2 * M * B * (in_dim * hidden + hidden * 2 * latent_pad
                         + latent_pad * hidden + hidden * in_dim)
    bytes_accessed = (sum(int(a.size) * a.dtype.itemsize for a in args)
                      + 4 * M * B * (in_dim + 3 * latent_pad))
    cost = pl.CostEstimate(flops=flops, transcendentals=M * B * latent_pad,
                           bytes_accessed=bytes_accessed)

    kernel = functools.partial(_fused_mcvae_kernel, latent_dim=latent_pad)
    return pl.pallas_call(
        kernel,
        grid=(M,),
        out_shape=out_shape,
        in_specs=in_specs,
        out_specs=out_specs,
        compiler_params=pltpu.CompilerParams(
            dimension_semantics=("parallel",)),   # v7x: one modality per TC
        cost_estimate=cost,
    )(*args)


# -----------------------------------------------------------------------------
# Synthetic VAE parameters (deterministic); bf16 matmul weights, f32 head/biases
# -----------------------------------------------------------------------------
def _init_linear(key, in_dim, out_dim, w_dtype=jnp.bfloat16):
    kw, kb = jax.random.split(key)
    scale = 1.0 / jnp.sqrt(jnp.float32(in_dim))
    w = ((jax.random.uniform(kw, (in_dim, out_dim), dtype=jnp.float32) * 2.0 - 1.0)
         * scale).astype(w_dtype)
    b = (jax.random.uniform(kb, (1, out_dim), dtype=jnp.float32) * 2.0 - 1.0) * scale
    return w, b


def make_vae_params(key, in_dim, hidden, latent):
    k1, k2, k3, k4, k5 = jax.random.split(key, 5)
    enc_fc_w, enc_fc_b = _init_linear(k1, in_dim, hidden)
    mu_w, mu_b = _init_linear(k2, hidden, latent, w_dtype=jnp.float32)
    lv_w, lv_b = _init_linear(k3, hidden, latent, w_dtype=jnp.float32)
    dec_fc_w, dec_fc_b = _init_linear(k4, latent, hidden)
    dec_out_w, dec_out_b = _init_linear(k5, hidden, in_dim)
    return dict(enc_fc_w=enc_fc_w, enc_fc_b=enc_fc_b,
                mu_w=mu_w, mu_b=mu_b, lv_w=lv_w, lv_b=lv_b,
                dec_fc_w=dec_fc_w, dec_fc_b=dec_fc_b,
                dec_out_w=dec_out_w, dec_out_b=dec_out_b)


def _pad_to(a, shape):
    pads = [(0, t - s) for s, t in zip(a.shape, shape)]
    return jnp.pad(a, pads)


def _pad_modality(p, latent, in_dim_pad, latent_pad, hidden):
    """Zero-pad one modality's params to the common (padded) shapes.
    Zero pads are mathematically inert on the real lanes."""
    head_w = jnp.zeros((hidden, 2 * latent_pad), jnp.float32)
    head_w = head_w.at[:, :latent].set(p["mu_w"])
    head_w = head_w.at[:, latent_pad:latent_pad + latent].set(p["lv_w"])
    head_b = jnp.zeros((1, 2 * latent_pad), jnp.float32)
    head_b = head_b.at[:, :latent].set(p["mu_b"])
    head_b = head_b.at[:, latent_pad:latent_pad + latent].set(p["lv_b"])
    return dict(
        enc_fc_w=_pad_to(p["enc_fc_w"], (in_dim_pad, hidden)),
        enc_fc_b=p["enc_fc_b"],
        enc_head_w=head_w,
        enc_head_b=head_b,
        dec_fc_w=_pad_to(p["dec_fc_w"], (latent_pad, hidden)),
        dec_fc_b=p["dec_fc_b"],
        dec_out_w=_pad_to(p["dec_out_w"], (hidden, in_dim_pad)),
        dec_out_b=_pad_to(p["dec_out_b"], (1, in_dim_pad)),
    )


def pack_mcvae_params(params_f, params_o, *, latent_f, latent_o,
                      hidden, in_dim_pad, latent_pad):
    pf = _pad_modality(params_f, latent_f, in_dim_pad, latent_pad, hidden)
    po = _pad_modality(params_o, latent_o, in_dim_pad, latent_pad, hidden)
    return {k: jnp.stack([pf[k], po[k]], axis=0) for k in pf}


# -----------------------------------------------------------------------------
# MCVAE forward (mirrors MCVAE.forward(x_oct, x_fundus))
# -----------------------------------------------------------------------------
def mcvae_forward(stacked_params, x_oct, x_fundus, key, *,
                  latent_f, latent_o, latent_pad, in_dim_pad):
    B = x_fundus.shape[0]
    xf = x_fundus.reshape(B, -1)            # flatten NCHW row-major
    xo = x_oct.reshape(B, -1)
    # TODO(synk): at real scale cast x to bf16 here (halves activation DMA).
    x_stacked = jnp.stack([_pad_to(xf, (B, in_dim_pad)),
                           _pad_to(xo, (B, in_dim_pad))], axis=0)
    # One decorrelated draw for all four eps tensors (encoder z + combiner z,
    # per modality) -- matches torch.randn_like semantics up to the RNG stream.
    eps = jax.random.normal(key, (2, B, 2 * latent_pad), dtype=jnp.float32)

    recon, z, mu, logvar = mcvae_pallas_forward(
        stacked_params, x_stacked, eps, latent_pad=latent_pad)

    nf, no = xf.shape[1], xo.shape[1]
    x_recon_f = recon[0, :, :nf].reshape(x_fundus.shape)
    x_recon_o = recon[1, :, :no].reshape(x_oct.shape)
    z_f, mu_f, logvar_f = z[0], mu[0, :, :latent_f], logvar[0, :, :latent_f]
    z_f = z_f[:, :latent_f]
    z_o = z[1, :, :latent_o]
    mu_o, logvar_o = mu[1, :, :latent_o], logvar[1, :, :latent_o]
    return (x_recon_f, x_recon_o, z_f, mu_f, logvar_f, z_o, mu_o, logvar_o)


# -----------------------------------------------------------------------------
# Main
# -----------------------------------------------------------------------------
if __name__ == "__main__":
    key = jax.random.PRNGKey(0)
    k_pf, k_po, k_xf, k_xo, k_eps = jax.random.split(key, 5)

    # B=8 fills the 8-sublane vreg rows; feature dims all multiples of 128.
    B, Hs, Ws = 8, 16, 16
    x_fundus = jax.random.normal(k_xf, (B, 3, Hs, Ws), dtype=jnp.float32)  # NCHW
    x_oct = jax.random.normal(k_xo, (B, 1, Hs, Ws), dtype=jnp.float32)     # NCHW

    hidden = 256
    latent_f = 256          # scaled-down, lane-dense stand-in for 2048
    latent_o = 128          # matches the module's OCT latent width
    in_dim_f = 3 * Hs * Ws  # 768
    in_dim_o = 1 * Hs * Ws  # 256

    # Common padded shapes: in_dim -> multiple of 128, latent -> multiple of 256
    in_dim_pad = ((max(in_dim_f, in_dim_o) + 127) // 128) * 128
    latent_pad = ((max(latent_f, latent_o) + 255) // 256) * 256

    params_f = make_vae_params(k_pf, in_dim_f, hidden, latent_f)
    params_o = make_vae_params(k_po, in_dim_o, hidden, latent_o)
    # TODO(synk): LatentCombiner.fc (Linear(2048+128)) is never used in the
    # PyTorch forward; omitted.
    stacked = pack_mcvae_params(params_f, params_o,
                                latent_f=latent_f, latent_o=latent_o,
                                hidden=hidden, in_dim_pad=in_dim_pad,
                                latent_pad=latent_pad)

    fwd = jax.jit(functools.partial(
        mcvae_forward, latent_f=latent_f, latent_o=latent_o,
        latent_pad=latent_pad, in_dim_pad=in_dim_pad))
    outputs = jax.block_until_ready(fwd(stacked, x_oct, x_fundus, k_eps))

    (x_recon_f, x_recon_o, z_f, mu_f, logvar_f, z_o, mu_o, logvar_o) = outputs
    assert x_recon_f.shape == x_fundus.shape
    assert x_recon_o.shape == x_oct.shape
    assert z_f.shape == (B, latent_f)
    assert mu_f.shape == (B, latent_f) and logvar_f.shape == (B, latent_f)
    assert z_o.shape == (B, latent_o)
    assert mu_o.shape == (B, latent_o) and logvar_o.shape == (B, latent_o)
    for arr in outputs:
        assert bool(jnp.all(jnp.isfinite(arr)))

    print("KERNEL_OK")
</pallas_src>

<mosaic_0001>
module attributes {stable_mosaic.version = 11 : i64} {
  func.func @_fused_mcvae_kernel(%arg0: i32, %arg1: memref<1x8x768xf32, #tpu.memory_space<vmem>>, %arg2: memref<1x8x512xf32, #tpu.memory_space<vmem>>, %arg3: memref<1x768x256xbf16, #tpu.memory_space<vmem>>, %arg4: memref<1x1x256xf32, #tpu.memory_space<vmem>>, %arg5: memref<1x256x512xf32, #tpu.memory_space<vmem>>, %arg6: memref<1x1x512xf32, #tpu.memory_space<vmem>>, %arg7: memref<1x256x256xbf16, #tpu.memory_space<vmem>>, %arg8: memref<1x1x256xf32, #tpu.memory_space<vmem>>, %arg9: memref<1x256x768xbf16, #tpu.memory_space<vmem>>, %arg10: memref<1x1x768xf32, #tpu.memory_space<vmem>>, %arg11: memref<1x8x768xf32, #tpu.memory_space<vmem>>, %arg12: memref<1x8x256xf32, #tpu.memory_space<vmem>>, %arg13: memref<1x8x256xf32, #tpu.memory_space<vmem>>, %arg14: memref<1x8x256xf32, #tpu.memory_space<vmem>>) attributes {dimension_semantics = [#tpu.dimension_semantics<parallel>], iteration_bounds = array<i64: 2>, scalar_prefetch = 0 : i64, scratch_operands = 0 : i64, tpu.core_type = #tpu.core_type<tc>, window_params = [{transform_indices = @transform_0, window_bounds = array<i64: 1, 8, 768>}, {transform_indices = @transform_1, window_bounds = array<i64: 1, 8, 512>}, {transform_indices = @transform_2, window_bounds = array<i64: 1, 768, 256>}, {transform_indices = @transform_3, window_bounds = array<i64: 1, 1, 256>}, {transform_indices = @transform_4, window_bounds = array<i64: 1, 256, 512>}, {transform_indices = @transform_5, window_bounds = array<i64: 1, 1, 512>}, {transform_indices = @transform_6, window_bounds = array<i64: 1, 256, 256>}, {transform_indices = @transform_7, window_bounds = array<i64: 1, 1, 256>}, {transform_indices = @transform_8, window_bounds = array<i64: 1, 256, 768>}, {transform_indices = @transform_9, window_bounds = array<i64: 1, 1, 768>}, {transform_indices = @transform_10, window_bounds = array<i64: 1, 8, 768>}, {transform_indices = @transform_11, window_bounds = array<i64: 1, 8, 256>}, {transform_indices = @transform_12, window_bounds = array<i64: 1, 8, 256>}, {transform_indices = @transform_13, window_bounds = array<i64: 1, 8, 256>}]} {
    %c0 = arith.constant 0 : index
    %c0_0 = arith.constant 0 : index
    %c0_1 = arith.constant 0 : index
    %0 = vector.load %arg1[%c0, %c0_0, %c0_1] : memref<1x8x768xf32, #tpu.memory_space<vmem>>, vector<1x8x768xf32>
    %1 = vector.shape_cast %0 : vector<1x8x768xf32> to vector<8x768xf32>
    %2 = arith.truncf %1 : vector<8x768xf32> to vector<8x768xbf16>
    %c0_2 = arith.constant 0 : index
    %c0_3 = arith.constant 0 : index
    %c0_4 = arith.constant 0 : index
    %3 = vector.load %arg3[%c0_2, %c0_3, %c0_4] : memref<1x768x256xbf16, #tpu.memory_space<vmem>>, vector<1x768x256xbf16>
    %4 = vector.shape_cast %3 : vector<1x768x256xbf16> to vector<768x256xbf16>
    %cst = arith.constant dense<0.000000e+00> : vector<8x256xf32>
    %5 = tpu.matmul %2, %4, %cst {dimension_numbers = #tpu.dot_dimension_numbers<[1], [0], [0], [1], [0, 0, 1, 1], [], []>} : vector<8x768xbf16>, vector<768x256xbf16>, vector<8x256xf32> -> vector<8x256xf32>
    %c0_5 = arith.constant 0 : index
    %c0_6 = arith.constant 0 : index
    %c0_7 = arith.constant 0 : index
    %6 = vector.load %arg4[%c0_5, %c0_6, %c0_7] : memref<1x1x256xf32, #tpu.memory_space<vmem>>, vector<1x1x256xf32>
    %7 = vector.shape_cast %6 : vector<1x1x256xf32> to vector<1x256xf32>
    %8 = vector.broadcast %7 : vector<1x256xf32> to vector<8x256xf32>
    %9 = arith.addf %5, %8 : vector<8x256xf32>
    %cst_8 = arith.constant 0.000000e+00 : f32
    %10 = vector.broadcast %cst_8 : f32 to vector<8x256xf32>
    %11 = arith.maximumf %9, %10 : vector<8x256xf32>
    %c0_9 = arith.constant 0 : index
    %c0_10 = arith.constant 0 : index
    %c0_11 = arith.constant 0 : index
    %12 = vector.load %arg5[%c0_9, %c0_10, %c0_11] : memref<1x256x512xf32, #tpu.memory_space<vmem>>, vector<1x256x512xf32>
    %13 = vector.shape_cast %12 : vector<1x256x512xf32> to vector<256x512xf32>
    %cst_12 = arith.constant dense<0.000000e+00> : vector<8x512xf32>
    %14 = tpu.matmul %11, %13, %cst_12 {dimension_numbers = #tpu.dot_dimension_numbers<[1], [0], [0], [1], [0, 0, 1, 1], [], []>} : vector<8x256xf32>, vector<256x512xf32>, vector<8x512xf32> -> vector<8x512xf32>
    %c0_13 = arith.constant 0 : index
    %c0_14 = arith.constant 0 : index
    %c0_15 = arith.constant 0 : index
    %15 = vector.load %arg6[%c0_13, %c0_14, %c0_15] : memref<1x1x512xf32, #tpu.memory_space<vmem>>, vector<1x1x512xf32>
    %16 = vector.shape_cast %15 : vector<1x1x512xf32> to vector<1x512xf32>
    %17 = vector.broadcast %16 : vector<1x512xf32> to vector<8x512xf32>
    %18 = arith.addf %14, %17 : vector<8x512xf32>
    %19 = vector.extract_strided_slice %18 {offsets = [0, 0], sizes = [8, 256], strides = [1, 1]} : vector<8x512xf32> to vector<8x256xf32>
    %20 = vector.extract_strided_slice %18 {offsets = [0, 256], sizes = [8, 256], strides = [1, 1]} : vector<8x512xf32> to vector<8x256xf32>
    %cst_16 = arith.constant 5.000000e-01 : f32
    %21 = vector.broadcast %cst_16 : f32 to vector<8x256xf32>
    %22 = arith.mulf %21, %20 : vector<8x256xf32>
    %23 = math.exp %22 : vector<8x256xf32>
    %c0_17 = arith.constant 0 : index
    %c0_18 = arith.constant 0 : index
    %c0_19 = arith.constant 0 : index
    %24 = vector.load %arg2[%c0_17, %c0_18, %c0_19] : memref<1x8x512xf32, #tpu.memory_space<vmem>>, vector<1x8x512xf32>
    %25 = vector.shape_cast %24 : vector<1x8x512xf32> to vector<8x512xf32>
    %26 = vector.extract_strided_slice %25 {offsets = [0, 0], sizes = [8, 256], strides = [1, 1]} : vector<8x512xf32> to vector<8x256xf32>
    %27 = arith.mulf %26, %23 : vector<8x256xf32>
    %28 = arith.addf %19, %27 : vector<8x256xf32>
    %29 = vector.extract_strided_slice %25 {offsets = [0, 256], sizes = [8, 256], strides = [1, 1]} : vector<8x512xf32> to vector<8x256xf32>
    %30 = arith.mulf %29, %23 : vector<8x256xf32>
    %31 = arith.addf %19, %30 : vector<8x256xf32>
    %32 = arith.truncf %31 : vector<8x256xf32> to vector<8x256xbf16>
    %c0_20 = arith.constant 0 : index
    %c0_21 = arith.constant 0 : index
    %c0_22 = arith.constant 0 : index
    %33 = vector.load %arg7[%c0_20, %c0_21, %c0_22] : memref<1x256x256xbf16, #tpu.memory_space<vmem>>, vector<1x256x256xbf16>
    %34 = vector.shape_cast %33 : vector<1x256x256xbf16> to vector<256x256xbf16>
    %cst_23 = arith.constant dense<0.000000e+00> : vector<8x256xf32>
    %35 = tpu.matmul %32, %34, %cst_23 {dimension_numbers = #tpu.dot_dimension_numbers<[1], [0], [0], [1], [0, 0, 1, 1], [], []>} : vector<8x256xbf16>, vector<256x256xbf16>, vector<8x256xf32> -> vector<8x256xf32>
    %c0_24 = arith.constant 0 : index
    %c0_25 = arith.constant 0 : index
    %c0_26 = arith.constant 0 : index
    %36 = vector.load %arg8[%c0_24, %c0_25, %c0_26] : memref<1x1x256xf32, #tpu.memory_space<vmem>>, vector<1x1x256xf32>
    %37 = vector.shape_cast %36 : vector<1x1x256xf32> to vector<1x256xf32>
    %38 = vector.broadcast %37 : vector<1x256xf32> to vector<8x256xf32>
    %39 = arith.addf %35, %38 : vector<8x256xf32>
    %cst_27 = arith.constant 0.000000e+00 : f32
    %40 = vector.broadcast %cst_27 : f32 to vector<8x256xf32>
    %41 = arith.maximumf %39, %40 : vector<8x256xf32>
    %42 = arith.truncf %41 : vector<8x256xf32> to vector<8x256xbf16>
    %c0_28 = arith.constant 0 : index
    %c0_29 = arith.constant 0 : index
    %c0_30 = arith.constant 0 : index
    %43 = vector.load %arg9[%c0_28, %c0_29, %c0_30] : memref<1x256x768xbf16, #tpu.memory_space<vmem>>, vector<1x256x768xbf16>
    %44 = vector.shape_cast %43 : vector<1x256x768xbf16> to vector<256x768xbf16>
    %cst_31 = arith.constant dense<0.000000e+00> : vector<8x768xf32>
    %45 = tpu.matmul %42, %44, %cst_31 {dimension_numbers = #tpu.dot_dimension_numbers<[1], [0], [0], [1], [0, 0, 1, 1], [], []>} : vector<8x256xbf16>, vector<256x768xbf16>, vector<8x768xf32> -> vector<8x768xf32>
    %c0_32 = arith.constant 0 : index
    %c0_33 = arith.constant 0 : index
    %c0_34 = arith.constant 0 : index
    %46 = vector.load %arg10[%c0_32, %c0_33, %c0_34] : memref<1x1x768xf32, #tpu.memory_space<vmem>>, vector<1x1x768xf32>
    %47 = vector.shape_cast %46 : vector<1x1x768xf32> to vector<1x768xf32>
    %48 = vector.broadcast %47 : vector<1x768xf32> to vector<8x768xf32>
    %49 = arith.addf %45, %48 : vector<8x768xf32>
    %c0_35 = arith.constant 0 : index
    %c0_36 = arith.constant 0 : index
    %c0_37 = arith.constant 0 : index
    %50 = vector.load %arg11[%c0_35, %c0_36, %c0_37] : memref<1x8x768xf32, #tpu.memory_space<vmem>>, vector<1x8x768xf32>
    %51 = vector.shape_cast %50 : vector<1x8x768xf32> to vector<8x768xf32>
    %52 = vector.shape_cast %49 : vector<8x768xf32> to vector<1x8x768xf32>
    tpu.vector_store %arg11[%c0_35, %c0_36, %c0_37], %52 {strides = array<i32>} : memref<1x8x768xf32, #tpu.memory_space<vmem>>, vector<1x8x768xf32>,
    %c0_38 = arith.constant 0 : index
    %c0_39 = arith.constant 0 : index
    %c0_40 = arith.constant 0 : index
    %53 = vector.load %arg12[%c0_38, %c0_39, %c0_40] : memref<1x8x256xf32, #tpu.memory_space<vmem>>, vector<1x8x256xf32>
    %54 = vector.shape_cast %53 : vector<1x8x256xf32> to vector<8x256xf32>
    %55 = vector.shape_cast %28 : vector<8x256xf32> to vector<1x8x256xf32>
    tpu.vector_store %arg12[%c0_38, %c0_39, %c0_40], %55 {strides = array<i32>} : memref<1x8x256xf32, #tpu.memory_space<vmem>>, vector<1x8x256xf32>,
    %c0_41 = arith.constant 0 : index
    %c0_42 = arith.constant 0 : index
    %c0_43 = arith.constant 0 : index
    %56 = vector.load %arg13[%c0_41, %c0_42, %c0_43] : memref<1x8x256xf32, #tpu.memory_space<vmem>>, vector<1x8x256xf32>
    %57 = vector.shape_cast %56 : vector<1x8x256xf32> to vector<8x256xf32>
    %58 = vector.shape_cast %19 : vector<8x256xf32> to vector<1x8x256xf32>
    tpu.vector_store %arg13[%c0_41, %c0_42, %c0_43], %58 {strides = array<i32>} : memref<1x8x256xf32, #tpu.memory_space<vmem>>, vector<1x8x256xf32>,
    %c0_44 = arith.constant 0 : index
    %c0_45 = arith.constant 0 : index
    %c0_46 = arith.constant 0 : index
    %59 = vector.load %arg14[%c0_44, %c0_45, %c0_46] : memref<1x8x256xf32, #tpu.memory_space<vmem>>, vector<1x8x256xf32>
    %60 = vector.shape_cast %59 : vector<1x8x256xf32> to vector<8x256xf32>
    %61 = vector.shape_cast %20 : vector<8x256xf32> to vector<1x8x256xf32>
    tpu.vector_store %arg14[%c0_44, %c0_45, %c0_46], %61 {strides = array<i32>} : memref<1x8x256xf32, #tpu.memory_space<vmem>>, vector<1x8x256xf32>,
    return
  }
  func.func @transform_0(%arg0: i32) -> (i32, i32, i32) {
    %c0_i32 = arith.constant 0 : i32
    %c0_i32_0 = arith.constant 0 : i32
    %c0_i32_1 = arith.constant 0 : i32
    return %arg0, %c0_i32, %c0_i32_0 : i32, i32, i32
  }
  func.func @transform_1(%arg0: i32) -> (i32, i32, i32) {
    %c0_i32 = arith.constant 0 : i32
    %c0_i32_0 = arith.constant 0 : i32
    %c0_i32_1 = arith.constant 0 : i32
    return %arg0, %c0_i32, %c0_i32_0 : i32, i32, i32
  }
  func.func @transform_2(%arg0: i32) -> (i32, i32, i32) {
    %c0_i32 = arith.constant 0 : i32
    %c0_i32_0 = arith.constant 0 : i32
    %c0_i32_1 = arith.constant 0 : i32
    return %arg0, %c0_i32, %c0_i32_0 : i32, i32, i32
  }
  func.func @transform_3(%arg0: i32) -> (i32, i32, i32) {
    %c0_i32 = arith.constant 0 : i32
    %c0_i32_0 = arith.constant 0 : i32
    %c0_i32_1 = arith.constant 0 : i32
    return %arg0, %c0_i32, %c0_i32_0 : i32, i32, i32
  }
  func.func @transform_4(%arg0: i32) -> (i32, i32, i32) {
    %c0_i32 = arith.constant 0 : i32
    %c0_i32_0 = arith.constant 0 : i32
    %c0_i32_1 = arith.constant 0 : i32
    return %arg0, %c0_i32, %c0_i32_0 : i32, i32, i32
  }
  func.func @transform_5(%arg0: i32) -> (i32, i32, i32) {
    %c0_i32 = arith.constant 0 : i32
    %c0_i32_0 = arith.constant 0 : i32
    %c0_i32_1 = arith.constant 0 : i32
    return %arg0, %c0_i32, %c0_i32_0 : i32, i32, i32
  }
  func.func @transform_6(%arg0: i32) -> (i32, i32, i32) {
    %c0_i32 = arith.constant 0 : i32
    %c0_i32_0 = arith.constant 0 : i32
    %c0_i32_1 = arith.constant 0 : i32
    return %arg0, %c0_i32, %c0_i32_0 : i32, i32, i32
  }
  func.func @transform_7(%arg0: i32) -> (i32, i32, i32) {
    %c0_i32 = arith.constant 0 : i32
    %c0_i32_0 = arith.constant 0 : i32
    %c0_i32_1 = arith.constant 0 : i32
    return %arg0, %c0_i32, %c0_i32_0 : i32, i32, i32
  }
  func.func @transform_8(%arg0: i32) -> (i32, i32, i32) {
    %c0_i32 = arith.constant 0 : i32
    %c0_i32_0 = arith.constant 0 : i32
    %c0_i32_1 = arith.constant 0 : i32
    return %arg0, %c0_i32, %c0_i32_0 : i32, i32, i32
  }
  func.func @transform_9(%arg0: i32) -> (i32, i32, i32) {
    %c0_i32 = arith.constant 0 : i32
    %c0_i32_0 = arith.constant 0 : i32
    %c0_i32_1 = arith.constant 0 : i32
    return %arg0, %c0_i32, %c0_i32_0 : i32, i32, i32
  }
  func.func @transform_10(%arg0: i32) -> (i32, i32, i32) {
    %c0_i32 = arith.constant 0 : i32
    %c0_i32_0 = arith.constant 0 : i32
    %c0_i32_1 = arith.constant 0 : i32
    return %arg0, %c0_i32, %c0_i32_0 : i32, i32, i32
  }
  func.func @transform_11(%arg0: i32) -> (i32, i32, i32) {
    %c0_i32 = arith.constant 0 : i32
    %c0_i32_0 = arith.constant 0 : i32
    %c0_i32_1 = arith.constant 0 : i32
    return %arg0, %c0_i32, %c0_i32_0 : i32, i32, i32
  }
  func.func @transform_12(%arg0: i32) -> (i32, i32, i32) {
    %c0_i32 = arith.constant 0 : i32
    %c0_i32_0 = arith.constant 0 : i32
    %c0_i32_1 = arith.constant 0 : i32
    return %arg0, %c0_i32, %c0_i32_0 : i32, i32, i32
  }
  func.func @transform_13(%arg0: i32) -> (i32, i32, i32) {
    %c0_i32 = arith.constant 0 : i32
    %c0_i32_0 = arith.constant 0 : i32
    %c0_i32_1 = arith.constant 0 : i32
    return %arg0, %c0_i32, %c0_i32_0 : i32, i32, i32
  }
}

</mosaic_0001>

<llo_original>
// kernel: squeeze.13
$region0: #{squeeze.13}
  %s0 = inlined_call_operand.vmem [shape: f32[1,8,256], index: 0, kind: input, shape index: {}]
  %s1 = inlined_call_operand.hbm [shape: f32[8,1,16,16], index: 1, kind: output, shape index: {}]
  $region1: #{squeeze.13} parent=0
    #allocation0 [shape = 'u8[65536]{0}', space=vmem, size = 0x10000, scoped, tag = 'operand span for operand 1']
    #allocation1 [shape = 's32[1]{0}', space=sflag, size = 0x4, scoped, tag = 'scoped memory for squeeze.13']
    %2 = vsyncpa [#allocation1], 0
    %v3 = vld [vmem:[%s0] sm:$0xff]
    %vm4 = vcmask 130048
    %5 = vst.msk [vmem:[#allocation0] ss:$16 sm:$0x3] %vm4, %v3
    %6 = vst.msk [vmem:[#allocation0] ss:$16 sm:$0xc] %vm4, %v3
    %7 = vst.msk [vmem:[#allocation0] ss:$16 sm:$0x30] %vm4, %v3
    %8 = vst.msk [vmem:[#allocation0] ss:$16 sm:$0xc0] %vm4, %v3
    %s9 = scalar_lea.vmem %s0, 8
    %v10 = vld [vmem:[%s9] sm:$0xff]
    %vm11 = vcmask 130048
    %s12 = scalar_lea.vmem [#allocation0], 8
    %13 = vst.msk [vmem:[%s12] ss:$16 sm:$0x3] %vm11, %v10
    %s14 = scalar_lea.vmem [#allocation0], 8
    %15 = vst.msk [vmem:[%s14] ss:$16 sm:$0xc] %vm11, %v10
    %s16 = scalar_lea.vmem [#allocation0], 8
    %17 = vst.msk [vmem:[%s16] ss:$16 sm:$0x30] %vm11, %v10
    %s18 = scalar_lea.vmem [#allocation0], 8
    %19 = vst.msk [vmem:[%s18] ss:$16 sm:$0xc0] %vm11, %v10
    %v20 = vld.sshfl [vmem:[%s0] sm:$0xff pattern:$0xb3a29180]
    %21 = vrot.lane.b32.xlu0 %v20, 112
    %v22 = vpop.permute.xlu0 %21
    %vm23 = vcmask 130048
    %s24 = scalar_lea.vmem [#allocation0], 1
    %25 = vst.msk [vmem:[%s24] ss:$8 sm:$0xf] %vm23, %v22
    %s26 = scalar_lea.vmem [#allocation0], 1
    %27 = vst.msk [vmem:[%s26] ss:$8 sm:$0xf0] %vm23, %v22
    %s28 = scalar_lea.vmem %s0, 4
    %v29 = vld.sshfl [vmem:[%s28] sm:$0xff pattern:$0xb3a29180]
    %30 = vrot.lane.b32.xlu0 %v29, 112
    %v31 = vpop.permute.xlu0 %30
    %vm32 = vcmask 130048
    %s33 = scalar_lea.vmem [#allocation0], 65
    %34 = vst.msk [vmem:[%s33] ss:$8 sm:$0xf] %vm32, %v31
    %s35 = scalar_lea.vmem [#allocation0], 65
    %36 = vst.msk [vmem:[%s35] ss:$8 sm:$0xf0] %vm32, %v31
    %v37 = vld.sshfl [vmem:[%s0] sm:$0xff pattern:$0xb3a29180]
    %38 = vrot.lane.b32.xlu0 %v37, 96
    %v39 = vpop.permute.xlu0 %38
    %vm40 = vcmask 130048
    %s41 = scalar_lea.vmem [#allocation0], 2
    %42 = vst.msk [vmem:[%s41] ss:$8 sm:$0xf] %vm40, %v39
    %s43 = scalar_lea.vmem [#allocation0], 2
    %44 = vst.msk [vmem:[%s43] ss:$8 sm:$0xf0] %vm40, %v39
    %s45 = scalar_lea.vmem %s0, 4
    %v46 = vld.sshfl [vmem:[%s45] sm:$0xff pattern:$0xb3a29180]
    %47 = vrot.lane.b32.xlu0 %v46, 96
    %v48 = vpop.permute.xlu0 %47
    %vm49 = vcmask 130048
    %s50 = scalar_lea.vmem [#allocation0], 66
    %51 = vst.msk [vmem:[%s50] ss:$8 sm:$0xf] %vm49, %v48
    %s52 = scalar_lea.vmem [#allocation0], 66
    %53 = vst.msk [vmem:[%s52] ss:$8 sm:$0xf0] %vm49, %v48
    %v54 = vld.sshfl [vmem:[%s0] sm:$0xff pattern:$0xb3a29180]
    %55 = vrot.lane.b32.xlu0 %v54, 80
    %v56 = vpop.permute.xlu0 %55
    %vm57 = vcmask 130048
    %s58 = scalar_lea.vmem [#allocation0], 3
    %59 = vst.msk [vmem:[%s58] ss:$8 sm:$0xf] %vm57, %v56
    %s60 = scalar_lea.vmem [#allocation0], 3
    %61 = vst.msk [vmem:[%s60] ss:$8 sm:$0xf0] %vm57, %v56
    %s62 = scalar_lea.vmem %s0, 4
    %v63 = vld.sshfl [vmem:[%s62] sm:$0xff pattern:$0xb3a29180]
    %64 = vrot.lane.b32.xlu0 %v63, 80
    %v65 = vpop.permute.xlu0 %64
    %vm66 = vcmask 130048
    %s67 = scalar_lea.vmem [#allocation0], 67
    %68 = vst.msk [vmem:[%s67] ss:$8 sm:$0xf] %vm66, %v65
    %s69 = scalar_lea.vmem [#allocation0], 67
    %70 = vst.msk [vmem:[%s69] ss:$8 sm:$0xf0] %vm66, %v65
    %v71 = vld.sshfl [vmem:[%s0] sm:$0xff pattern:$0xb3a29180]
    %72 = vrot.lane.b32.xlu0 %v71, 64
    %v73 = vpop.permute.xlu0 %72
    %vm74 = vcmask 130048
    %s75 = scalar_lea.vmem [#allocation0], 4
    %76 = vst.msk [vmem:[%s75] ss:$8 sm:$0xf] %vm74, %v73
    %s77 = scalar_lea.vmem [#allocation0], 4
    %78 = vst.msk [vmem:[%s77] ss:$8 sm:$0xf0] %vm74, %v73
    %s79 = scalar_lea.vmem %s0, 4
    %v80 = vld.sshfl [vmem:[%s79] sm:$0xff pattern:$0xb3a29180]
    %81 = vrot.lane.b32.xlu0 %v80, 64
    %v82 = vpop.permute.xlu0 %81
    %vm83 = vcmask 130048
    %s84 = scalar_lea.vmem [#allocation0], 68
    %85 = vst.msk [vmem:[%s84] ss:$8 sm:$0xf] %vm83, %v82
    %s86 = scalar_lea.vmem [#allocation0], 68
    %87 = vst.msk [vmem:[%s86] ss:$8 sm:$0xf0] %vm83, %v82
    %v88 = vld.sshfl [vmem:[%s0] sm:$0xff pattern:$0xb3a29180]
    %89 = vrot.lane.b32.xlu0 %v88, 48
    %v90 = vpop.permute.xlu0 %89
    %vm91 = vcmask 130048
    %s92 = scalar_lea.vmem [#allocation0], 5
    %93 = vst.msk [vmem:[%s92] ss:$8 sm:$0xf] %vm91, %v90
    %s94 = scalar_lea.vmem [#allocation0], 5
    %95 = vst.msk [vmem:[%s94] ss:$8 sm:$0xf0] %vm91, %v90
    %s96 = scalar_lea.vmem %s0, 4
    %v97 = vld.sshfl [vmem:[%s96] sm:$0xff pattern:$0xb3a29180]
    %98 = vrot.lane.b32.xlu0 %v97, 48
    %v99 = vpop.permute.xlu0 %98
    %vm100 = vcmask 130048
    %s101 = scalar_lea.vmem [#allocation0], 69
    %102 = vst.msk [vmem:[%s101] ss:$8 sm:$0xf] %vm100, %v99
    %s103 = scalar_lea.vmem [#allocation0], 69
    %104 = vst.msk [vmem:[%s103] ss:$8 sm:$0xf0] %vm100, %v99
    %v105 = vld.sshfl [vmem:[%s0] sm:$0xff pattern:$0xb3a29180]
    %106 = vrot.lane.b32.xlu0 %v105, 32
    %v107 = vpop.permute.xlu0 %106
    %vm108 = vcmask 130048
    %s109 = scalar_lea.vmem [#allocation0], 6
    %110 = vst.msk [vmem:[%s109] ss:$8 sm:$0xf] %vm108, %v107
    %s111 = scalar_lea.vmem [#allocation0], 6
    %112 = vst.msk [vmem:[%s111] ss:$8 sm:$0xf0] %vm108, %v107
    %s113 = scalar_lea.vmem %s0, 4
    %v114 = vld.sshfl [vmem:[%s113] sm:$0xff pattern:$0xb3a29180]
    %115 = vrot.lane.b32.xlu0 %v114, 32
    %v116 = vpop.permute.xlu0 %115
    %vm117 = vcmask 130048
    %s118 = scalar_lea.vmem [#allocation0], 70
    %119 = vst.msk [vmem:[%s118] ss:$8 sm:$0xf] %vm117, %v116
    %s120 = scalar_lea.vmem [#allocation0], 70
    %121 = vst.msk [vmem:[%s120] ss:$8 sm:$0xf0] %vm117, %v116
    %v122 = vld.sshfl [vmem:[%s0] sm:$0xff pattern:$0xb3a29180]
    %123 = vrot.lane.b32.xlu0 %v122, 16
    %v124 = vpop.permute.xlu0 %123
    %vm125 = vcmask 130048
    %s126 = scalar_lea.vmem [#allocation0], 7
    %127 = vst.msk [vmem:[%s126] ss:$8 sm:$0xf] %vm125, %v124
    %s128 = scalar_lea.vmem [#allocation0], 7
    %129 = vst.msk [vmem:[%s128] ss:$8 sm:$0xf0] %vm125, %v124
    %s130 = scalar_lea.vmem %s0, 4
    %v131 = vld.sshfl [vmem:[%s130] sm:$0xff pattern:$0xb3a29180]
    %132 = vrot.lane.b32.xlu0 %v131, 16
    %v133 = vpop.permute.xlu0 %132
    %vm134 = vcmask 130048
    %s135 = scalar_lea.vmem [#allocation0], 71
    %136 = vst.msk [vmem:[%s135] ss:$8 sm:$0xf] %vm134, %v133
    %s137 = scalar_lea.vmem [#allocation0], 71
    %138 = vst.msk [vmem:[%s137] ss:$8 sm:$0xf0] %vm134, %v133
    %s140 = ssub.s32 2048, 2048
    %141 = vsyncadd [#allocation1], %s140
    %s143 = sshll.u32 [#allocation0], 4
    %s144 = int_to_ptr.vmem [resolvable:$true] %s143
    %146 = dma.vmem_to_hbm [thread:$0]  %s144, 2048, %s1, [#allocation1]
    %147 = dma.done [#allocation1], 2048
    %148 = vsyncpa [#allocation1], 1

// kernel: squeeze.12
$region0: #{squeeze.12}
  %s0 = inlined_call_operand.vmem [shape: f32[1,8,768], index: 0, kind: input, shape index: {}]
  %s1 = inlined_call_operand.hbm [shape: f32[8,3,16,16], index: 1, kind: output, shape index: {}]
  $region1: #{squeeze.12} parent=0
    #allocation0 [shape = 'u8[196608]{0}', space=vmem, size = 0x30000, scoped, tag = 'operand span for operand 1']
    #allocation1 [shape = 's32[1]{0}', space=sflag, size = 0x4, scoped, tag = 'scoped memory for squeeze.12']
    %2 = vsyncpa [#allocation1], 0
    %v3 = vld [vmem:[%s0] sm:$0xff]
    %vm4 = vcmask 130048
    %5 = vst.msk [vmem:[#allocation0] ss:$48 sm:$0x3] %vm4, %v3
    %6 = vst.msk [vmem:[#allocation0] ss:$48 sm:$0xc] %vm4, %v3
    %7 = vst.msk [vmem:[#allocation0] ss:$48 sm:$0x30] %vm4, %v3
    %8 = vst.msk [vmem:[#allocation0] ss:$48 sm:$0xc0] %vm4, %v3
    %s9 = scalar_lea.vmem %s0, 8
    %v10 = vld [vmem:[%s9] sm:$0xff]
    %vm11 = vcmask 130048
    %s12 = scalar_lea.vmem [#allocation0], 8
    %13 = vst.msk [vmem:[%s12] ss:$48 sm:$0x3] %vm11, %v10
    %s14 = scalar_lea.vmem [#allocation0], 8
    %15 = vst.msk [vmem:[%s14] ss:$48 sm:$0xc] %vm11, %v10
    %s16 = scalar_lea.vmem [#allocation0], 8
    %17 = vst.msk [vmem:[%s16] ss:$48 sm:$0x30] %vm11, %v10
    %s18 = scalar_lea.vmem [#allocation0], 8
    %19 = vst.msk [vmem:[%s18] ss:$48 sm:$0xc0] %vm11, %v10
    %s20 = scalar_lea.vmem %s0, 16
    %v21 = vld [vmem:[%s20] sm:$0xff]
    %vm22 = vcmask 130048
    %s23 = scalar_lea.vmem [#allocation0], 16
    %24 = vst.msk [vmem:[%s23] ss:$48 sm:$0x3] %vm22, %v21
    %s25 = scalar_lea.vmem [#allocation0], 16
    %26 = vst.msk [vmem:[%s25] ss:$48 sm:$0xc] %vm22, %v21
    %s27 = scalar_lea.vmem [#allocation0], 16
    %28 = vst.msk [vmem:[%s27] ss:$48 sm:$0x30] %vm22, %v21
    %s29 = scalar_lea.vmem [#allocation0], 16
    %30 = vst.msk [vmem:[%s29] ss:$48 sm:$0xc0] %vm22, %v21
    %s31 = scalar_lea.vmem %s0, 24
    %v32 = vld [vmem:[%s31] sm:$0xff]
    %vm33 = vcmask 130048
    %s34 = scalar_lea.vmem [#allocation0], 24
    %35 = vst.msk [vmem:[%s34] ss:$48 sm:$0x3] %vm33, %v32
    %s36 = scalar_lea.vmem [#allocation0], 24
    %37 = vst.msk [vmem:[%s36] ss:$48 sm:$0xc] %vm33, %v32
    %s38 = scalar_lea.vmem [#allocation0], 24
    %39 = vst.msk [vmem:[%s38] ss:$48 sm:$0x30] %vm33, %v32
    %s40 = scalar_lea.vmem [#allocation0], 24
    %41 = vst.msk [vmem:[%s40] ss:$48 sm:$0xc0] %vm33, %v32
    %s42 = scalar_lea.vmem %s0, 32
    %v43 = vld [vmem:[%s42] sm:$0xff]
    %vm44 = vcmask 130048
    %s45 = scalar_lea.vmem [#allocation0], 32
    %46 = vst.msk [vmem:[%s45] ss:$48 sm:$0x3] %vm44, %v43
    %s47 = scalar_lea.vmem [#allocation0], 32
    %48 = vst.msk [vmem:[%s47] ss:$48 sm:$0xc] %vm44, %v43
    %s49 = scalar_lea.vmem [#allocation0], 32
    %50 = vst.msk [vmem:[%s49] ss:$48 sm:$0x30] %vm44, %v43
    %s51 = scalar_lea.vmem [#allocation0], 32
    %52 = vst.msk [vmem:[%s51] ss:$48 sm:$0xc0] %vm44, %v43
    %s53 = scalar_lea.vmem %s0, 40
    %v54 = vld [vmem:[%s53] sm:$0xff]
    %vm55 = vcmask 130048
    %s56 = scalar_lea.vmem [#allocation0], 40
    %57 = vst.msk [vmem:[%s56] ss:$48 sm:$0x3] %vm55, %v54
    %s58 = scalar_lea.vmem [#allocation0], 40
    %59 = vst.msk [vmem:[%s58] ss:$48 sm:$0xc] %vm55, %v54
    %s60 = scalar_lea.vmem [#allocation0], 40
    %61 = vst.msk [vmem:[%s60] ss:$48 sm:$0x30] %vm55, %v54
    %s62 = scalar_lea.vmem [#allocation0], 40
    %63 = vst.msk [vmem:[%s62] ss:$48 sm:$0xc0] %vm55, %v54
    %v64 = vld.sshfl [vmem:[%s0] sm:$0xff pattern:$0xb3a29180]
    %65 = vrot.lane.b32.xlu0 %v64, 112
    %v66 = vpop.permute.xlu0 %65
    %vm67 = vcmask 130048
    %s68 = scalar_lea.vmem [#allocation0], 1
    %69 = vst.msk [vmem:[%s68] ss:$8 sm:$0x3] %vm67, %v66
    %s70 = scalar_lea.vmem [#allocation0], 33
    %71 = vst.msk [vmem:[%s70] ss:$8 sm:$0xc] %vm67, %v66
    %s72 = scalar_lea.vmem [#allocation0], 65
    %73 = vst.msk [vmem:[%s72] ss:$8 sm:$0x30] %vm67, %v66
    %s74 = scalar_lea.vmem [#allocation0], 97
    %75 = vst.msk [vmem:[%s74] ss:$8 sm:$0xc0] %vm67, %v66
    %s76 = scalar_lea.vmem %s0, 4
    %v77 = vld.sshfl [vmem:[%s76] sm:$0xff pattern:$0xb3a29180]
    %78 = vrot.lane.b32.xlu0 %v77, 112
    %v79 = vpop.permute.xlu0 %78
    %vm80 = vcmask 130048
    %s81 = scalar_lea.vmem [#allocation0], 193
    %82 = vst.msk [vmem:[%s81] ss:$8 sm:$0x3] %vm80, %v79
    %s83 = scalar_lea.vmem [#allocation0], 225
    %84 = vst.msk [vmem:[%s83] ss:$8 sm:$0xc] %vm80, %v79
    %s85 = scalar_lea.vmem [#allocation0], 257
    %86 = vst.msk [vmem:[%s85] ss:$8 sm:$0x30] %vm80, %v79
    %s87 = scalar_lea.vmem [#allocation0], 289
    %88 = vst.msk [vmem:[%s87] ss:$8 sm:$0xc0] %vm80, %v79
    %s89 = scalar_lea.vmem %s0, 16
    %v90 = vld.sshfl [vmem:[%s89] sm:$0xff pattern:$0xa2b38091]
    %91 = vrot.lane.b32.xlu0 %v90, 112
    %v92 = vpop.permute.xlu0 %91
    %vm93 = vcmask 130048
    %s94 = scalar_lea.vmem [#allocation0], 65
    %95 = vst.msk [vmem:[%s94] ss:$8 sm:$0x3] %vm93, %v92
    %s96 = scalar_lea.vmem [#allocation0], 1
    %97 = vst.msk [vmem:[%s96] ss:$8 sm:$0xc] %vm93, %v92
    %s98 = scalar_lea.vmem [#allocation0], 129
    %99 = vst.msk [vmem:[%s98] ss:$8 sm:$0x30] %vm93, %v92
    %s100 = scalar_lea.vmem [#allocation0], 65
    %101 = vst.msk [vmem:[%s100] ss:$8 sm:$0xc0] %vm93, %v92
    %s102 = scalar_lea.vmem %s0, 20
    %v103 = vld.sshfl [vmem:[%s102] sm:$0xff pattern:$0xa2b38091]
    %104 = vrot.lane.b32.xlu0 %v103, 112
    %v105 = vpop.permute.xlu0 %104
    %vm106 = vcmask 130048
    %s107 = scalar_lea.vmem [#allocation0], 257
    %108 = vst.msk [vmem:[%s107] ss:$8 sm:$0x3] %vm106, %v105
    %s109 = scalar_lea.vmem [#allocation0], 193
    %110 = vst.msk [vmem:[%s109] ss:$8 sm:$0xc] %vm106, %v105
    %s111 = scalar_lea.vmem [#allocation0], 321
    %112 = vst.msk [vmem:[%s111] ss:$8 sm:$0x30] %vm106, %v105
    %s113 = scalar_lea.vmem [#allocation0], 257
    %114 = vst.msk [vmem:[%s113] ss:$8 sm:$0xc0] %vm106, %v105
    %s115 = scalar_lea.vmem %s0, 32
    %v116 = vld.sshfl [vmem:[%s115] sm:$0xff pattern:$0xb3a29180]
    %117 = vrot.lane.b32.xlu0 %v116, 112
    %v118 = vpop.permute.xlu0 %117
    %vm119 = vcmask 130048
    %s120 = scalar_lea.vmem [#allocation0], 33
    %121 = vst.msk [vmem:[%s120] ss:$8 sm:$0x3] %vm119, %v118
    %s122 = scalar_lea.vmem [#allocation0], 65
    %123 = vst.msk [vmem:[%s122] ss:$8 sm:$0xc] %vm119, %v118
    %s124 = scalar_lea.vmem [#allocation0], 97
    %125 = vst.msk [vmem:[%s124] ss:$8 sm:$0x30] %vm119, %v118
    %s126 = scalar_lea.vmem [#allocation0], 129
    %127 = vst.msk [vmem:[%s126] ss:$8 sm:$0xc0] %vm119, %v118
    %s128 = scalar_lea.vmem %s0, 36
    %v129 = vld.sshfl [vmem:[%s128] sm:$0xff pattern:$0xb3a29180]
    %130 = vrot.lane.b32.xlu0 %v129, 112
    %v131 = vpop.permute.xlu0 %130
    %vm132 = vcmask 130048
    %s133 = scalar_lea.vmem [#allocation0], 225
    %134 = vst.msk [vmem:[%s133] ss:$8 sm:$0x3] %vm132, %v131
    %s135 = scalar_lea.vmem [#allocation0], 257
    %136 = vst.msk [vmem:[%s135] ss:$8 sm:$0xc] %vm132, %v131
    %s137 = scalar_lea.vmem [#allocation0], 289
    %138 = vst.msk [vmem:[%s137] ss:$8 sm:$0x30] %vm132, %v131
    %s139 = scalar_lea.vmem [#allocation0], 321
    %140 = vst.msk [vmem:[%s139] ss:$8 sm:$0xc0] %vm132, %v131
    %v141 = vld.sshfl [vmem:[%s0] sm:$0xff pattern:$0xb3a29180]
    %142 = vrot.lane.b32.xlu0 %v141, 96
    %v143 = vpop.permute.xlu0 %142
    %vm144 = vcmask 130048
    %s145 = scalar_lea.vmem [#allocation0], 2
    %146 = vst.msk [vmem:[%s145] ss:$8 sm:$0x3] %vm144, %v143
    %s147 = scalar_lea.vmem [#allocation0], 34
    %148 = vst.msk [vmem:[%s147] ss:$8 sm:$0xc] %vm144, %v143
    %s149 = scalar_lea.vmem [#allocation0], 66
    %150 = vst.msk [vmem:[%s149] ss:$8 sm:$0x30] %vm144, %v143
    %s151 = scalar_lea.vmem [#allocation0], 98
    %152 = vst.msk [vmem:[%s151] ss:$8 sm:$0xc0] %vm144, %v143
    %s153 = scalar_lea.vmem %s0, 4
    %v154 = vld.sshfl [vmem:[%s153] sm:$0xff pattern:$0xb3a29180]
    %155 = vrot.lane.b32.xlu0 %v154, 96
    %v156 = vpop.permute.xlu0 %155
    %vm157 = vcmask 130048
    %s158 = scalar_lea.vmem [#allocation0], 194
    %159 = vst.msk [vmem:[%s158] ss:$8 sm:$0x3] %vm157, %v156
    %s160 = scalar_lea.vmem [#allocation0], 226
    %161 = vst.msk [vmem:[%s160] ss:$8 sm:$0xc] %vm157, %v156
    %s162 = scalar_lea.vmem [#allocation0], 258
    %163 = vst.msk [vmem:[%s162] ss:$8 sm:$0x30] %vm157, %v156
    %s164 = scalar_lea.vmem [#allocation0], 290
    %165 = vst.msk [vmem:[%s164] ss:$8 sm:$0xc0] %vm157, %v156
    %s166 = scalar_lea.vmem %s0, 16
    %v167 = vld.sshfl [vmem:[%s166] sm:$0xff pattern:$0xa2b38091]
    %168 = vrot.lane.b32.xlu0 %v167, 96
    %v169 = vpop.permute.xlu0 %168
    %vm170 = vcmask 130048
    %s171 = scalar_lea.vmem [#allocation0], 66
    %172 = vst.msk [vmem:[%s171] ss:$8 sm:$0x3] %vm170, %v169
    %s173 = scalar_lea.vmem [#allocation0], 2
    %174 = vst.msk [vmem:[%s173] ss:$8 sm:$0xc] %vm170, %v169
    %s175 = scalar_lea.vmem [#allocation0], 130
    %176 = vst.msk [vmem:[%s175] ss:$8 sm:$0x30] %vm170, %v169
    %s177 = scalar_lea.vmem [#allocation0], 66
    %178 = vst.msk [vmem:[%s177] ss:$8 sm:$0xc0] %vm170, %v169
    %s179 = scalar_lea.vmem %s0, 20
    %v180 = vld.sshfl [vmem:[%s179] sm:$0xff pattern:$0xa2b38091]
    %181 = vrot.lane.b32.xlu0 %v180, 96
    %v182 = vpop.permute.xlu0 %181
    %vm183 = vcmask 130048
    %s184 = scalar_lea.vmem [#allocation0], 258
    %185 = vst.msk [vmem:[%s184] ss:$8 sm:$0x3] %vm183, %v182
    %s186 = scalar_lea.vmem [#allocation0], 194
    %187 = vst.msk [vmem:[%s186] ss:$8 sm:$0xc] %vm183, %v182
    %s188 = scalar_lea.vmem [#allocation0], 322
    %189 = vst.msk [vmem:[%s188] ss:$8 sm:$0x30] %vm183, %v182
    %s190 = scalar_lea.vmem [#allocation0], 258
    %191 = vst.msk [vmem:[%s190] ss:$8 sm:$0xc0] %vm183, %v182
    %s192 = scalar_lea.vmem %s0, 32
    %v193 = vld.sshfl [vmem:[%s192] sm:$0xff pattern:$0xb3a29180]
    %194 = vrot.lane.b32.xlu0 %v193, 96
    %v195 = vpop.permute.xlu0 %194
    %vm196 = vcmask 130048
    %s197 = scalar_lea.vmem [#allocation0], 34
    %198 = vst.msk [vmem:[%s197] ss:$8 sm:$0x3] %vm196, %v195
    %s199 = scalar_lea.vmem [#allocation0], 66
    %200 = vst.msk [vmem:[%s199] ss:$8 sm:$0xc] %vm196, %v195
    %s201 = scalar_lea.vmem [#allocation0], 98
    %202 = vst.msk [vmem:[%s201] ss:$8 sm:$0x30] %vm196, %v195
    %s203 = scalar_lea.vmem [#allocation0], 130
    %204 = vst.msk [vmem:[%s203] ss:$8 sm:$0xc0] %vm196, %v195
    %s205 = scalar_lea.vmem %s0, 36
    %v206 = vld.sshfl [vmem:[%s205] sm:$0xff pattern:$0xb3a29180]
    %207 = vrot.lane.b32.xlu0 %v206, 96
    %v208 = vpop.permute.xlu0 %207
    %vm209 = vcmask 130048
    %s210 = scalar_lea.vmem [#allocation0], 226
    %211 = vst.msk [vmem:[%s210] ss:$8 sm:$0x3] %vm209, %v208
    %s212 = scalar_lea.vmem [#allocation0], 258
    %213 = vst.msk [vmem:[%s212] ss:$8 sm:$0xc] %vm209, %v208
    %s214 = scalar_lea.vmem [#allocation0], 290
    %215 = vst.msk [vmem:[%s214] ss:$8 sm:$0x30] %vm209, %v208
    %s216 = scalar_lea.vmem [#allocation0], 322
    %217 = vst.msk [vmem:[%s216] ss:$8 sm:$0xc0] %vm209, %v208
    %v218 = vld.sshfl [vmem:[%s0] sm:$0xff pattern:$0xb3a29180]
    %219 = vrot.lane.b32.xlu0 %v218, 80
    %v220 = vpop.permute.xlu0 %219
    %vm221 = vcmask 130048
    %s222 = scalar_lea.vmem [#allocation0], 3
    %223 = vst.msk [vmem:[%s222] ss:$8 sm:$0x3] %vm221, %v220
    %s224 = scalar_lea.vmem [#allocation0], 35
    %225 = vst.msk [vmem:[%s224] ss:$8 sm:$0xc] %vm221, %v220
    %s226 = scalar_lea.vmem [#allocation0], 67
    %227 = vst.msk [vmem:[%s226] ss:$8 sm:$0x30] %vm221, %v220
    %s228 = scalar_lea.vmem [#allocation0], 99
    %229 = vst.msk [vmem:[%s228] ss:$8 sm:$0xc0] %vm221, %v220
    %s230 = scalar_lea.vmem %s0, 4
    %v231 = vld.sshfl [vmem:[%s230] sm:$0xff pattern:$0xb3a29180]
    %232 = vrot.lane.b32.xlu0 %v231, 80
    %v233 = vpop.permute.xlu0 %232
    %vm234 = vcmask 130048
    %s235 = scalar_lea.vmem [#allocation0], 195
    %236 = vst.msk [vmem:[%s235] ss:$8 sm:$0x3] %vm234, %v233
    %s237 = scalar_lea.vmem [#allocation0], 227
    %238 = vst.msk [vmem:[%s237] ss:$8 sm:$0xc] %vm234, %v233
    %s239 = scalar_lea.vmem [#allocation0], 259
    %240 = vst.msk [vmem:[%s239] ss:$8 sm:$0x30] %vm234, %v233
    %s241 = scalar_lea.vmem [#allocation0], 291
    %242 = vst.msk [vmem:[%s241] ss:$8 sm:$0xc0] %vm234, %v233
    %s243 = scalar_lea.vmem %s0, 16
    %v244 = vld.sshfl [vmem:[%s243] sm:$0xff pattern:$0xa2b38091]
    %245 = vrot.lane.b32.xlu0 %v244, 80
    %v246 = vpop.permute.xlu0 %245
    %vm247 = vcmask 130048
    %s248 = scalar_lea.vmem [#allocation0], 67
    %249 = vst.msk [vmem:[%s248] ss:$8 sm:$0x3] %vm247, %v246
    %s250 = scalar_lea.vmem [#allocation0], 3
    %251 = vst.msk [vmem:[%s250] ss:$8 sm:$0xc] %vm247, %v246
    %s252 = scalar_lea.vmem [#allocation0], 131
    %253 = vst.msk [vmem:[%s252] ss:$8 sm:$0x30] %vm247, %v246
    %s254 = scalar_lea.vmem [#allocation0], 67
    %255 = vst.msk [vmem:[%s254] ss:$8 sm:$0xc0] %vm247, %v246
    %s256 = scalar_lea.vmem %s0, 20
    %v257 = vld.sshfl [vmem:[%s256] sm:$0xff pattern:$0xa2b38091]
    %258 = vrot.lane.b32.xlu0 %v257, 80
    %v259 = vpop.permute.xlu0 %258
    %vm260 = vcmask 130048
    %s261 = scalar_lea.vmem [#allocation0], 259
    %262 = vst.msk [vmem:[%s261] ss:$8 sm:$0x3] %vm260, %v259
    %s263 = scalar_lea.vmem [#allocation0], 195
    %264 = vst.msk [vmem:[%s263] ss:$8 sm:$0xc] %vm260, %v259
    %s265 = scalar_lea.vmem [#allocation0], 323
    %266 = vst.msk [vmem:[%s265] ss:$8 sm:$0x30] %vm260, %v259
    %s267 = scalar_lea.vmem [#allocation0], 259
    %268 = vst.msk [vmem:[%s267] ss:$8 sm:$0xc0] %vm260, %v259
    %s269 = scalar_lea.vmem %s0, 32
    %v270 = vld.sshfl [vmem:[%s269] sm:$0xff pattern:$0xb3a29180]
    %271 = vrot.lane.b32.xlu0 %v270, 80
    %v272 = vpop.permute.xlu0 %271
    %vm273 = vcmask 130048
    %s274 = scalar_lea.vmem [#allocation0], 35
    %275 = vst.msk [vmem:[%s274] ss:$8 sm:$0x3] %vm273, %v272
    %s276 = scalar_lea.vmem [#allocation0], 67
    %277 = vst.msk [vmem:[%s276] ss:$8 sm:$0xc] %vm273, %v272
    %s278 = scalar_lea.vmem [#allocation0], 99
    %279 = vst.msk [vmem:[%s278] ss:$8 sm:$0x30] %vm273, %v272
    %s280 = scalar_lea.vmem [#allocation0], 131
    %281 = vst.msk [vmem:[%s280] ss:$8 sm:$0xc0] %vm273, %v272
    %s282 = scalar_lea.vmem %s0, 36
    %v283 = vld.sshfl [vmem:[%s282] sm:$0xff pattern:$0xb3a29180]
    %284 = vrot.lane.b32.xlu0 %v283, 80
    %v285 = vpop.permute.xlu0 %284
    %vm286 = vcmask 130048
    %s287 = scalar_lea.vmem [#allocation0], 227
    %288 = vst.msk [vmem:[%s287] ss:$8 sm:$0x3] %vm286, %v285
    %s289 = scalar_lea.vmem [#allocation0], 259
    %290 = vst.msk [vmem:[%s289] ss:$8 sm:$0xc] %vm286, %v285
    %s291 = scalar_lea.vmem [#allocation0], 291
    %292 = vst.msk [vmem:[%s291] ss:$8 sm:$0x30] %vm286, %v285
    %s293 = scalar_lea.vmem [#allocation0], 323
    %294 = vst.msk [vmem:[%s293] ss:$8 sm:$0xc0] %vm286, %v285
    %v295 = vld.sshfl [vmem:[%s0] sm:$0xff pattern:$0xb3a29180]
    %296 = vrot.lane.b32.xlu0 %v295, 64
    %v297 = vpop.permute.xlu0 %296
    %vm298 = vcmask 130048
    %s299 = scalar_lea.vmem [#allocation0], 4
    %300 = vst.msk [vmem:[%s299] ss:$8 sm:$0x3] %vm298, %v297
    %s301 = scalar_lea.vmem [#allocation0], 36
    %302 = vst.msk [vmem:[%s301] ss:$8 sm:$0xc] %vm298, %v297
    %s303 = scalar_lea.vmem [#allocation0], 68
    %304 = vst.msk [vmem:[%s303] ss:$8 sm:$0x30] %vm298, %v297
    %s305 = scalar_lea.vmem [#allocation0], 100
    %306 = vst.msk [vmem:[%s305] ss:$8 sm:$0xc0] %vm298, %v297
    %s307 = scalar_lea.vmem %s0, 4
    %v308 = vld.sshfl [vmem:[%s307] sm:$0xff pattern:$0xb3a29180]
    %309 = vrot.lane.b32.xlu0 %v308, 64
    %v310 = vpop.permute.xlu0 %309
    %vm311 = vcmask 130048
    %s312 = scalar_lea.vmem [#allocation0], 196
    %313 = vst.msk [vmem:[%s312] ss:$8 sm:$0x3] %vm311, %v310
    %s314 = scalar_lea.vmem [#allocation0], 228
    %315 = vst.msk [vmem:[%s314] ss:$8 sm:$0xc] %vm311, %v310
    %s316 = scalar_lea.vmem [#allocation0], 260
    %317 = vst.msk [vmem:[%s316] ss:$8 sm:$0x30] %vm311, %v310
    %s318 = scalar_lea.vmem [#allocation0], 292
    %319 = vst.msk [vmem:[%s318] ss:$8 sm:$0xc0] %vm311, %v310
    %s320 = scalar_lea.vmem %s0, 16
    %v321 = vld.sshfl [vmem:[%s320] sm:$0xff pattern:$0xa2b38091]
    %322 = vrot.lane.b32.xlu0 %v321, 64
    %v323 = vpop.permute.xlu0 %322
    %vm324 = vcmask 130048
    %s325 = scalar_lea.vmem [#allocation0], 68
    %326 = vst.msk [vmem:[%s325] ss:$8 sm:$0x3] %vm324, %v323
    %s327 = scalar_lea.vmem [#allocation0], 4
    %328 = vst.msk [vmem:[%s327] ss:$8 sm:$0xc] %vm324, %v323
    %s329 = scalar_lea.vmem [#allocation0], 132
    %330 = vst.msk [vmem:[%s329] ss:$8 sm:$0x30] %vm324, %v323
    %s331 = scalar_lea.vmem [#allocation0], 68
    %332 = vst.msk [vmem:[%s331] ss:$8 sm:$0xc0] %vm324, %v323
    %s333 = scalar_lea.vmem %s0, 20
    %v334 = vld.sshfl [vmem:[%s333] sm:$0xff pattern:$0xa2b38091]
    %335 = vrot.lane.b32.xlu0 %v334, 64
    %v336 = vpop.permute.xlu0 %335
    %vm337 = vcmask 130048
    %s338 = scalar_lea.vmem [#allocation0], 260
    %339 = vst.msk [vmem:[%s338] ss:$8 sm:$0x3] %vm337, %v336
    %s340 = scalar_lea.vmem [#allocation0], 196
    %341 = vst.msk [vmem:[%s340] ss:$8 sm:$0xc] %vm337, %v336
    %s342 = scalar_lea.vmem [#allocation0], 324
    %343 = vst.msk [vmem:[%s342] ss:$8 sm:$0x30] %vm337, %v336
    %s344 = scalar_lea.vmem [#allocation0], 260
    %345 = vst.msk [vmem:[%s344] ss:$8 sm:$0xc0] %vm337, %v336
    %s346 = scalar_lea.vmem %s0, 32
    %v347 = vld.sshfl [vmem:[%s346] sm:$0xff pattern:$0xb3a29180]
    %348 = vrot.lane.b32.xlu0 %v347, 64
    %v349 = vpop.permute.xlu0 %348
    %vm350 = vcmask 130048
    %s351 = scalar_lea.vmem [#allocation0], 36
    %352 = vst.msk [vmem:[%s351] ss:$8 sm:$0x3] %vm350, %v349
    %s353 = scalar_lea.vmem [#allocation0], 68
    %354 = vst.msk [vmem:[%s353] ss:$8 sm:$0xc] %vm350, %v349
    %s355 = scalar_lea.vmem [#allocation0], 100
    %356 = vst.msk [vmem:[%s355] ss:$8 sm:$0x30] %vm350, %v349
    %s357 = scalar_lea.vmem [#allocation0], 132
    %358 = vst.msk [vmem:[%s357] ss:$8 sm:$0xc0] %vm350, %v349
    %s359 = scalar_lea.vmem %s0, 36
    %v360 = vld.sshfl [vmem:[%s359] sm:$0xff pattern:$0xb3a29180]
    %361 = vrot.lane.b32.xlu0 %v360, 64
    %v362 = vpop.permute.xlu0 %361
    %vm363 = vcmask 130048
    %s364 = scalar_lea.vmem [#allocation0], 228
    %365 = vst.msk [vmem:[%s364] ss:$8 sm:$0x3] %vm363, %v362
    %s366 = scalar_lea.vmem [#allocation0], 260
    %367 = vst.msk [vmem:[%s366] ss:$8 sm:$0xc] %vm363, %v362
    %s368 = scalar_lea.vmem [#allocation0], 292
    %369 = vst.msk [vmem:[%s368] ss:$8 sm:$0x30] %vm363, %v362
    %s370 = scalar_lea.vmem [#allocation0], 324
    %371 = vst.msk [vmem:[%s370] ss:$8 sm:$0xc0] %vm363, %v362
    %v372 = vld.sshfl [vmem:[%s0] sm:$0xff pattern:$0xb3a29180]
    %373 = vrot.lane.b32.xlu0 %v372, 48
    %v374 = vpop.permute.xlu0 %373
    %vm375 = vcmask 130048
    %s376 = scalar_lea.vmem [#allocation0], 5
    %377 = vst.msk [vmem:[%s376] ss:$8 sm:$0x3] %vm375, %v374
    %s378 = scalar_lea.vmem [#allocation0], 37
    %379 = vst.msk [vmem:[%s378] ss:$8 sm:$0xc] %vm375, %v374
    %s380 = scalar_lea.vmem [#allocation0], 69
    %381 = vst.msk [vmem:[%s380] ss:$8 sm:$0x30] %vm375, %v374
    %s382 = scalar_lea.vmem [#allocation0], 101
    %383 = vst.msk [vmem:[%s382] ss:$8 sm:$0xc0] %vm375, %v374
    %s384 = scalar_lea.vmem %s0, 4
    %v385 = vld.sshfl [vmem:[%s384] sm:$0xff pattern:$0xb3a29180]
    %386 = vrot.lane.b32.xlu0 %v385, 48
    %v387 = vpop.permute.xlu0 %386
    %vm388 = vcmask 130048
    %s389 = scalar_lea.vmem [#allocation0], 197
    %390 = vst.msk [vmem:[%s389] ss:$8 sm:$0x3] %vm388, %v387
    %s391 = scalar_lea.vmem [#allocation0], 229
    %392 = vst.msk [vmem:[%s391] ss:$8 sm:$0xc] %vm388, %v387
    %s393 = scalar_lea.vmem [#allocation0], 261
    %394 = vst.msk [vmem:[%s393] ss:$8 sm:$0x30] %vm388, %v387
    %s395 = scalar_lea.vmem [#allocation0], 293
    %396 = vst.msk [vmem:[%s395] ss:$8 sm:$0xc0] %vm388, %v387
    %s397 = scalar_lea.vmem %s0, 16
    %v398 = vld.sshfl [vmem:[%s397] sm:$0xff pattern:$0xa2b38091]
    %399 = vrot.lane.b32.xlu0 %v398, 48
    %v400 = vpop.permute.xlu0 %399
    %vm401 = vcmask 130048
    %s402 = scalar_lea.vmem [#allocation0], 69
    %403 = vst.msk [vmem:[%s402] ss:$8 sm:$0x3] %vm401, %v400
    %s404 = scalar_lea.vmem [#allocation0], 5
    %405 = vst.msk [vmem:[%s404] ss:$8 sm:$0xc] %vm401, %v400
    %s406 = scalar_lea.vmem [#allocation0], 133
    %407 = vst.msk [vmem:[%s406] ss:$8 sm:$0x30] %vm401, %v400
    %s408 = scalar_lea.vmem [#allocation0], 69
    %409 = vst.msk [vmem:[%s408] ss:$8 sm:$0xc0] %vm401, %v400
    %s410 = scalar_lea.vmem %s0, 20
    %v411 = vld.sshfl [vmem:[%s410] sm:$0xff pattern:$0xa2b38091]
    %412 = vrot.lane.b32.xlu0 %v411, 48
    %v413 = vpop.permute.xlu0 %412
    %vm414 = vcmask 130048
    %s415 = scalar_lea.vmem [#allocation0], 261
    %416 = vst.msk [vmem:[%s415] ss:$8 sm:$0x3] %vm414, %v413
    %s417 = scalar_lea.vmem [#allocation0], 197
    %418 = vst.msk [vmem:[%s417] ss:$8 sm:$0xc] %vm414, %v413
    %s419 = scalar_lea.vmem [#allocation0], 325
    %420 = vst.msk [vmem:[%s419] ss:$8 sm:$0x30] %vm414, %v413
    %s421 = scalar_lea.vmem [#allocation0], 261
    %422 = vst.msk [vmem:[%s421] ss:$8 sm:$0xc0] %vm414, %v413
    %s423 = scalar_lea.vmem %s0, 32
    %v424 = vld.sshfl [vmem:[%s423] sm:$0xff pattern:$0xb3a29180]
    %425 = vrot.lane.b32.xlu0 %v424, 48
    %v426 = vpop.permute.xlu0 %425
    %vm427 = vcmask 130048
    %s428 = scalar_lea.vmem [#allocation0], 37
    %429 = vst.msk [vmem:[%s428] ss:$8 sm:$0x3] %vm427, %v426
    %s430 = scalar_lea.vmem [#allocation0], 69
    %431 = vst.msk [vmem:[%s430] ss:$8 sm:$0xc] %vm427, %v426
    %s432 = scalar_lea.vmem [#allocation0], 101
    %433 = vst.msk [vmem:[%s432] ss:$8 sm:$0x30] %vm427, %v426
    %s434 = scalar_lea.vmem [#allocation0], 133
    %435 = vst.msk [vmem:[%s434] ss:$8 sm:$0xc0] %vm427, %v426
    %s436 = scalar_lea.vmem %s0, 36
    %v437 = vld.sshfl [vmem:[%s436] sm:$0xff pattern:$0xb3a29180]
    %438 = vrot.lane.b32.xlu0 %v437, 48
    %v439 = vpop.permute.xlu0 %438
    %vm440 = vcmask 130048
    %s441 = scalar_lea.vmem [#allocation0], 229
    %442 = vst.msk [vmem:[%s441] ss:$8 sm:$0x3] %vm440, %v439
    %s443 = scalar_lea.vmem [#allocation0], 261
    %444 = vst.msk [vmem:[%s443] ss:$8 sm:$0xc] %vm440, %v439
    %s445 = scalar_lea.vmem [#allocation0], 293
    %446 = vst.msk [vmem:[%s445] ss:$8 sm:$0x30] %vm440, %v439
    %s447 = scalar_lea.vmem [#allocation0], 325
    %448 = vst.msk [vmem:[%s447] ss:$8 sm:$0xc0] %vm440, %v439
    %v449 = vld.sshfl [vmem:[%s0] sm:$0xff pattern:$0xb3a29180]
    %450 = vrot.lane.b32.xlu0 %v449, 32
    %v451 = vpop.permute.xlu0 %450
    %vm452 = vcmask 130048
    %s453 = scalar_lea.vmem [#allocation0], 6
    %454 = vst.msk [vmem:[%s453] ss:$8 sm:$0x3] %vm452, %v451
    %s455 = scalar_lea.vmem [#allocation0], 38
    %456 = vst.msk [vmem:[%s455] ss:$8 sm:$0xc] %vm452, %v451
    %s457 = scalar_lea.vmem [#allocation0], 70
    %458 = vst.msk [vmem:[%s457] ss:$8 sm:$0x30] %vm452, %v451
    %s459 = scalar_lea.vmem [#allocation0], 102
    %460 = vst.msk [vmem:[%s459] ss:$8 sm:$0xc0] %vm452, %v451
    %s461 = scalar_lea.vmem %s0, 4
    %v462 = vld.sshfl [vmem:[%s461] sm:$0xff pattern:$0xb3a29180]
    %463 = vrot.lane.b32.xlu0 %v462, 32
    %v464 = vpop.permute.xlu0 %463
    %vm465 = vcmask 130048
    %s466 = scalar_lea.vmem [#allocation0], 198
    %467 = vst.msk [vmem:[%s466] ss:$8 sm:$0x3] %vm465, %v464
    %s468 = scalar_lea.vmem [#allocation0], 230
    %469 = vst.msk [vmem:[%s468] ss:$8 sm:$0xc] %vm465, %v464
    %s470 = scalar_lea.vmem [#allocation0], 262
    %471 = vst.msk [vmem:[%s470] ss:$8 sm:$0x30] %vm465, %v464
    %s472 = scalar_lea.vmem [#allocation0], 294
    %473 = vst.msk [vmem:[%s472] ss:$8 sm:$0xc0] %vm465, %v464
    %s474 = scalar_lea.vmem %s0, 16
    %v475 = vld.sshfl [vmem:[%s474] sm:$0xff pattern:$0xa2b38091]
    %476 = vrot.lane.b32.xlu0 %v475, 32
    %v477 = vpop.permute.xlu0 %476
    %vm478 = vcmask 130048
    %s479 = scalar_lea.vmem [#allocation0], 70
    %480 = vst.msk [vmem:[%s479] ss:$8 sm:$0x3] %vm478, %v477
    %s481 = scalar_lea.vmem [#allocation0], 6
    %482 = vst.msk [vmem:[%s481] ss:$8 sm:$0xc] %vm478, %v477
    %s483 = scalar_lea.vmem [#allocation0], 134
    %484 = vst.msk [vmem:[%s483] ss:$8 sm:$0x30] %vm478, %v477
    %s485 = scalar_lea.vmem [#allocation0], 70
    %486 = vst.msk [vmem:[%s485] ss:$8 sm:$0xc0] %vm478, %v477
    %s487 = scalar_lea.vmem %s0, 20
    %v488 = vld.sshfl [vmem:[%s487] sm:$0xff pattern:$0xa2b38091]
    %489 = vrot.lane.b32.xlu0 %v488, 32
    %v490 = vpop.permute.xlu0 %489
    %vm491 = vcmask 130048
    %s492 = scalar_lea.vmem [#allocation0], 262
    %493 = vst.msk [vmem:[%s492] ss:$8 sm:$0x3] %vm491, %v490
    %s494 = scalar_lea.vmem [#allocation0], 198
    %495 = vst.msk [vmem:[%s494] ss:$8 sm:$0xc] %vm491, %v490
    %s496 = scalar_lea.vmem [#allocation0], 326
    %497 = vst.msk [vmem:[%s496] ss:$8 sm:$0x30] %vm491, %v490
    %s498 = scalar_lea.vmem [#allocation0], 262
    %499 = vst.msk [vmem:[%s498] ss:$8 sm:$0xc0] %vm491, %v490
    %s500 = scalar_lea.vmem %s0, 32
    %v501 = vld.sshfl [vmem:[%s500] sm:$0xff pattern:$0xb3a29180]
    %502 = vrot.lane.b32.xlu0 %v501, 32
    %v503 = vpop.permute.xlu0 %502
    %vm504 = vcmask 130048
    %s505 = scalar_lea.vmem [#allocation0], 38
    %506 = vst.msk [vmem:[%s505] ss:$8 sm:$0x3] %vm504, %v503
    %s507 = scalar_lea.vmem [#allocation0], 70
    %508 = vst.msk [vmem:[%s507] ss:$8 sm:$0xc] %vm504, %v503
    %s509 = scalar_lea.vmem [#allocation0], 102
    %510 = vst.msk [vmem:[%s509] ss:$8 sm:$0x30] %vm504, %v503
    %s511 = scalar_lea.vmem [#allocation0], 134
    %512 = vst.msk [vmem:[%s511] ss:$8 sm:$0xc0] %vm504, %v503
    %s513 = scalar_lea.vmem %s0, 36
    %v514 = vld.sshfl [vmem:[%s513] sm:$0xff pattern:$0xb3a29180]
    %515 = vrot.lane.b32.xlu0 %v514, 32
    %v516 = vpop.permute.xlu0 %515
    %vm517 = vcmask 130048
    %s518 = scalar_lea.vmem [#allocation0], 230
    %519 = vst.msk [vmem:[%s518] ss:$8 sm:$0x3] %vm517, %v516
    %s520 = scalar_lea.vmem [#allocation0], 262
    %521 = vst.msk [vmem:[%s520] ss:$8 sm:$0xc] %vm517, %v516
    %s522 = scalar_lea.vmem [#allocation0], 294
    %523 = vst.msk [vmem:[%s522] ss:$8 sm:$0x30] %vm517, %v516
    %s524 = scalar_lea.vmem [#allocation0], 326
    %525 = vst.msk [vmem:[%s524] ss:$8 sm:$0xc0] %vm517, %v516
    %v526 = vld.sshfl [vmem:[%s0] sm:$0xff pattern:$0xb3a29180]
    %527 = vrot.lane.b32.xlu0 %v526, 16
    %v528 = vpop.permute.xlu0 %527
    %vm529 = vcmask 130048
    %s530 = scalar_lea.vmem [#allocation0], 7
    %531 = vst.msk [vmem:[%s530] ss:$8 sm:$0x3] %vm529, %v528
    %s532 = scalar_lea.vmem [#allocation0], 39
    %533 = vst.msk [vmem:[%s532] ss:$8 sm:$0xc] %vm529, %v528
    %s534 = scalar_lea.vmem [#allocation0], 71
    %535 = vst.msk [vmem:[%s534] ss:$8 sm:$0x30] %vm529, %v528
    %s536 = scalar_lea.vmem [#allocation0], 103
    %537 = vst.msk [vmem:[%s536] ss:$8 sm:$0xc0] %vm529, %v528
    %s538 = scalar_lea.vmem %s0, 4
    %v539 = vld.sshfl [vmem:[%s538] sm:$0xff pattern:$0xb3a29180]
    %540 = vrot.lane.b32.xlu0 %v539, 16
    %v541 = vpop.permute.xlu0 %540
    %vm542 = vcmask 130048
    %s543 = scalar_lea.vmem [#allocation0], 199
    %544 = vst.msk [vmem:[%s543] ss:$8 sm:$0x3] %vm542, %v541
    %s545 = scalar_lea.vmem [#allocation0], 231
    %546 = vst.msk [vmem:[%s545] ss:$8 sm:$0xc] %vm542, %v541
    %s547 = scalar_lea.vmem [#allocation0], 263
    %548 = vst.msk [vmem:[%s547] ss:$8 sm:$0x30] %vm542, %v541
    %s549 = scalar_lea.vmem [#allocation0], 295
    %550 = vst.msk [vmem:[%s549] ss:$8 sm:$0xc0] %vm542, %v541
    %s551 = scalar_lea.vmem %s0, 16
    %v552 = vld.sshfl [vmem:[%s551] sm:$0xff pattern:$0xa2b38091]
    %553 = vrot.lane.b32.xlu0 %v552, 16
    %v554 = vpop.permute.xlu0 %553
    %vm555 = vcmask 130048
    %s556 = scalar_lea.vmem [#allocation0], 71
    %557 = vst.msk [vmem:[%s556] ss:$8 sm:$0x3] %vm555, %v554
    %s558 = scalar_lea.vmem [#allocation0], 7
    %559 = vst.msk [vmem:[%s558] ss:$8 sm:$0xc] %vm555, %v554
    %s560 = scalar_lea.vmem [#allocation0], 135
    %561 = vst.msk [vmem:[%s560] ss:$8 sm:$0x30] %vm555, %v554
    %s562 = scalar_lea.vmem [#allocation0], 71
    %563 = vst.msk [vmem:[%s562] ss:$8 sm:$0xc0] %vm555, %v554
    %s564 = scalar_lea.vmem %s0, 20
    %v565 = vld.sshfl [vmem:[%s564] sm:$0xff pattern:$0xa2b38091]
    %566 = vrot.lane.b32.xlu0 %v565, 16
    %v567 = vpop.permute.xlu0 %566
    %vm568 = vcmask 130048
    %s569 = scalar_lea.vmem [#allocation0], 263
    %570 = vst.msk [vmem:[%s569] ss:$8 sm:$0x3] %vm568, %v567
    %s571 = scalar_lea.vmem [#allocation0], 199
    %572 = vst.msk [vmem:[%s571] ss:$8 sm:$0xc] %vm568, %v567
    %s573 = scalar_lea.vmem [#allocation0], 327
    %574 = vst.msk [vmem:[%s573] ss:$8 sm:$0x30] %vm568, %v567
    %s575 = scalar_lea.vmem [#allocation0], 263
    %576 = vst.msk [vmem:[%s575] ss:$8 sm:$0xc0] %vm568, %v567
    %s577 = scalar_lea.vmem %s0, 32
    %v578 = vld.sshfl [vmem:[%s577] sm:$0xff pattern:$0xb3a29180]
    %579 = vrot.lane.b32.xlu0 %v578, 16
    %v580 = vpop.permute.xlu0 %579
    %vm581 = vcmask 130048
    %s582 = scalar_lea.vmem [#allocation0], 39
    %583 = vst.msk [vmem:[%s582] ss:$8 sm:$0x3] %vm581, %v580
    %s584 = scalar_lea.vmem [#allocation0], 71
    %585 = vst.msk [vmem:[%s584] ss:$8 sm:$0xc] %vm581, %v580
    %s586 = scalar_lea.vmem [#allocation0], 103
    %587 = vst.msk [vmem:[%s586] ss:$8 sm:$0x30] %vm581, %v580
    %s588 = scalar_lea.vmem [#allocation0], 135
    %589 = vst.msk [vmem:[%s588] ss:$8 sm:$0xc0] %vm581, %v580
    %s590 = scalar_lea.vmem %s0, 36
    %v591 = vld.sshfl [vmem:[%s590] sm:$0xff pattern:$0xb3a29180]
    %592 = vrot.lane.b32.xlu0 %v591, 16
    %v593 = vpop.permute.xlu0 %592
    %vm594 = vcmask 130048
    %s595 = scalar_lea.vmem [#allocation0], 231
    %596 = vst.msk [vmem:[%s595] ss:$8 sm:$0x3] %vm594, %v593
    %s597 = scalar_lea.vmem [#allocation0], 263
    %598 = vst.msk [vmem:[%s597] ss:$8 sm:$0xc] %vm594, %v593
    %s599 = scalar_lea.vmem [#allocation0], 295
    %600 = vst.msk [vmem:[%s599] ss:$8 sm:$0x30] %vm594, %v593
    %s601 = scalar_lea.vmem [#allocation0], 327
    %602 = vst.msk [vmem:[%s601] ss:$8 sm:$0xc0] %vm594, %v593
    %s604 = ssub.s32 6144, 6144
    %605 = vsyncadd [#allocation1], %s604
    %s607 = sshll.u32 [#allocation0], 4
    %s608 = int_to_ptr.vmem [resolvable:$true] %s607
    %610 = dma.vmem_to_hbm [thread:$0]  %s608, 6144, %s1, [#allocation1]
    %611 = dma.done [#allocation1], 6144
    %612 = vsyncpa [#allocation1], 1

// kernel: mcvae_forward.1
$region0: #{mcvae_forward.1}
  #allocation0 [shape = 'u32[]', space=smem, size = 0x4, offset = 0x4, fixed_abs, tag = 'smem constant byte address 0x4 - core index']
  #allocation1 [shape = 'u32[144,128]{1,0:T(1,128)}', space=vmem, size = 0x12000, scoped, tag = 'internal scratch']
  %s0 = inlined_call_operand.vmem [shape: f32[2,8,768], index: 0, kind: input, shape index: {}]
  %s1 = inlined_call_operand.vmem [shape: f32[2,8,512], index: 1, kind: input, shape index: {}]
  %s2 = inlined_call_operand.hbm [shape: bf16[2,768,256], index: 2, kind: input, shape index: {}]
  %s3 = inlined_call_operand.vmem [shape: f32[2,1,256], index: 3, kind: input, shape index: {}]
  %s4 = inlined_call_operand.hbm [shape: f32[2,256,512], index: 4, kind: input, shape index: {}]
  %s5 = inlined_call_operand.vmem [shape: f32[2,1,512], index: 5, kind: input, shape index: {}]
  %s6 = inlined_call_operand.vmem [shape: bf16[2,256,256], index: 6, kind: input, shape index: {}]
  %s7 = inlined_call_operand.vmem [shape: f32[2,1,256], index: 7, kind: input, shape index: {}]
  %s8 = inlined_call_operand.hbm [shape: bf16[2,256,768], index: 8, kind: input, shape index: {}]
  %s9 = inlined_call_operand.vmem [shape: f32[2,1,768], index: 9, kind: input, shape index: {}]
  %s10 = inlined_call_operand.vmem [shape: f32[2,8,768], index: 10, kind: output, shape index: {0}]
  %s11 = inlined_call_operand.vmem [shape: f32[2,8,256], index: 11, kind: output, shape index: {1}]
  %s12 = inlined_call_operand.vmem [shape: f32[2,8,256], index: 12, kind: output, shape index: {2}]
  %s13 = inlined_call_operand.vmem [shape: f32[2,8,256], index: 13, kind: output, shape index: {3}]
  %14 = xla_tuple %s10, %s11, %s12, %s13
  %s15 = sld [smem:[#allocation0]]
  $region109: #{mcvae_forward.1} parent=0
    _
  %s17 = ssub.s32 1, %s15
  %s18 = scalar_select 0, %s17, %s15
  $region1: #{mcvae_forward.1} parent=0
    #allocation2 [shape = 'u8[786432]{0}', space=vmem, size = 0xc0000, scoped, tag = 'input window, operand 2']
    #allocation3 [shape = 's32[2]{0}', space=sflag, size = 0x8, scoped, tag = 'scoped memory for mcvae_forward.1']
    #allocation4 [shape = 'u8[1048576]{0}', space=vmem, size = 0x100000, scoped, tag = 'input window, operand 4']
    #allocation5 [shape = 's32[2]{0}', space=sflag, size = 0x8, scoped, tag = 'scoped memory for mcvae_forward.1']
    #allocation6 [shape = 'u8[786432]{0}', space=vmem, size = 0xc0000, scoped, tag = 'input window, operand 8']
    %19 = vsyncpa [#allocation3], 0
    %s20 = scalar_lea.sflag [#allocation3], 1
    %21 = vsyncpa %s20, 0
    %22 = vsyncpa [#allocation5], 0
    %s23 = scalar_lea.sflag [#allocation5], 1
    %24 = vsyncpa %s23, 0
    loop: start=0, step=1, limit=4
    $region2: #{mcvae_forward.1} parent=1 // loop_pre_header
      _
    $region3: #{mcvae_forward.1} parent=1 // loop_header
      %s26 = sphi 0, %s30
      %p27 = scmp.ge.s32.totalorder %s26, 4
      %s36 = sphi 0, %s38
      %s39 = sphi 0, %s36
      %s40 = sphi 0, %s39
      %s56 = sphi 0, %s40
      %s62 = sphi 0, %s64
      %s65 = sphi 0, %s62
      %s66 = sphi 0, %s65
      %s82 = sphi 0, %s66
      %s88 = sphi 0, %s90
      %s91 = sphi 0, %s88
      %s92 = sphi 0, %s91
      %s108 = sphi 0, %s92
      %s114 = sphi 0, %s116
      %s117 = sphi 0, %s114
      %s118 = sphi 0, %s117
      %s134 = sphi 0, %s118
      %s140 = sphi 0, %s142
      %s143 = sphi 0, %s140
      %s144 = sphi 0, %s143
      %s160 = sphi 0, %s144
      %s166 = sphi 0, %s168
      %s169 = sphi 0, %s166
      %s170 = sphi 0, %s169
      %s186 = sphi 0, %s170
      %s192 = sphi 0, %s194
      %s195 = sphi 0, %s192
      %s196 = sphi 0, %s195
      %s212 = sphi 0, %s196
      %s218 = sphi 0, %s220
      %s221 = sphi 0, %s218
      %s222 = sphi 0, %s221
      %s238 = sphi 0, %s222
      %s244 = sphi 0, %s246
      %s247 = sphi 0, %s244
      %s248 = sphi 0, %s247
      %s264 = sphi 0, %s248
      %s270 = sphi 0, %s272
      %s273 = sphi 0, %s270
      %s274 = sphi 0, %s273
      %s290 = sphi 0, %s274
      %s296 = sphi 0, %s298
      %s299 = sphi 0, %s296
      %s300 = sphi 0, %s299
      %s316 = sphi 0, %s300
      %s322 = sphi 0, %s324
      %s325 = sphi 0, %s322
      %s326 = sphi 0, %s325
      %s342 = sphi 0, %s326
      %s348 = sphi 0, %s350
      %s351 = sphi 0, %s348
      %s352 = sphi 0, %s351
      %s368 = sphi 0, %s352
      %s374 = sphi 0, %s376
      %s377 = sphi 0, %s374
      %s378 = sphi 0, %s377
      %s394 = sphi 0, %s378
    $region4: #{mcvae_forward.1} parent=1 // loop_header_branch
      %29 = sbr.rel (%p27) target = $region8
    $region5: #{mcvae_forward.1} parent=1 // loop_body
      %s31 = ssub.s32 %s26, 1
      %s32 = ssub.s32 %s26, 2
      %s33 = sadd.s32 %s26, 1
      %s34 = ssub.s32 %s26, %s33
      %p35 = scmp.eq.s32.totalorder %s34, 0
      %s37 = sadd.s32 %s36, 1
      %s38 = scalar_select %p35, %s36, %s37
      %p41 = pneg %p35
      %p42 = scmp.eq.s32.totalorder %s26, 1
      %p43 = por %p41, %p42
      %p44 = scmp.ne.s32.totalorder %s36, %s39
      %p45 = scmp.eq.s32.totalorder %s26, 0
      %p46 = por %p44, %p45
      %p47 = scmp.ne.s32.totalorder %s36, %s39
      %p48 = scmp.eq.s32.totalorder %s31, 1
      %p49 = por %p47, %p48
      %p50 = scmp.ne.s32.totalorder %s39, %s40
      %p51 = scmp.eq.s32.totalorder %s31, 0
      %p52 = por %p50, %p51
      %p53 = scmp.ne.s32.totalorder %s39, %s40
      %p54 = scmp.eq.s32.totalorder %s32, 1
      %p55 = por %p53, %p54
      %p57 = scmp.ne.s32.totalorder %s40, %s56
      %p58 = scmp.eq.s32.totalorder %s32, 0
      %p59 = por %p57, %p58
      %s60 = ssub.s32 %s26, %s33
      %p61 = scmp.eq.s32.totalorder %s60, 0
      %s63 = sadd.s32 %s62, 1
      %s64 = scalar_select %p61, %s62, %s63
      %p67 = pneg %p61
      %p68 = scmp.eq.s32.totalorder %s26, 1
      %p69 = por %p67, %p68
      %p70 = scmp.ne.s32.totalorder %s62, %s65
      %p71 = scmp.eq.s32.totalorder %s26, 0
      %p72 = por %p70, %p71
      %p73 = scmp.ne.s32.totalorder %s62, %s65
      %p74 = scmp.eq.s32.totalorder %s31, 1
      %p75 = por %p73, %p74
      %p76 = scmp.ne.s32.totalorder %s65, %s66
      %p77 = scmp.eq.s32.totalorder %s31, 0
      %p78 = por %p76, %p77
      %p79 = scmp.ne.s32.totalorder %s65, %s66
      %p80 = scmp.eq.s32.totalorder %s32, 1
      %p81 = por %p79, %p80
      %p83 = scmp.ne.s32.totalorder %s66, %s82
      %p84 = scmp.eq.s32.totalorder %s32, 0
      %p85 = por %p83, %p84
      %s86 = ssub.s32 %s26, %s33
      %p87 = scmp.eq.s32.totalorder %s86, 0
      %s89 = sadd.s32 %s88, 1
      %s90 = scalar_select %p87, %s88, %s89
      %p93 = pneg %p87
      %p94 = scmp.eq.s32.totalorder %s26, 1
      %p95 = por %p93, %p94
      %p96 = scmp.ne.s32.totalorder %s88, %s91
      %p97 = scmp.eq.s32.totalorder %s26, 0
      %p98 = por %p96, %p97
      %p99 = scmp.ne.s32.totalorder %s88, %s91
      %p100 = scmp.eq.s32.totalorder %s31, 1
      %p101 = por %p99, %p100
      %p102 = scmp.ne.s32.totalorder %s91, %s92
      %p103 = scmp.eq.s32.totalorder %s31, 0
      %p104 = por %p102, %p103
      %p105 = scmp.ne.s32.totalorder %s91, %s92
      %p106 = scmp.eq.s32.totalorder %s32, 1
      %p107 = por %p105, %p106
      %p109 = scmp.ne.s32.totalorder %s92, %s108
      %p110 = scmp.eq.s32.totalorder %s32, 0
      %p111 = por %p109, %p110
      %s112 = ssub.s32 %s26, %s33
      %p113 = scmp.eq.s32.totalorder %s112, 0
      %s115 = sadd.s32 %s114, 1
      %s116 = scalar_select %p113, %s114, %s115
      %p119 = pneg %p113
      %p120 = scmp.eq.s32.totalorder %s26, 1
      %p121 = por %p119, %p120
      %p122 = scmp.ne.s32.totalorder %s114, %s117
      %p123 = scmp.eq.s32.totalorder %s26, 0
      %p124 = por %p122, %p123
      %p125 = scmp.ne.s32.totalorder %s114, %s117
      %p126 = scmp.eq.s32.totalorder %s31, 1
      %p127 = por %p125, %p126
      %p128 = scmp.ne.s32.totalorder %s117, %s118
      %p129 = scmp.eq.s32.totalorder %s31, 0
      %p130 = por %p128, %p129
      %p131 = scmp.ne.s32.totalorder %s117, %s118
      %p132 = scmp.eq.s32.totalorder %s32, 1
      %p133 = por %p131, %p132
      %p135 = scmp.ne.s32.totalorder %s118, %s134
      %p136 = scmp.eq.s32.totalorder %s32, 0
      %p137 = por %p135, %p136
      %s138 = ssub.s32 %s26, %s33
      %p139 = scmp.eq.s32.totalorder %s138, 0
      %s141 = sadd.s32 %s140, 1
      %s142 = scalar_select %p139, %s140, %s141
      %p145 = pneg %p139
      %p146 = scmp.eq.s32.totalorder %s26, 1
      %p147 = por %p145, %p146
      %p148 = scmp.ne.s32.totalorder %s140, %s143
      %p149 = scmp.eq.s32.totalorder %s26, 0
      %p150 = por %p148, %p149
      %p151 = scmp.ne.s32.totalorder %s140, %s143
      %p152 = scmp.eq.s32.totalorder %s31, 1
      %p153 = por %p151, %p152
      %p154 = scmp.ne.s32.totalorder %s143, %s144
      %p155 = scmp.eq.s32.totalorder %s31, 0
      %p156 = por %p154, %p155
      %p157 = scmp.ne.s32.totalorder %s143, %s144
      %p158 = scmp.eq.s32.totalorder %s32, 1
      %p159 = por %p157, %p158
      %p161 = scmp.ne.s32.totalorder %s144, %s160
      %p162 = scmp.eq.s32.totalorder %s32, 0
      %p163 = por %p161, %p162
      %s164 = ssub.s32 %s26, %s33
      %p165 = scmp.eq.s32.totalorder %s164, 0
      %s167 = sadd.s32 %s166, 1
      %s168 = scalar_select %p165, %s166, %s167
      %p171 = pneg %p165
      %p172 = scmp.eq.s32.totalorder %s26, 1
      %p173 = por %p171, %p172
      %p174 = scmp.ne.s32.totalorder %s166, %s169
      %p175 = scmp.eq.s32.totalorder %s26, 0
      %p176 = por %p174, %p175
      %p177 = scmp.ne.s32.totalorder %s166, %s169
      %p178 = scmp.eq.s32.totalorder %s31, 1
      %p179 = por %p177, %p178
      %p180 = scmp.ne.s32.totalorder %s169, %s170
      %p181 = scmp.eq.s32.totalorder %s31, 0
      %p182 = por %p180, %p181
      %p183 = scmp.ne.s32.totalorder %s169, %s170
      %p184 = scmp.eq.s32.totalorder %s32, 1
      %p185 = por %p183, %p184
      %p187 = scmp.ne.s32.totalorder %s170, %s186
      %p188 = scmp.eq.s32.totalorder %s32, 0
      %p189 = por %p187, %p188
      %s190 = ssub.s32 %s26, %s33
      %p191 = scmp.eq.s32.totalorder %s190, 0
      %s193 = sadd.s32 %s192, 1
      %s194 = scalar_select %p191, %s192, %s193
      %p197 = pneg %p191
      %p198 = scmp.eq.s32.totalorder %s26, 1
      %p199 = por %p197, %p198
      %p200 = scmp.ne.s32.totalorder %s192, %s195
      %p201 = scmp.eq.s32.totalorder %s26, 0
      %p202 = por %p200, %p201
      %p203 = scmp.ne.s32.totalorder %s192, %s195
      %p204 = scmp.eq.s32.totalorder %s31, 1
      %p205 = por %p203, %p204
      %p206 = scmp.ne.s32.totalorder %s195, %s196
      %p207 = scmp.eq.s32.totalorder %s31, 0
      %p208 = por %p206, %p207
      %p209 = scmp.ne.s32.totalorder %s195, %s196
      %p210 = scmp.eq.s32.totalorder %s32, 1
      %p211 = por %p209, %p210
      %p213 = scmp.ne.s32.totalorder %s196, %s212
      %p214 = scmp.eq.s32.totalorder %s32, 0
      %p215 = por %p213, %p214
      %s216 = ssub.s32 %s26, %s33
      %p217 = scmp.eq.s32.totalorder %s216, 0
      %s219 = sadd.s32 %s218, 1
      %s220 = scalar_select %p217, %s218, %s219
      %p223 = pneg %p217
      %p224 = scmp.eq.s32.totalorder %s26, 1
      %p225 = por %p223, %p224
      %p226 = scmp.ne.s32.totalorder %s218, %s221
      %p227 = scmp.eq.s32.totalorder %s26, 0
      %p228 = por %p226, %p227
      %p229 = scmp.ne.s32.totalorder %s218, %s221
      %p230 = scmp.eq.s32.totalorder %s31, 1
      %p231 = por %p229, %p230
      %p232 = scmp.ne.s32.totalorder %s221, %s222
      %p233 = scmp.eq.s32.totalorder %s31, 0
      %p234 = por %p232, %p233
      %p235 = scmp.ne.s32.totalorder %s221, %s222
      %p236 = scmp.eq.s32.totalorder %s32, 1
      %p237 = por %p235, %p236
      %p239 = scmp.ne.s32.totalorder %s222, %s238
      %p240 = scmp.eq.s32.totalorder %s32, 0
      %p241 = por %p239, %p240
      %s242 = ssub.s32 %s26, %s33
      %p243 = scmp.eq.s32.totalorder %s242, 0
      %s245 = sadd.s32 %s244, 1
      %s246 = scalar_select %p243, %s244, %s245
      %p249 = pneg %p243
      %p250 = scmp.eq.s32.totalorder %s26, 1
      %p251 = por %p249, %p250
      %p252 = scmp.ne.s32.totalorder %s244, %s247
      %p253 = scmp.eq.s32.totalorder %s26, 0
      %p254 = por %p252, %p253
      %p255 = scmp.ne.s32.totalorder %s244, %s247
      %p256 = scmp.eq.s32.totalorder %s31, 1
      %p257 = por %p255, %p256
      %p258 = scmp.ne.s32.totalorder %s247, %s248
      %p259 = scmp.eq.s32.totalorder %s31, 0
      %p260 = por %p258, %p259
      %p261 = scmp.ne.s32.totalorder %s247, %s248
      %p262 = scmp.eq.s32.totalorder %s32, 1
      %p263 = por %p261, %p262
      %p265 = scmp.ne.s32.totalorder %s248, %s264
      %p266 = scmp.eq.s32.totalorder %s32, 0
      %p267 = por %p265, %p266
      %s268 = ssub.s32 %s26, %s33
      %p269 = scmp.eq.s32.totalorder %s268, 0
      %s271 = sadd.s32 %s270, 1
      %s272 = scalar_select %p269, %s270, %s271
      %p275 = pneg %p269
      %p276 = scmp.eq.s32.totalorder %s26, 1
      %p277 = por %p275, %p276
      %p278 = scmp.ne.s32.totalorder %s270, %s273
      %p279 = scmp.eq.s32.totalorder %s26, 0
      %p280 = por %p278, %p279
      %p281 = scmp.ne.s32.totalorder %s270, %s273
      %p282 = scmp.eq.s32.totalorder %s31, 1
      %p283 = por %p281, %p282
      %p284 = scmp.ne.s32.totalorder %s273, %s274
      %p285 = scmp.eq.s32.totalorder %s31, 0
      %p286 = por %p284, %p285
      %p287 = scmp.ne.s32.totalorder %s273, %s274
      %p288 = scmp.eq.s32.totalorder %s32, 1
      %p289 = por %p287, %p288
      %p291 = scmp.ne.s32.totalorder %s274, %s290
      %p292 = scmp.eq.s32.totalorder %s32, 0
      %p293 = por %p291, %p292
      %s294 = ssub.s32 %s26, %s33
      %p295 = scmp.eq.s32.totalorder %s294, 0
      %s297 = sadd.s32 %s296, 1
      %s298 = scalar_select %p295, %s296, %s297
      %p301 = pneg %p295
      %p302 = scmp.eq.s32.totalorder %s26, 1
      %p303 = por %p301, %p302
      %p304 = scmp.ne.s32.totalorder %s296, %s299
      %p305 = scmp.eq.s32.totalorder %s26, 0
      %p306 = por %p304, %p305
      %p307 = scmp.ne.s32.totalorder %s296, %s299
      %p308 = scmp.eq.s32.totalorder %s31, 1
      %p309 = por %p307, %p308
      %p310 = scmp.ne.s32.totalorder %s299, %s300
      %p311 = scmp.eq.s32.totalorder %s31, 0
      %p312 = por %p310, %p311
      %p313 = scmp.ne.s32.totalorder %s299, %s300
      %p314 = scmp.eq.s32.totalorder %s32, 1
      %p315 = por %p313, %p314
      %p317 = scmp.ne.s32.totalorder %s300, %s316
      %p318 = scmp.eq.s32.totalorder %s32, 0
      %p319 = por %p317, %p318
      %s320 = ssub.s32 %s26, %s33
      %p321 = scmp.eq.s32.totalorder %s320, 0
      %s323 = sadd.s32 %s322, 1
      %s324 = scalar_select %p321, %s322, %s323
      %p327 = pneg %p321
      %p328 = scmp.eq.s32.totalorder %s26, 1
      %p329 = por %p327, %p328
      %p330 = scmp.ne.s32.totalorder %s322, %s325
      %p331 = scmp.eq.s32.totalorder %s26, 0
      %p332 = por %p330, %p331
      %p333 = scmp.ne.s32.totalorder %s322, %s325
      %p334 = scmp.eq.s32.totalorder %s31, 1
      %p335 = por %p333, %p334
      %p336 = scmp.ne.s32.totalorder %s325, %s326
      %p337 = scmp.eq.s32.totalorder %s31, 0
      %p338 = por %p336, %p337
      %p339 = scmp.ne.s32.totalorder %s325, %s326
      %p340 = scmp.eq.s32.totalorder %s32, 1
      %p341 = por %p339, %p340
      %p343 = scmp.ne.s32.totalorder %s326, %s342
      %p344 = scmp.eq.s32.totalorder %s32, 0
      %p345 = por %p343, %p344
      %s346 = ssub.s32 %s26, %s33
      %p347 = scmp.eq.s32.totalorder %s346, 0
      %s349 = sadd.s32 %s348, 1
      %s350 = scalar_select %p347, %s348, %s349
      %p353 = pneg %p347
      %p354 = scmp.eq.s32.totalorder %s26, 1
      %p355 = por %p353, %p354
      %p356 = scmp.ne.s32.totalorder %s348, %s351
      %p357 = scmp.eq.s32.totalorder %s26, 0
      %p358 = por %p356, %p357
      %p359 = scmp.ne.s32.totalorder %s348, %s351
      %p360 = scmp.eq.s32.totalorder %s31, 1
      %p361 = por %p359, %p360
      %p362 = scmp.ne.s32.totalorder %s351, %s352
      %p363 = scmp.eq.s32.totalorder %s31, 0
      %p364 = por %p362, %p363
      %p365 = scmp.ne.s32.totalorder %s351, %s352
      %p366 = scmp.eq.s32.totalorder %s32, 1
      %p367 = por %p365, %p366
      %p369 = scmp.ne.s32.totalorder %s352, %s368
      %p370 = scmp.eq.s32.totalorder %s32, 0
      %p371 = por %p369, %p370
      %s372 = ssub.s32 %s26, %s33
      %p373 = scmp.eq.s32.totalorder %s372, 0
      %s375 = sadd.s32 %s374, 1
      %s376 = scalar_select %p373, %s374, %s375
      %p379 = pneg %p373
      %p380 = scmp.eq.s32.totalorder %s26, 1
      %p381 = por %p379, %p380
      %p382 = scmp.ne.s32.totalorder %s374, %s377
      %p383 = scmp.eq.s32.totalorder %s26, 0
      %p384 = por %p382, %p383
      %p385 = scmp.ne.s32.totalorder %s374, %s377
      %p386 = scmp.eq.s32.totalorder %s31, 1
      %p387 = por %p385, %p386
      %p388 = scmp.ne.s32.totalorder %s377, %s378
      %p389 = scmp.eq.s32.totalorder %s31, 0
      %p390 = por %p388, %p389
      %p391 = scmp.ne.s32.totalorder %s377, %s378
      %p392 = scmp.eq.s32.totalorder %s32, 1
      %p393 = por %p391, %p392
      %p395 = scmp.ne.s32.totalorder %s378, %s394
      %p396 = scmp.eq.s32.totalorder %s32, 0
      %p397 = por %p395, %p396
      %p398 = scmp.le.s32.totalorder 1, %s26
      %p399 = scmp.lt.s32.totalorder %s26, 3
      %p400 = pnand %p398, %p399
      %p401 = pneg %p400
      // Predicated region
      $region9: #{mcvae_forward.1} parent=5 // pred_check
        _
      $region10: #{mcvae_forward.1} parent=5 // pred_check_branch
        %403 = sbr.rel (%p400) target = $region12
      $region11: #{mcvae_forward.1} parent=5 // pred_region
        %s404 = ssub.s32 %s26, 1
      $region12: #{mcvae_forward.1} parent=5 // pred_fallthru
        _
      %p405 = scmp.lt.s32.totalorder %s26, 2
      // Predicated region
      $region13: #{mcvae_forward.1} parent=5 // pred_check
        %p406 = pneg %p405
      $region14: #{mcvae_forward.1} parent=5 // pred_check_branch
        %408 = sbr.rel (%p406) target = $region16
      $region15: #{mcvae_forward.1} parent=5 // pred_region
        // Predicated region
        $region17: #{mcvae_forward.1} parent=15 // pred_check
          %p409 = pneg %p46
        $region18: #{mcvae_forward.1} parent=15 // pred_check_branch
          %411 = sbr.rel (%p409) target = $region20
        $region19: #{mcvae_forward.1} parent=15 // pred_region
          %p412 = scmp.lt.s32.totalorder %s26, 1
          %s413 = scalar_select %p412, %s26, 1
          %s414 = smul.addr %s413, 6
          %s415 = smul.addr %s414, 8
          %s416 = scalar_lea.vmem %s0, %s415
        $region20: #{mcvae_forward.1} parent=15 // pred_fallthru
          _
        // Predicated region
        $region21: #{mcvae_forward.1} parent=15 // pred_check
          %p417 = pneg %p72
        $region22: #{mcvae_forward.1} parent=15 // pred_check_branch
          %419 = sbr.rel (%p417) target = $region24
        $region23: #{mcvae_forward.1} parent=15 // pred_region
          %p420 = scmp.lt.s32.totalorder %s26, 1
          %s421 = scalar_select %p420, %s26, 1
          %s422 = smul.addr %s421, 4
          %s423 = smul.addr %s422, 8
          %s424 = scalar_lea.vmem %s1, %s423
        $region24: #{mcvae_forward.1} parent=15 // pred_fallthru
          _
        // Predicated region
        $region25: #{mcvae_forward.1} parent=15 // pred_check
          %p425 = pneg %p98
        $region26: #{mcvae_forward.1} parent=15 // pred_check_branch
          %427 = sbr.rel (%p425) target = $region28
        $region27: #{mcvae_forward.1} parent=15 // pred_region
          %s428 = sand.u32 %s88, 1
          %s429 = scalar_lea.sflag [#allocation3], %s428
          %s430 = sand.u32 %s88, 1
          %s431 = smul.addr %s430, 768
          %s432 = scalar_lea.vmem [#allocation2], %s431
          %s434 = ssub.s32 12288, 12288
          %435 = vsyncadd %s429, %s434
          %s436 = smul.addr %s26, 192
          %s437 = smul.addr %s436, 64
          %s438 = scalar_lea.hbm %s2, %s437
          %s439 = sshll.u32 %s432, 4
          %s440 = int_to_ptr.vmem [resolvable:$true] %s439
          %445 = dma.hbm_to_vmem [thread:$0]  %s438, 12288, %s440, %s429, 128, 128, 8
        $region28: #{mcvae_forward.1} parent=15 // pred_fallthru
          _
        // Predicated region
        $region29: #{mcvae_forward.1} parent=15 // pred_check
          %p446 = pneg %p124
        $region30: #{mcvae_forward.1} parent=15 // pred_check_branch
          %448 = sbr.rel (%p446) target = $region32
        $region31: #{mcvae_forward.1} parent=15 // pred_region
          %p449 = scmp.lt.s32.totalorder %s26, 1
          %s450 = scalar_select %p449, %s26, 1
          %s451 = smul.addr %s450, 2
          %s452 = scalar_lea.vmem %s3, %s451
        $region32: #{mcvae_forward.1} parent=15 // pred_fallthru
          _
        // Predicated region
        $region33: #{mcvae_forward.1} parent=15 // pred_check
          %p453 = pneg %p150
        $region34: #{mcvae_forward.1} parent=15 // pred_check_branch
          %455 = sbr.rel (%p453) target = $region36
        $region35: #{mcvae_forward.1} parent=15 // pred_region
          %s456 = sand.u32 %s26, 1
          %s457 = scalar_lea.sflag [#allocation5], %s456
          %s458 = sand.u32 %s140, 1
          %s459 = smul.addr %s458, 1024
          %s460 = scalar_lea.vmem [#allocation4], %s459
          %s462 = ssub.s32 16384, 16384
          %463 = vsyncadd %s457, %s462
          %s464 = smul.addr %s26, 128
          %s465 = smul.addr %s464, 128
          %s466 = scalar_lea.hbm %s4, %s465
          %s467 = sshll.u32 %s460, 4
          %s468 = int_to_ptr.vmem [resolvable:$true] %s467
          %473 = dma.hbm_to_vmem [thread:$0]  %s466, 16384, %s468, %s457, 512, 512, 32
        $region36: #{mcvae_forward.1} parent=15 // pred_fallthru
          _
        // Predicated region
        $region37: #{mcvae_forward.1} parent=15 // pred_check
          %p474 = pneg %p176
        $region38: #{mcvae_forward.1} parent=15 // pred_check_branch
          %476 = sbr.rel (%p474) target = $region40
        $region39: #{mcvae_forward.1} parent=15 // pred_region
          %p477 = scmp.lt.s32.totalorder %s26, 1
          %s478 = scalar_select %p477, %s26, 1
          %s479 = smul.addr %s478, 4
          %s480 = scalar_lea.vmem %s5, %s479
        $region40: #{mcvae_forward.1} parent=15 // pred_fallthru
          _
        // Predicated region
        $region41: #{mcvae_forward.1} parent=15 // pred_check
          %p481 = pneg %p202
        $region42: #{mcvae_forward.1} parent=15 // pred_check_branch
          %483 = sbr.rel (%p481) target = $region44
        $region43: #{mcvae_forward.1} parent=15 // pred_region
          %p484 = scmp.lt.s32.totalorder %s26, 1
          %s485 = scalar_select %p484, %s26, 1
          %s486 = smul.addr %s485, 64
          %s487 = smul.addr %s486, 4
          %s488 = scalar_lea.vmem %s6, %s487
        $region44: #{mcvae_forward.1} parent=15 // pred_fallthru
          _
        // Predicated region
        $region45: #{mcvae_forward.1} parent=15 // pred_check
          %p489 = pneg %p228
        $region46: #{mcvae_forward.1} parent=15 // pred_check_branch
          %491 = sbr.rel (%p489) target = $region48
        $region47: #{mcvae_forward.1} parent=15 // pred_region
          %p492 = scmp.lt.s32.totalorder %s26, 1
          %s493 = scalar_select %p492, %s26, 1
          %s494 = smul.addr %s493, 2
          %s495 = scalar_lea.vmem %s7, %s494
        $region48: #{mcvae_forward.1} parent=15 // pred_fallthru
          _
        // Predicated region
        $region49: #{mcvae_forward.1} parent=15 // pred_check
          %p496 = pneg %p254
        $region50: #{mcvae_forward.1} parent=15 // pred_check_branch
          %498 = sbr.rel (%p496) target = $region52
        $region51: #{mcvae_forward.1} parent=15 // pred_region
          %s499 = sand.u32 %s26, 1
          %s500 = scalar_lea.sflag [#allocation5], %s499
          %s501 = sand.u32 %s244, 1
          %s502 = smul.addr %s501, 768
          %s503 = scalar_lea.vmem [#allocation6], %s502
          %s505 = ssub.s32 12288, 12288
          %506 = vsyncadd %s500, %s505
          %s507 = smul.addr %s26, 192
          %s508 = smul.addr %s507, 64
          %s509 = scalar_lea.hbm %s8, %s508
          %s510 = sshll.u32 %s503, 4
          %s511 = int_to_ptr.vmem [resolvable:$true] %s510
          %516 = dma.hbm_to_vmem [thread:$0]  %s509, 12288, %s511, %s500, 384, 384, 24
        $region52: #{mcvae_forward.1} parent=15 // pred_fallthru
          _
        // Predicated region
        $region53: #{mcvae_forward.1} parent=15 // pred_check
          %p517 = pneg %p280
        $region54: #{mcvae_forward.1} parent=15 // pred_check_branch
          %519 = sbr.rel (%p517) target = $region56
        $region55: #{mcvae_forward.1} parent=15 // pred_region
          %p520 = scmp.lt.s32.totalorder %s26, 1
          %s521 = scalar_select %p520, %s26, 1
          %s522 = smul.addr %s521, 6
          %s523 = scalar_lea.vmem %s9, %s522
        $region56: #{mcvae_forward.1} parent=15 // pred_fallthru
          _
      $region16: #{mcvae_forward.1} parent=5 // pred_fallthru
        _
      %p524 = scmp.le.s32.totalorder 1, %s26
      %p525 = scmp.lt.s32.totalorder %s26, 3
      %p526 = pnand %p524, %p525
      %p527 = pneg %p526
      // Predicated region
      $region57: #{mcvae_forward.1} parent=5 // pred_check
        _
      $region58: #{mcvae_forward.1} parent=5 // pred_check_branch
        %529 = sbr.rel (%p526) target = $region60
      $region59: #{mcvae_forward.1} parent=5 // pred_region
        %s530 = ssub.s32 %s26, 1
        %s531 = sand.u32 %s91, 1
        %s532 = scalar_lea.sflag [#allocation3], %s531
        %s533 = sand.u32 %s91, 1
        %s534 = smul.addr %s533, 768
        %s535 = scalar_lea.vmem [#allocation2], %s534
        // Predicated region
        $region61: #{mcvae_forward.1} parent=59 // pred_check
          %p536 = pneg %p104
        $region62: #{mcvae_forward.1} parent=59 // pred_check_branch
          %538 = sbr.rel (%p536) target = $region64
        $region63: #{mcvae_forward.1} parent=59 // pred_region
          %539 = dma.done %s532, 12288
        $region64: #{mcvae_forward.1} parent=59 // pred_fallthru
          _
        %s540 = sand.u32 %s31, 1
        %s541 = scalar_lea.sflag [#allocation5], %s540
        %s542 = sand.u32 %s143, 1
        %s543 = smul.addr %s542, 1024
        %s544 = scalar_lea.vmem [#allocation4], %s543
        // Predicated region
        $region65: #{mcvae_forward.1} parent=59 // pred_check
          %p545 = pneg %p156
        $region66: #{mcvae_forward.1} parent=59 // pred_check_branch
          %547 = sbr.rel (%p545) target = $region68
        $region67: #{mcvae_forward.1} parent=59 // pred_region
          %548 = dma.done %s541, 16384
        $region68: #{mcvae_forward.1} parent=59 // pred_fallthru
          _
        %s549 = sand.u32 %s31, 1
        %s550 = scalar_lea.sflag [#allocation5], %s549
        %s551 = sand.u32 %s247, 1
        %s552 = smul.addr %s551, 768
        %s553 = scalar_lea.vmem [#allocation6], %s552
        // Predicated region
        $region69: #{mcvae_forward.1} parent=59 // pred_check
          %p554 = pneg %p260
        $region70: #{mcvae_forward.1} parent=59 // pred_check_branch
          %556 = sbr.rel (%p554) target = $region72
        $region71: #{mcvae_forward.1} parent=59 // pred_region
          %557 = dma.done %s550, 12288
        $region72: #{mcvae_forward.1} parent=59 // pred_fallthru
          _
        %p558 = scmp.lt.s32.totalorder %s31, 1
        %s559 = scalar_select %p558, %s31, 1
        %s560 = smul.addr %s559, 6
        %s561 = smul.addr %s560, 8
        %s562 = scalar_lea.vmem %s0, %s561
        %p563 = pneg %p52
        %p564 = pneg %p49
        %p565 = scmp.lt.s32.totalorder %s31, 1
        %s566 = scalar_select %p565, %s31, 1
        %s567 = smul.addr %s566, 4
        %s568 = smul.addr %s567, 8
        %s569 = scalar_lea.vmem %s1, %s568
        %p570 = pneg %p78
        %p571 = pneg %p75
        %s572 = sand.u32 %s91, 1
        %s573 = scalar_lea.sflag [#allocation3], %s572
        %s574 = sand.u32 %s91, 1
        %s575 = smul.addr %s574, 768
        %s576 = scalar_lea.vmem [#allocation2], %s575
        %p577 = pneg %p104
        %p578 = pneg %p101
        %p579 = scmp.lt.s32.totalorder %s31, 1
        %s580 = scalar_select %p579, %s31, 1
        %s581 = smul.addr %s580, 2
        %s582 = scalar_lea.vmem %s3, %s581
        %p583 = pneg %p130
        %p584 = pneg %p127
        %s585 = sand.u32 %s31, 1
        %s586 = scalar_lea.sflag [#allocation5], %s585
        %s587 = sand.u32 %s143, 1
        %s588 = smul.addr %s587, 1024
        %s589 = scalar_lea.vmem [#allocation4], %s588
        %p590 = pneg %p156
        %p591 = pneg %p153
        %p592 = scmp.lt.s32.totalorder %s31, 1
        %s593 = scalar_select %p592, %s31, 1
        %s594 = smul.addr %s593, 4
        %s595 = scalar_lea.vmem %s5, %s594
        %p596 = pneg %p182
        %p597 = pneg %p179
        %p598 = scmp.lt.s32.totalorder %s31, 1
        %s599 = scalar_select %p598, %s31, 1
        %s600 = smul.addr %s599, 64
        %s601 = smul.addr %s600, 4
        %s602 = scalar_lea.vmem %s6, %s601
        %p603 = pneg %p208
        %p604 = pneg %p205
        %p605 = scmp.lt.s32.totalorder %s31, 1
        %s606 = scalar_select %p605, %s31, 1
        %s607 = smul.addr %s606, 2
        %s608 = scalar_lea.vmem %s7, %s607
        %p609 = pneg %p234
        %p610 = pneg %p231
        %s611 = sand.u32 %s31, 1
        %s612 = scalar_lea.sflag [#allocation5], %s611
        %s613 = sand.u32 %s247, 1
        %s614 = smul.addr %s613, 768
        %s615 = scalar_lea.vmem [#allocation6], %s614
        %p616 = pneg %p260
        %p617 = pneg %p257
        %p618 = scmp.lt.s32.totalorder %s31, 1
        %s619 = scalar_select %p618, %s31, 1
        %s620 = smul.addr %s619, 6
        %s621 = scalar_lea.vmem %s9, %s620
        %p622 = pneg %p286
        %p623 = pneg %p283
        %p624 = pneg %p312
        %p625 = pneg %p309
        %p626 = scmp.lt.s32.totalorder %s31, 1
        %s627 = scalar_select %p626, %s31, 1
        %s628 = smul.addr %s627, 6
        %s629 = smul.addr %s628, 8
        %s630 = scalar_lea.vmem %s10, %s629
        %p631 = pneg %p338
        %p632 = pneg %p335
        %p633 = scmp.lt.s32.totalorder %s31, 1
        %s634 = scalar_select %p633, %s31, 1
        %s635 = smul.addr %s634, 2
        %s636 = smul.addr %s635, 8
        %s637 = scalar_lea.vmem %s11, %s636
        %p638 = pneg %p364
        %p639 = pneg %p361
        %p640 = scmp.lt.s32.totalorder %s31, 1
        %s641 = scalar_select %p640, %s31, 1
        %s642 = smul.addr %s641, 2
        %s643 = smul.addr %s642, 8
        %s644 = scalar_lea.vmem %s12, %s643
        %p645 = pneg %p390
        %p646 = pneg %p387
        %p647 = scmp.lt.s32.totalorder %s31, 1
        %s648 = scalar_select %p647, %s31, 1
        %s649 = smul.addr %s648, 2
        %s650 = smul.addr %s649, 8
        %s651 = scalar_lea.vmem %s13, %s650
        %p652 = scmp.lt.s32.totalorder %s31, 1
        %s653 = scalar_select %p652, %s31, 1
        %s654 = smul.addr %s653, 6
        %s655 = smul.addr %s654, 8
        %s656 = scalar_lea.vmem %s0, %s655
        %p657 = scmp.lt.s32.totalorder %s31, 1
        %s658 = scalar_select %p657, %s31, 1
        %s659 = smul.addr %s658, 4
        %s660 = smul.addr %s659, 8
        %s661 = scalar_lea.vmem %s1, %s660
        %p662 = scmp.lt.s32.totalorder %s31, 1
        %s663 = scalar_select %p662, %s31, 1
        %s664 = smul.addr %s663, 2
        %s665 = scalar_lea.vmem %s3, %s664
        %p666 = scmp.lt.s32.totalorder %s31, 1
        %s667 = scalar_select %p666, %s31, 1
        %s668 = smul.addr %s667, 4
        %s669 = scalar_lea.vmem %s5, %s668
        %p670 = scmp.lt.s32.totalorder %s31, 1
        %s671 = scalar_select %p670, %s31, 1
        %s672 = smul.addr %s671, 64
        %s673 = smul.addr %s672, 4
        %s674 = scalar_lea.vmem %s6, %s673
        %p675 = scmp.lt.s32.totalorder %s31, 1
        %s676 = scalar_select %p675, %s31, 1
        %s677 = smul.addr %s676, 2
        %s678 = scalar_lea.vmem %s7, %s677
        %p679 = scmp.lt.s32.totalorder %s31, 1
        %s680 = scalar_select %p679, %s31, 1
        %s681 = smul.addr %s680, 6
        %s682 = scalar_lea.vmem %s9, %s681
        %p683 = scmp.lt.s32.totalorder %s31, 1
        %s684 = scalar_select %p683, %s31, 1
        %s685 = smul.addr %s684, 6
        %s686 = smul.addr %s685, 8
        %s687 = scalar_lea.vmem %s10, %s686
        %p688 = scmp.lt.s32.totalorder %s31, 1
        %s689 = scalar_select %p688, %s31, 1
        %s690 = smul.addr %s689, 2
        %s691 = smul.addr %s690, 8
        %s692 = scalar_lea.vmem %s11, %s691
        %p693 = scmp.lt.s32.totalorder %s31, 1
        %s694 = scalar_select %p693, %s31, 1
        %s695 = smul.addr %s694, 2
        %s696 = smul.addr %s695, 8
        %s697 = scalar_lea.vmem %s12, %s696
        %p698 = scmp.lt.s32.totalorder %s31, 1
        %s699 = scalar_select %p698, %s31, 1
        %s700 = smul.addr %s699, 2
        %s701 = smul.addr %s700, 8
        %s702 = scalar_lea.vmem %s13, %s701
        %v703 = vld [vmem:[%s656] sm:$0xff]
        %v704 = vld [vmem:[%s656 + $0x8] sm:$0xff]
        %v705 = vld [vmem:[%s656 + $0x10] sm:$0xff]
        %v706 = vld [vmem:[%s656 + $0x18] sm:$0xff]
        %v707 = vld [vmem:[%s656 + $0x20] sm:$0xff]
        %v708 = vld [vmem:[%s656 + $0x28] sm:$0xff]
        %v709 = vpack.c.bf16 %v703, %v703
        %v710 = vpack.c.bf16 %v704, %v704
        %v711 = vpack.c.bf16 %v705, %v705
        %v712 = vpack.c.bf16 %v706, %v706
        %v713 = vpack.c.bf16 %v707, %v707
        %v714 = vpack.c.bf16 %v708, %v708
        %v715 = vld [vmem:[%s535] sm:$0xff]
        %v716 = vld [vmem:[%s535 + $0x8] sm:$0xff]
        %v717 = vld [vmem:[%s535 + $0x10] sm:$0xff]
        %v718 = vld [vmem:[%s535 + $0x18] sm:$0xff]
        %v719 = vld [vmem:[%s535 + $0x20] sm:$0xff]
        %v720 = vld [vmem:[%s535 + $0x28] sm:$0xff]
        %v721 = vld [vmem:[%s535 + $0x30] sm:$0xff]
        %v722 = vld [vmem:[%s535 + $0x38] sm:$0xff]
        %v723 = vld [vmem:[%s535 + $0x40] sm:$0xff]
        %v724 = vld [vmem:[%s535 + $0x48] sm:$0xff]
        %v725 = vld [vmem:[%s535 + $0x50] sm:$0xff]
        %v726 = vld [vmem:[%s535 + $0x58] sm:$0xff]
        %v727 = vld [vmem:[%s535 + $0x60] sm:$0xff]
        %v728 = vld [vmem:[%s535 + $0x68] sm:$0xff]
        %v729 = vld [vmem:[%s535 + $0x70] sm:$0xff]
        %v730 = vld [vmem:[%s535 + $0x78] sm:$0xff]
        %v731 = vld [vmem:[%s535 + $0x80] sm:$0xff]
        %v732 = vld [vmem:[%s535 + $0x88] sm:$0xff]
        %v733 = vld [vmem:[%s535 + $0x90] sm:$0xff]
        %v734 = vld [vmem:[%s535 + $0x98] sm:$0xff]
        %v735 = vld [vmem:[%s535 + $0xa0] sm:$0xff]
        %v736 = vld [vmem:[%s535 + $0xa8] sm:$0xff]
        %v737 = vld [vmem:[%s535 + $0xb0] sm:$0xff]
        %v738 = vld [vmem:[%s535 + $0xb8] sm:$0xff]
        %v739 = vld [vmem:[%s535 + $0xc0] sm:$0xff]
        %v740 = vld [vmem:[%s535 + $0xc8] sm:$0xff]
        %v741 = vld [vmem:[%s535 + $0xd0] sm:$0xff]
        %v742 = vld [vmem:[%s535 + $0xd8] sm:$0xff]
        %v743 = vld [vmem:[%s535 + $0xe0] sm:$0xff]
        %v744 = vld [vmem:[%s535 + $0xe8] sm:$0xff]
        %v745 = vld [vmem:[%s535 + $0xf0] sm:$0xff]
        %v746 = vld [vmem:[%s535 + $0xf8] sm:$0xff]
        %v747 = vld [vmem:[%s535 + $0x100] sm:$0xff]
        %v748 = vld [vmem:[%s535 + $0x108] sm:$0xff]
        %v749 = vld [vmem:[%s535 + $0x110] sm:$0xff]
        %v750 = vld [vmem:[%s535 + $0x118] sm:$0xff]
        %v751 = vld [vmem:[%s535 + $0x120] sm:$0xff]
        %v752 = vld [vmem:[%s535 + $0x128] sm:$0xff]
        %v753 = vld [vmem:[%s535 + $0x130] sm:$0xff]
        %v754 = vld [vmem:[%s535 + $0x138] sm:$0xff]
        %v755 = vld [vmem:[%s535 + $0x140] sm:$0xff]
        %v756 = vld [vmem:[%s535 + $0x148] sm:$0xff]
        %v757 = vld [vmem:[%s535 + $0x150] sm:$0xff]
        %v758 = vld [vmem:[%s535 + $0x158] sm:$0xff]
        %v759 = vld [vmem:[%s535 + $0x160] sm:$0xff]
        %v760 = vld [vmem:[%s535 + $0x168] sm:$0xff]
        %v761 = vld [vmem:[%s535 + $0x170] sm:$0xff]
        %v762 = vld [vmem:[%s535 + $0x178] sm:$0xff]
        %v763 = vld [vmem:[%s535 + $0x180] sm:$0xff]
        %v764 = vld [vmem:[%s535 + $0x188] sm:$0xff]
        %v765 = vld [vmem:[%s535 + $0x190] sm:$0xff]
        %v766 = vld [vmem:[%s535 + $0x198] sm:$0xff]
        %v767 = vld [vmem:[%s535 + $0x1a0] sm:$0xff]
        %v768 = vld [vmem:[%s535 + $0x1a8] sm:$0xff]
        %v769 = vld [vmem:[%s535 + $0x1b0] sm:$0xff]
        %v770 = vld [vmem:[%s535 + $0x1b8] sm:$0xff]
        %v771 = vld [vmem:[%s535 + $0x1c0] sm:$0xff]
        %v772 = vld [vmem:[%s535 + $0x1c8] sm:$0xff]
        %v773 = vld [vmem:[%s535 + $0x1d0] sm:$0xff]
        %v774 = vld [vmem:[%s535 + $0x1d8] sm:$0xff]
        %v775 = vld [vmem:[%s535 + $0x1e0] sm:$0xff]
        %v776 = vld [vmem:[%s535 + $0x1e8] sm:$0xff]
        %v777 = vld [vmem:[%s535 + $0x1f0] sm:$0xff]
        %v778 = vld [vmem:[%s535 + $0x1f8] sm:$0xff]
        %v779 = vld [vmem:[%s535 + $0x200] sm:$0xff]
        %v780 = vld [vmem:[%s535 + $0x208] sm:$0xff]
        %v781 = vld [vmem:[%s535 + $0x210] sm:$0xff]
        %v782 = vld [vmem:[%s535 + $0x218] sm:$0xff]
        %v783 = vld [vmem:[%s535 + $0x220] sm:$0xff]
        %v784 = vld [vmem:[%s535 + $0x228] sm:$0xff]
        %v785 = vld [vmem:[%s535 + $0x230] sm:$0xff]
        %v786 = vld [vmem:[%s535 + $0x238] sm:$0xff]
        %v787 = vld [vmem:[%s535 + $0x240] sm:$0xff]
        %v788 = vld [vmem:[%s535 + $0x248] sm:$0xff]
        %v789 = vld [vmem:[%s535 + $0x250] sm:$0xff]
        %v790 = vld [vmem:[%s535 + $0x258] sm:$0xff]
        %v791 = vld [vmem:[%s535 + $0x260] sm:$0xff]
        %v792 = vld [vmem:[%s535 + $0x268] sm:$0xff]
        %v793 = vld [vmem:[%s535 + $0x270] sm:$0xff]
        %v794 = vld [vmem:[%s535 + $0x278] sm:$0xff]
        %v795 = vld [vmem:[%s535 + $0x280] sm:$0xff]
        %v796 = vld [vmem:[%s535 + $0x288] sm:$0xff]
        %v797 = vld [vmem:[%s535 + $0x290] sm:$0xff]
        %v798 = vld [vmem:[%s535 + $0x298] sm:$0xff]
        %v799 = vld [vmem:[%s535 + $0x2a0] sm:$0xff]
        %v800 = vld [vmem:[%s535 + $0x2a8] sm:$0xff]
        %v801 = vld [vmem:[%s535 + $0x2b0] sm:$0xff]
        %v802 = vld [vmem:[%s535 + $0x2b8] sm:$0xff]
        %v803 = vld [vmem:[%s535 + $0x2c0] sm:$0xff]
        %v804 = vld [vmem:[%s535 + $0x2c8] sm:$0xff]
        %v805 = vld [vmem:[%s535 + $0x2d0] sm:$0xff]
        %v806 = vld [vmem:[%s535 + $0x2d8] sm:$0xff]
        %v807 = vld [vmem:[%s535 + $0x2e0] sm:$0xff]
        %v808 = vld [vmem:[%s535 + $0x2e8] sm:$0xff]
        %v809 = vld [vmem:[%s535 + $0x2f0] sm:$0xff]
        %v810 = vld [vmem:[%s535 + $0x2f8] sm:$0xff]
        %v811 = vld [vmem:[%s665] sm:$0x3]
        %v813 = vlaneseq
        %v814 = vshrl.u32 %v813, 7
        %v815 = vsub.s32 0, %v814
        %v816 = vrot.slane %v811, %v815
        %v817 = vlaneseq
        %v818 = vshrl.u32 %v817, 7
        %v819 = vsub.s32 1, %v818
        %v820 = vrot.slane %v811, %v819
        %v919 = vunpack.c.l.b16 %v715
        %v920 = vunpack.c.h.b16 %v715
        %v921 = vunpack.c.l.b16 %v716
        %v922 = vunpack.c.h.b16 %v716
        %v923 = vunpack.c.l.b16 %v717
        %v924 = vunpack.c.h.b16 %v717
        %v925 = vunpack.c.l.b16 %v718
        %v926 = vunpack.c.h.b16 %v718
        %v927 = vunpack.c.l.b16 %v719
        %v928 = vunpack.c.h.b16 %v719
        %v929 = vunpack.c.l.b16 %v720
        %v930 = vunpack.c.h.b16 %v720
        %v931 = vunpack.c.l.b16 %v721
        %v932 = vunpack.c.h.b16 %v721
        %v933 = vunpack.c.l.b16 %v722
        %v934 = vunpack.c.h.b16 %v722
        %v935 = vunpack.c.l.b16 %v723
        %v936 = vunpack.c.h.b16 %v723
        %v937 = vunpack.c.l.b16 %v724
        %v938 = vunpack.c.h.b16 %v724
        %v939 = vunpack.c.l.b16 %v725
        %v940 = vunpack.c.h.b16 %v725
        %v941 = vunpack.c.l.b16 %v726
        %v942 = vunpack.c.h.b16 %v726
        %v943 = vunpack.c.l.b16 %v727
        %v944 = vunpack.c.h.b16 %v727
        %v945 = vunpack.c.l.b16 %v728
        %v946 = vunpack.c.h.b16 %v728
        %v947 = vunpack.c.l.b16 %v729
        %v948 = vunpack.c.h.b16 %v729
        %v949 = vunpack.c.l.b16 %v730
        %v950 = vunpack.c.h.b16 %v730
        %v951 = vunpack.c.l.b16 %v731
        %v952 = vunpack.c.h.b16 %v731
        %v953 = vunpack.c.l.b16 %v732
        %v954 = vunpack.c.h.b16 %v732
        %v955 = vunpack.c.l.b16 %v733
        %v956 = vunpack.c.h.b16 %v733
        %v957 = vunpack.c.l.b16 %v734
        %v958 = vunpack.c.h.b16 %v734
        %v959 = vunpack.c.l.b16 %v735
        %v960 = vunpack.c.h.b16 %v735
        %v961 = vunpack.c.l.b16 %v736
        %v962 = vunpack.c.h.b16 %v736
        %v963 = vunpack.c.l.b16 %v737
        %v964 = vunpack.c.h.b16 %v737
        %v965 = vunpack.c.l.b16 %v738
        %v966 = vunpack.c.h.b16 %v738
        %v967 = vunpack.c.l.b16 %v739
        %v968 = vunpack.c.h.b16 %v739
        %v969 = vunpack.c.l.b16 %v740
        %v970 = vunpack.c.h.b16 %v740
        %v971 = vunpack.c.l.b16 %v741
        %v972 = vunpack.c.h.b16 %v741
        %v973 = vunpack.c.l.b16 %v742
        %v974 = vunpack.c.h.b16 %v742
        %v975 = vunpack.c.l.b16 %v743
        %v976 = vunpack.c.h.b16 %v743
        %v977 = vunpack.c.l.b16 %v744
        %v978 = vunpack.c.h.b16 %v744
        %v979 = vunpack.c.l.b16 %v745
        %v980 = vunpack.c.h.b16 %v745
        %v981 = vunpack.c.l.b16 %v746
        %v982 = vunpack.c.h.b16 %v746
        %v983 = vunpack.c.l.b16 %v747
        %v984 = vunpack.c.h.b16 %v747
        %v985 = vunpack.c.l.b16 %v748
        %v986 = vunpack.c.h.b16 %v748
        %v987 = vunpack.c.l.b16 %v749
        %v988 = vunpack.c.h.b16 %v749
        %v989 = vunpack.c.l.b16 %v750
        %v990 = vunpack.c.h.b16 %v750
        %v991 = vunpack.c.l.b16 %v751
        %v992 = vunpack.c.h.b16 %v751
        %v993 = vunpack.c.l.b16 %v752
        %v994 = vunpack.c.h.b16 %v752
        %v995 = vunpack.c.l.b16 %v753
        %v996 = vunpack.c.h.b16 %v753
        %v997 = vunpack.c.l.b16 %v754
        %v998 = vunpack.c.h.b16 %v754
        %v999 = vunpack.c.l.b16 %v755
        %v1000 = vunpack.c.h.b16 %v755
        %v1001 = vunpack.c.l.b16 %v756
        %v1002 = vunpack.c.h.b16 %v756
        %v1003 = vunpack.c.l.b16 %v757
        %v1004 = vunpack.c.h.b16 %v757
        %v1005 = vunpack.c.l.b16 %v758
        %v1006 = vunpack.c.h.b16 %v758
        %v1007 = vunpack.c.l.b16 %v759
        %v1008 = vunpack.c.h.b16 %v759
        %v1009 = vunpack.c.l.b16 %v760
        %v1010 = vunpack.c.h.b16 %v760
        %v1011 = vunpack.c.l.b16 %v761
        %v1012 = vunpack.c.h.b16 %v761
        %v1013 = vunpack.c.l.b16 %v762
        %v1014 = vunpack.c.h.b16 %v762
        %v1015 = vunpack.c.l.b16 %v763
        %v1016 = vunpack.c.h.b16 %v763
        %v1017 = vunpack.c.l.b16 %v764
        %v1018 = vunpack.c.h.b16 %v764
        %v1019 = vunpack.c.l.b16 %v765
        %v1020 = vunpack.c.h.b16 %v765
        %v1021 = vunpack.c.l.b16 %v766
        %v1022 = vunpack.c.h.b16 %v766
        %v1023 = vunpack.c.l.b16 %v767
        %v1024 = vunpack.c.h.b16 %v767
        %v1025 = vunpack.c.l.b16 %v768
        %v1026 = vunpack.c.h.b16 %v768
        %v1027 = vunpack.c.l.b16 %v769
        %v1028 = vunpack.c.h.b16 %v769
        %v1029 = vunpack.c.l.b16 %v770
        %v1030 = vunpack.c.h.b16 %v770
        %v1031 = vunpack.c.l.b16 %v771
        %v1032 = vunpack.c.h.b16 %v771
        %v1033 = vunpack.c.l.b16 %v772
        %v1034 = vunpack.c.h.b16 %v772
        %v1035 = vunpack.c.l.b16 %v773
        %v1036 = vunpack.c.h.b16 %v773
        %v1037 = vunpack.c.l.b16 %v774
        %v1038 = vunpack.c.h.b16 %v774
        %v1039 = vunpack.c.l.b16 %v775
        %v1040 = vunpack.c.h.b16 %v775
        %v1041 = vunpack.c.l.b16 %v776
        %v1042 = vunpack.c.h.b16 %v776
        %v1043 = vunpack.c.l.b16 %v777
        %v1044 = vunpack.c.h.b16 %v777
        %v1045 = vunpack.c.l.b16 %v778
        %v1046 = vunpack.c.h.b16 %v778
        %v1047 = vunpack.c.l.b16 %v779
        %v1048 = vunpack.c.h.b16 %v779
        %v1049 = vunpack.c.l.b16 %v780
        %v1050 = vunpack.c.h.b16 %v780
        %v1051 = vunpack.c.l.b16 %v781
        %v1052 = vunpack.c.h.b16 %v781
        %v1053 = vunpack.c.l.b16 %v782
        %v1054 = vunpack.c.h.b16 %v782
        %v1055 = vunpack.c.l.b16 %v783
        %v1056 = vunpack.c.h.b16 %v783
        %v1057 = vunpack.c.l.b16 %v784
        %v1058 = vunpack.c.h.b16 %v784
        %v1059 = vunpack.c.l.b16 %v785
        %v1060 = vunpack.c.h.b16 %v785
        %v1061 = vunpack.c.l.b16 %v786
        %v1062 = vunpack.c.h.b16 %v786
        %v1063 = vunpack.c.l.b16 %v787
        %v1064 = vunpack.c.h.b16 %v787
        %v1065 = vunpack.c.l.b16 %v788
        %v1066 = vunpack.c.h.b16 %v788
        %v1067 = vunpack.c.l.b16 %v789
        %v1068 = vunpack.c.h.b16 %v789
        %v1069 = vunpack.c.l.b16 %v790
        %v1070 = vunpack.c.h.b16 %v790
        %v1071 = vunpack.c.l.b16 %v791
        %v1072 = vunpack.c.h.b16 %v791
        %v1073 = vunpack.c.l.b16 %v792
        %v1074 = vunpack.c.h.b16 %v792
        %v1075 = vunpack.c.l.b16 %v793
        %v1076 = vunpack.c.h.b16 %v793
        %v1077 = vunpack.c.l.b16 %v794
        %v1078 = vunpack.c.h.b16 %v794
        %v1079 = vunpack.c.l.b16 %v795
        %v1080 = vunpack.c.h.b16 %v795
        %v1081 = vunpack.c.l.b16 %v796
        %v1082 = vunpack.c.h.b16 %v796
        %v1083 = vunpack.c.l.b16 %v797
        %v1084 = vunpack.c.h.b16 %v797
        %v1085 = vunpack.c.l.b16 %v798
        %v1086 = vunpack.c.h.b16 %v798
        %v1087 = vunpack.c.l.b16 %v799
        %v1088 = vunpack.c.h.b16 %v799
        %v1089 = vunpack.c.l.b16 %v800
        %v1090 = vunpack.c.h.b16 %v800
        %v1091 = vunpack.c.l.b16 %v801
        %v1092 = vunpack.c.h.b16 %v801
        %v1093 = vunpack.c.l.b16 %v802
        %v1094 = vunpack.c.h.b16 %v802
        %v1095 = vunpack.c.l.b16 %v803
        %v1096 = vunpack.c.h.b16 %v803
        %v1097 = vunpack.c.l.b16 %v804
        %v1098 = vunpack.c.h.b16 %v804
        %v1099 = vunpack.c.l.b16 %v805
        %v1100 = vunpack.c.h.b16 %v805
        %v1101 = vunpack.c.l.b16 %v806
        %v1102 = vunpack.c.h.b16 %v806
        %v1103 = vunpack.c.l.b16 %v807
        %v1104 = vunpack.c.h.b16 %v807
        %v1105 = vunpack.c.l.b16 %v808
        %v1106 = vunpack.c.h.b16 %v808
        %v1107 = vunpack.c.l.b16 %v809
        %v1108 = vunpack.c.h.b16 %v809
        %v1109 = vunpack.c.l.b16 %v810
        %v1110 = vunpack.c.h.b16 %v810
        %v1111 = vpack.c.b16 %v921, %v919
        %v1112 = vpack.c.b16 %v922, %v920
        %v1113 = vpack.c.b16 %v925, %v923
        %v1114 = vpack.c.b16 %v926, %v924
        %v1115 = vpack.c.b16 %v929, %v927
        %v1116 = vpack.c.b16 %v930, %v928
        %v1117 = vpack.c.b16 %v933, %v931
        %v1118 = vpack.c.b16 %v934, %v932
        %v1119 = vpack.c.b16 %v937, %v935
        %v1120 = vpack.c.b16 %v938, %v936
        %v1121 = vpack.c.b16 %v941, %v939
        %v1122 = vpack.c.b16 %v942, %v940
        %v1123 = vpack.c.b16 %v945, %v943
        %v1124 = vpack.c.b16 %v946, %v944
        %v1125 = vpack.c.b16 %v949, %v947
        %v1126 = vpack.c.b16 %v950, %v948
        %v1127 = vpack.c.b16 %v953, %v951
        %v1128 = vpack.c.b16 %v954, %v952
        %v1129 = vpack.c.b16 %v957, %v955
        %v1130 = vpack.c.b16 %v958, %v956
        %v1131 = vpack.c.b16 %v961, %v959
        %v1132 = vpack.c.b16 %v962, %v960
        %v1133 = vpack.c.b16 %v965, %v963
        %v1134 = vpack.c.b16 %v966, %v964
        %v1135 = vpack.c.b16 %v969, %v967
        %v1136 = vpack.c.b16 %v970, %v968
        %v1137 = vpack.c.b16 %v973, %v971
        %v1138 = vpack.c.b16 %v974, %v972
        %v1139 = vpack.c.b16 %v977, %v975
        %v1140 = vpack.c.b16 %v978, %v976
        %v1141 = vpack.c.b16 %v981, %v979
        %v1142 = vpack.c.b16 %v982, %v980
        %v1143 = vpack.c.b16 %v985, %v983
        %v1144 = vpack.c.b16 %v986, %v984
        %v1145 = vpack.c.b16 %v989, %v987
        %v1146 = vpack.c.b16 %v990, %v988
        %v1147 = vpack.c.b16 %v993, %v991
        %v1148 = vpack.c.b16 %v994, %v992
        %v1149 = vpack.c.b16 %v997, %v995
        %v1150 = vpack.c.b16 %v998, %v996
        %v1151 = vpack.c.b16 %v1001, %v999
        %v1152 = vpack.c.b16 %v1002, %v1000
        %v1153 = vpack.c.b16 %v1005, %v1003
        %v1154 = vpack.c.b16 %v1006, %v1004
        %v1155 = vpack.c.b16 %v1009, %v1007
        %v1156 = vpack.c.b16 %v1010, %v1008
        %v1157 = vpack.c.b16 %v1013, %v1011
        %v1158 = vpack.c.b16 %v1014, %v1012
        %v1159 = vpack.c.b16 %v1017, %v1015
        %v1160 = vpack.c.b16 %v1018, %v1016
        %v1161 = vpack.c.b16 %v1021, %v1019
        %v1162 = vpack.c.b16 %v1022, %v1020
        %v1163 = vpack.c.b16 %v1025, %v1023
        %v1164 = vpack.c.b16 %v1026, %v1024
        %v1165 = vpack.c.b16 %v1029, %v1027
        %v1166 = vpack.c.b16 %v1030, %v1028
        %v1167 = vpack.c.b16 %v1033, %v1031
        %v1168 = vpack.c.b16 %v1034, %v1032
        %v1169 = vpack.c.b16 %v1037, %v1035
        %v1170 = vpack.c.b16 %v1038, %v1036
        %v1171 = vpack.c.b16 %v1041, %v1039
        %v1172 = vpack.c.b16 %v1042, %v1040
        %v1173 = vpack.c.b16 %v1045, %v1043
        %v1174 = vpack.c.b16 %v1046, %v1044
        %v1175 = vpack.c.b16 %v1049, %v1047
        %v1176 = vpack.c.b16 %v1050, %v1048
        %v1177 = vpack.c.b16 %v1053, %v1051
        %v1178 = vpack.c.b16 %v1054, %v1052
        %v1179 = vpack.c.b16 %v1057, %v1055
        %v1180 = vpack.c.b16 %v1058, %v1056
        %v1181 = vpack.c.b16 %v1061, %v1059
        %v1182 = vpack.c.b16 %v1062, %v1060
        %v1183 = vpack.c.b16 %v1065, %v1063
        %v1184 = vpack.c.b16 %v1066, %v1064
        %v1185 = vpack.c.b16 %v1069, %v1067
        %v1186 = vpack.c.b16 %v1070, %v1068
        %v1187 = vpack.c.b16 %v1073, %v1071
        %v1188 = vpack.c.b16 %v1074, %v1072
        %v1189 = vpack.c.b16 %v1077, %v1075
        %v1190 = vpack.c.b16 %v1078, %v1076
        %v1191 = vpack.c.b16 %v1081, %v1079
        %v1192 = vpack.c.b16 %v1082, %v1080
        %v1193 = vpack.c.b16 %v1085, %v1083
        %v1194 = vpack.c.b16 %v1086, %v1084
        %v1195 = vpack.c.b16 %v1089, %v1087
        %v1196 = vpack.c.b16 %v1090, %v1088
        %v1197 = vpack.c.b16 %v1093, %v1091
        %v1198 = vpack.c.b16 %v1094, %v1092
        %v1199 = vpack.c.b16 %v1097, %v1095
        %v1200 = vpack.c.b16 %v1098, %v1096
        %v1201 = vpack.c.b16 %v1101, %v1099
        %v1202 = vpack.c.b16 %v1102, %v1100
        %v1203 = vpack.c.b16 %v1105, %v1103
        %v1204 = vpack.c.b16 %v1106, %v1104
        %v1205 = vpack.c.b16 %v1109, %v1107
        %v1206 = vpack.c.b16 %v1110, %v1108
        %1303 = vmatprep.subr.bf16.mxu0 %v1126
        %1304 = vmatpush1.bf16.msra.mxu0 %v1125
        %1305 = vmatprep.subr.bf16.mxu0 %v1124
        %1306 = vmatpush1.bf16.msra.mxu0 %v1123
        %1307 = vmatprep.subr.bf16.mxu0 %v1122
        %1308 = vmatpush1.bf16.msra.mxu0 %v1121
        %1309 = vmatprep.subr.bf16.mxu0 %v1120
        %1310 = vmatpush1.bf16.msra.mxu0 %v1119
        %1311 = vmatprep.subr.bf16.mxu0 %v1118
        %1312 = vmatpush1.bf16.msra.mxu0 %v1117
        %1313 = vmatprep.subr.bf16.mxu0 %v1116
        %1314 = vmatpush1.bf16.msra.mxu0 %v1115
        %1315 = vmatprep.subr.bf16.mxu0 %v1114
        %1316 = vmatpush1.bf16.msra.mxu0 %v1113
        %1317 = vmatprep.subr.bf16.mxu0 %v1112
        %1318 = vmatpush1.bf16.msra.mxu0 %v1111
        %1319 = vmatprep.subr.bf16.mxu0 %v1142
        %1320 = vmatpush2.bf16.msra.mxu0 %v1141
        %1321 = vmatprep.subr.bf16.mxu0 %v1140
        %1322 = vmatpush2.bf16.msra.mxu0 %v1139
        %1323 = vmatprep.subr.bf16.mxu0 %v1138
        %1324 = vmatpush2.bf16.msra.mxu0 %v1137
        %1325 = vmatprep.subr.bf16.mxu0 %v1136
        %1326 = vmatpush2.bf16.msra.mxu0 %v1135
        %1327 = vmatprep.subr.bf16.mxu0 %v1134
        %1328 = vmatpush2.bf16.msra.mxu0 %v1133
        %1329 = vmatprep.subr.bf16.mxu0 %v1132
        %1330 = vmatpush2.bf16.msra.mxu0 %v1131
        %1331 = vmatprep.subr.bf16.mxu0 %v1130
        %1332 = vmatpush2.bf16.msra.mxu0 %v1129
        %1333 = vmatprep.subr.bf16.mxu0 %v1128
        %1334 = vmatpush2.bf16.msra.mxu0 %v1127
        %1335 = vmatprep.mubr.bf16.mxu0 %v710
        %1336 = vmatmul.mubr.bf16.gmra.mxu0 %v709
        %v1337 = vpop.f32.mrf.mxu0
        %v1338 = vadd.f32 %v816, %v1337
        %v1339 = vpop.f32.mrf.mxu0
        %v1340 = vadd.f32 %v820, %v1339
        %v1341 = vpop.f32.mrf.mxu0
        %v1342 = vpop.f32.mrf.mxu0
        %1343 = vdwg.mxu0
        %1344 = vmatprep.subr.bf16.mxu0 %v1158
        %1345 = vmatpush1.bf16.msra.mxu0 %v1157
        %1346 = vmatprep.subr.bf16.mxu0 %v1156
        %1347 = vmatpush1.bf16.msra.mxu0 %v1155
        %1348 = vmatprep.subr.bf16.mxu0 %v1154
        %1349 = vmatpush1.bf16.msra.mxu0 %v1153
        %1350 = vmatprep.subr.bf16.mxu0 %v1152
        %1351 = vmatpush1.bf16.msra.mxu0 %v1151
        %1352 = vmatprep.subr.bf16.mxu0 %v1150
        %1353 = vmatpush1.bf16.msra.mxu0 %v1149
        %1354 = vmatprep.subr.bf16.mxu0 %v1148
        %1355 = vmatpush1.bf16.msra.mxu0 %v1147
        %1356 = vmatprep.subr.bf16.mxu0 %v1146
        %1357 = vmatpush1.bf16.msra.mxu0 %v1145
        %1358 = vmatprep.subr.bf16.mxu0 %v1144
        %1359 = vmatpush1.bf16.msra.mxu0 %v1143
        %1360 = vmatprep.subr.bf16.mxu0 %v1174
        %1361 = vmatpush2.bf16.msra.mxu0 %v1173
        %1362 = vmatprep.subr.bf16.mxu0 %v1172
        %1363 = vmatpush2.bf16.msra.mxu0 %v1171
        %1364 = vmatprep.subr.bf16.mxu0 %v1170
        %1365 = vmatpush2.bf16.msra.mxu0 %v1169
        %1366 = vmatprep.subr.bf16.mxu0 %v1168
        %1367 = vmatpush2.bf16.msra.mxu0 %v1167
        %1368 = vmatprep.subr.bf16.mxu0 %v1166
        %1369 = vmatpush2.bf16.msra.mxu0 %v1165
        %1370 = vmatprep.subr.bf16.mxu0 %v1164
        %1371 = vmatpush2.bf16.msra.mxu0 %v1163
        %1372 = vmatprep.subr.bf16.mxu0 %v1162
        %1373 = vmatpush2.bf16.msra.mxu0 %v1161
        %1374 = vmatprep.subr.bf16.mxu0 %v1160
        %1375 = vmatpush2.bf16.msra.mxu0 %v1159
        %1376 = vmatprep.mubr.bf16.mxu0 %v712
        %1377 = vmatmul.mubr.bf16.gmra.mxu0 %v711
        %v1378 = vpop.f32.mrf.mxu0
        %v1379 = vadd.f32 %v1338, %v1378
        %v1380 = vpop.f32.mrf.mxu0
        %v1381 = vadd.f32 %v1340, %v1380
        %v1382 = vpop.f32.mrf.mxu0
        %v1383 = vpop.f32.mrf.mxu0
        %1384 = vdwg.mxu0
        %1385 = vmatprep.subr.bf16.mxu0 %v1190
        %1386 = vmatpush1.bf16.msra.mxu0 %v1189
        %1387 = vmatprep.subr.bf16.mxu0 %v1188
        %1388 = vmatpush1.bf16.msra.mxu0 %v1187
        %1389 = vmatprep.subr.bf16.mxu0 %v1186
        %1390 = vmatpush1.bf16.msra.mxu0 %v1185
        %1391 = vmatprep.subr.bf16.mxu0 %v1184
        %1392 = vmatpush1.bf16.msra.mxu0 %v1183
        %1393 = vmatprep.subr.bf16.mxu0 %v1182
        %1394 = vmatpush1.bf16.msra.mxu0 %v1181
        %1395 = vmatprep.subr.bf16.mxu0 %v1180
        %1396 = vmatpush1.bf16.msra.mxu0 %v1179
        %1397 = vmatprep.subr.bf16.mxu0 %v1178
        %1398 = vmatpush1.bf16.msra.mxu0 %v1177
        %1399 = vmatprep.subr.bf16.mxu0 %v1176
        %1400 = vmatpush1.bf16.msra.mxu0 %v1175
        %1401 = vmatprep.subr.bf16.mxu0 %v1206
        %1402 = vmatpush2.bf16.msra.mxu0 %v1205
        %1403 = vmatprep.subr.bf16.mxu0 %v1204
        %1404 = vmatpush2.bf16.msra.mxu0 %v1203
        %1405 = vmatprep.subr.bf16.mxu0 %v1202
        %1406 = vmatpush2.bf16.msra.mxu0 %v1201
        %1407 = vmatprep.subr.bf16.mxu0 %v1200
        %1408 = vmatpush2.bf16.msra.mxu0 %v1199
        %1409 = vmatprep.subr.bf16.mxu0 %v1198
        %1410 = vmatpush2.bf16.msra.mxu0 %v1197
        %1411 = vmatprep.subr.bf16.mxu0 %v1196
        %1412 = vmatpush2.bf16.msra.mxu0 %v1195
        %1413 = vmatprep.subr.bf16.mxu0 %v1194
        %1414 = vmatpush2.bf16.msra.mxu0 %v1193
        %1415 = vmatprep.subr.bf16.mxu0 %v1192
        %1416 = vmatpush2.bf16.msra.mxu0 %v1191
        %1417 = vmatprep.mubr.bf16.mxu0 %v714
        %1418 = vmatmul.mubr.bf16.gmra.mxu0 %v713
        %v1419 = vpop.f32.mrf.mxu0
        %v1420 = vadd.f32 %v1379, %v1419
        %v1421 = vpop.f32.mrf.mxu0
        %v1422 = vadd.f32 %v1381, %v1421
        %v1423 = vpop.f32.mrf.mxu0
        %v1424 = vpop.f32.mrf.mxu0
        %1425 = vdwg.mxu0
        %v1426 = vmax.f32 %v1420, 0.0
        %v1427 = vmax.f32 %v1422, 0.0
        %v1428 = vld [vmem:[%s544] sm:$0xff]
        %v1429 = vld [vmem:[%s544 + $0x8] sm:$0xff]
        %v1430 = vld [vmem:[%s544 + $0x10] sm:$0xff]
        %v1431 = vld [vmem:[%s544 + $0x18] sm:$0xff]
        %v1432 = vld [vmem:[%s544 + $0x20] sm:$0xff]
        %v1433 = vld [vmem:[%s544 + $0x28] sm:$0xff]
        %v1434 = vld [vmem:[%s544 + $0x30] sm:$0xff]
        %v1435 = vld [vmem:[%s544 + $0x38] sm:$0xff]
        %v1436 = vld [vmem:[%s544 + $0x40] sm:$0xff]
        %v1437 = vld [vmem:[%s544 + $0x48] sm:$0xff]
        %v1438 = vld [vmem:[%s544 + $0x50] sm:$0xff]
        %v1439 = vld [vmem:[%s544 + $0x58] sm:$0xff]
        %v1440 = vld [vmem:[%s544 + $0x60] sm:$0xff]
        %v1441 = vld [vmem:[%s544 + $0x68] sm:$0xff]
        %v1442 = vld [vmem:[%s544 + $0x70] sm:$0xff]
        %v1443 = vld [vmem:[%s544 + $0x78] sm:$0xff]
        %v1444 = vld [vmem:[%s544 + $0x80] sm:$0xff]
        %v1445 = vld [vmem:[%s544 + $0x88] sm:$0xff]
        %v1446 = vld [vmem:[%s544 + $0x90] sm:$0xff]
        %v1447 = vld [vmem:[%s544 + $0x98] sm:$0xff]
        %v1448 = vld [vmem:[%s544 + $0xa0] sm:$0xff]
        %v1449 = vld [vmem:[%s544 + $0xa8] sm:$0xff]
        %v1450 = vld [vmem:[%s544 + $0xb0] sm:$0xff]
        %v1451 = vld [vmem:[%s544 + $0xb8] sm:$0xff]
        %v1452 = vld [vmem:[%s544 + $0xc0] sm:$0xff]
        %v1453 = vld [vmem:[%s544 + $0xc8] sm:$0xff]
        %v1454 = vld [vmem:[%s544 + $0xd0] sm:$0xff]
        %v1455 = vld [vmem:[%s544 + $0xd8] sm:$0xff]
        %v1456 = vld [vmem:[%s544 + $0xe0] sm:$0xff]
        %v1457 = vld [vmem:[%s544 + $0xe8] sm:$0xff]
        %v1458 = vld [vmem:[%s544 + $0xf0] sm:$0xff]
        %v1459 = vld [vmem:[%s544 + $0xf8] sm:$0xff]
        %v1460 = vld [vmem:[%s544 + $0x100] sm:$0xff]
        %v1461 = vld [vmem:[%s544 + $0x108] sm:$0xff]
        %v1462 = vld [vmem:[%s544 + $0x110] sm:$0xff]
        %v1463 = vld [vmem:[%s544 + $0x118] sm:$0xff]
        %v1464 = vld [vmem:[%s544 + $0x120] sm:$0xff]
        %v1465 = vld [vmem:[%s544 + $0x128] sm:$0xff]
        %v1466 = vld [vmem:[%s544 + $0x130] sm:$0xff]
        %v1467 = vld [vmem:[%s544 + $0x138] sm:$0xff]
        %v1468 = vld [vmem:[%s544 + $0x140] sm:$0xff]
        %v1469 = vld [vmem:[%s544 + $0x148] sm:$0xff]
        %v1470 = vld [vmem:[%s544 + $0x150] sm:$0xff]
        %v1471 = vld [vmem:[%s544 + $0x158] sm:$0xff]
        %v1472 = vld [vmem:[%s544 + $0x160] sm:$0xff]
        %v1473 = vld [vmem:[%s544 + $0x168] sm:$0xff]
        %v1474 = vld [vmem:[%s544 + $0x170] sm:$0xff]
        %v1475 = vld [vmem:[%s544 + $0x178] sm:$0xff]
        %v1476 = vld [vmem:[%s544 + $0x180] sm:$0xff]
        %v1477 = vld [vmem:[%s544 + $0x188] sm:$0xff]
        %v1478 = vld [vmem:[%s544 + $0x190] sm:$0xff]
        %v1479 = vld [vmem:[%s544 + $0x198] sm:$0xff]
        %v1480 = vld [vmem:[%s544 + $0x1a0] sm:$0xff]
        %v1481 = vld [vmem:[%s544 + $0x1a8] sm:$0xff]
        %v1482 = vld [vmem:[%s544 + $0x1b0] sm:$0xff]
        %v1483 = vld [vmem:[%s544 + $0x1b8] sm:$0xff]
        %v1484 = vld [vmem:[%s544 + $0x1c0] sm:$0xff]
        %v1485 = vld [vmem:[%s544 + $0x1c8] sm:$0xff]
        %v1486 = vld [vmem:[%s544 + $0x1d0] sm:$0xff]
        %v1487 = vld [vmem:[%s544 + $0x1d8] sm:$0xff]
        %v1488 = vld [vmem:[%s544 + $0x1e0] sm:$0xff]
        %v1489 = vld [vmem:[%s544 + $0x1e8] sm:$0xff]
        %v1490 = vld [vmem:[%s544 + $0x1f0] sm:$0xff]
        %v1491 = vld [vmem:[%s544 + $0x1f8] sm:$0xff]
        %v1492 = vld [vmem:[%s544 + $0x200] sm:$0xff]
        %v1493 = vld [vmem:[%s544 + $0x208] sm:$0xff]
        %v1494 = vld [vmem:[%s544 + $0x210] sm:$0xff]
        %v1495 = vld [vmem:[%s544 + $0x218] sm:$0xff]
        %v1496 = vld [vmem:[%s544 + $0x220] sm:$0xff]
        %v1497 = vld [vmem:[%s544 + $0x228] sm:$0xff]
        %v1498 = vld [vmem:[%s544 + $0x230] sm:$0xff]
        %v1499 = vld [vmem:[%s544 + $0x238] sm:$0xff]
        %v1500 = vld [vmem:[%s544 + $0x240] sm:$0xff]
        %v1501 = vld [vmem:[%s544 + $0x248] sm:$0xff]
        %v1502 = vld [vmem:[%s544 + $0x250] sm:$0xff]
        %v1503 = vld [vmem:[%s544 + $0x258] sm:$0xff]
        %v1504 = vld [vmem:[%s544 + $0x260] sm:$0xff]
        %v1505 = vld [vmem:[%s544 + $0x268] sm:$0xff]
        %v1506 = vld [vmem:[%s544 + $0x270] sm:$0xff]
        %v1507 = vld [vmem:[%s544 + $0x278] sm:$0xff]
        %v1508 = vld [vmem:[%s544 + $0x280] sm:$0xff]
        %v1509 = vld [vmem:[%s544 + $0x288] sm:$0xff]
        %v1510 = vld [vmem:[%s544 + $0x290] sm:$0xff]
        %v1511 = vld [vmem:[%s544 + $0x298] sm:$0xff]
        %v1512 = vld [vmem:[%s544 + $0x2a0] sm:$0xff]
        %v1513 = vld [vmem:[%s544 + $0x2a8] sm:$0xff]
        %v1514 = vld [vmem:[%s544 + $0x2b0] sm:$0xff]
        %v1515 = vld [vmem:[%s544 + $0x2b8] sm:$0xff]
        %v1516 = vld [vmem:[%s544 + $0x2c0] sm:$0xff]
        %v1517 = vld [vmem:[%s544 + $0x2c8] sm:$0xff]
        %v1518 = vld [vmem:[%s544 + $0x2d0] sm:$0xff]
        %v1519 = vld [vmem:[%s544 + $0x2d8] sm:$0xff]
        %v1520 = vld [vmem:[%s544 + $0x2e0] sm:$0xff]
        %v1521 = vld [vmem:[%s544 + $0x2e8] sm:$0xff]
        %v1522 = vld [vmem:[%s544 + $0x2f0] sm:$0xff]
        %v1523 = vld [vmem:[%s544 + $0x2f8] sm:$0xff]
        %v1524 = vld [vmem:[%s544 + $0x300] sm:$0xff]
        %v1525 = vld [vmem:[%s544 + $0x308] sm:$0xff]
        %v1526 = vld [vmem:[%s544 + $0x310] sm:$0xff]
        %v1527 = vld [vmem:[%s544 + $0x318] sm:$0xff]
        %v1528 = vld [vmem:[%s544 + $0x320] sm:$0xff]
        %v1529 = vld [vmem:[%s544 + $0x328] sm:$0xff]
        %v1530 = vld [vmem:[%s544 + $0x330] sm:$0xff]
        %v1531 = vld [vmem:[%s544 + $0x338] sm:$0xff]
        %v1532 = vld [vmem:[%s544 + $0x340] sm:$0xff]
        %v1533 = vld [vmem:[%s544 + $0x348] sm:$0xff]
        %v1534 = vld [vmem:[%s544 + $0x350] sm:$0xff]
        %v1535 = vld [vmem:[%s544 + $0x358] sm:$0xff]
        %v1536 = vld [vmem:[%s544 + $0x360] sm:$0xff]
        %v1537 = vld [vmem:[%s544 + $0x368] sm:$0xff]
        %v1538 = vld [vmem:[%s544 + $0x370] sm:$0xff]
        %v1539 = vld [vmem:[%s544 + $0x378] sm:$0xff]
        %v1540 = vld [vmem:[%s544 + $0x380] sm:$0xff]
        %v1541 = vld [vmem:[%s544 + $0x388] sm:$0xff]
        %v1542 = vld [vmem:[%s544 + $0x390] sm:$0xff]
        %v1543 = vld [vmem:[%s544 + $0x398] sm:$0xff]
        %v1544 = vld [vmem:[%s544 + $0x3a0] sm:$0xff]
        %v1545 = vld [vmem:[%s544 + $0x3a8] sm:$0xff]
        %v1546 = vld [vmem:[%s544 + $0x3b0] sm:$0xff]
        %v1547 = vld [vmem:[%s544 + $0x3b8] sm:$0xff]
        %v1548 = vld [vmem:[%s544 + $0x3c0] sm:$0xff]
        %v1549 = vld [vmem:[%s544 + $0x3c8] sm:$0xff]
        %v1550 = vld [vmem:[%s544 + $0x3d0] sm:$0xff]
        %v1551 = vld [vmem:[%s544 + $0x3d8] sm:$0xff]
        %v1552 = vld [vmem:[%s544 + $0x3e0] sm:$0xff]
        %v1553 = vld [vmem:[%s544 + $0x3e8] sm:$0xff]
        %v1554 = vld [vmem:[%s544 + $0x3f0] sm:$0xff]
        %v1555 = vld [vmem:[%s544 + $0x3f8] sm:$0xff]
        %v1556 = vld [vmem:[%s669] sm:$0xf]
        %v1558 = vlaneseq
        %v1559 = vshrl.u32 %v1558, 7
        %v1560 = vsub.s32 0, %v1559
        %v1561 = vrot.slane %v1556, %v1560
        %v1562 = vlaneseq
        %v1563 = vshrl.u32 %v1562, 7
        %v1564 = vsub.s32 1, %v1563
        %v1565 = vrot.slane %v1556, %v1564
        %v1566 = vlaneseq
        %v1567 = vshrl.u32 %v1566, 7
        %v1568 = vsub.s32 2, %v1567
        %v1569 = vrot.slane %v1556, %v1568
        %v1570 = vlaneseq
        %v1571 = vshrl.u32 %v1570, 7
        %v1572 = vsub.s32 3, %v1571
        %v1573 = vrot.slane %v1556, %v1572
        %1578 = vmatprep.subr.mxu0 %v1489
        %1579 = vmatpush1.msra.mxu0 %v1488
        %1580 = vmatprep.subr.mxu0 %v1485
        %1581 = vmatpush1.msra.mxu0 %v1484
        %1582 = vmatprep.subr.mxu0 %v1481
        %1583 = vmatpush1.msra.mxu0 %v1480
        %1584 = vmatprep.subr.mxu0 %v1477
        %1585 = vmatpush1.msra.mxu0 %v1476
        %1586 = vmatprep.subr.mxu0 %v1473
        %1587 = vmatpush1.msra.mxu0 %v1472
        %1588 = vmatprep.subr.mxu0 %v1469
        %1589 = vmatpush1.msra.mxu0 %v1468
        %1590 = vmatprep.subr.mxu0 %v1465
        %1591 = vmatpush1.msra.mxu0 %v1464
        %1592 = vmatprep.subr.mxu0 %v1461
        %1593 = vmatpush1.msra.mxu0 %v1460
        %1594 = vmatprep.subr.mxu0 %v1457
        %1595 = vmatpush1.msra.mxu0 %v1456
        %1596 = vmatprep.subr.mxu0 %v1453
        %1597 = vmatpush1.msra.mxu0 %v1452
        %1598 = vmatprep.subr.mxu0 %v1449
        %1599 = vmatpush1.msra.mxu0 %v1448
        %1600 = vmatprep.subr.mxu0 %v1445
        %1601 = vmatpush1.msra.mxu0 %v1444
        %1602 = vmatprep.subr.mxu0 %v1441
        %1603 = vmatpush1.msra.mxu0 %v1440
        %1604 = vmatprep.subr.mxu0 %v1437
        %1605 = vmatpush1.msra.mxu0 %v1436
        %1606 = vmatprep.subr.mxu0 %v1433
        %1607 = vmatpush1.msra.mxu0 %v1432
        %1608 = vmatprep.subr.mxu0 %v1429
        %1609 = vmatpush1.msra.mxu0 %v1428
        %1610 = vmatprep.subr.mxu0 %v1553
        %1611 = vmatpush2.msra.mxu0 %v1552
        %1612 = vmatprep.subr.mxu0 %v1549
        %1613 = vmatpush2.msra.mxu0 %v1548
        %1614 = vmatprep.subr.mxu0 %v1545
        %1615 = vmatpush2.msra.mxu0 %v1544
        %1616 = vmatprep.subr.mxu0 %v1541
        %1617 = vmatpush2.msra.mxu0 %v1540
        %1618 = vmatprep.subr.mxu0 %v1537
        %1619 = vmatpush2.msra.mxu0 %v1536
        %1620 = vmatprep.subr.mxu0 %v1533
        %1621 = vmatpush2.msra.mxu0 %v1532
        %1622 = vmatprep.subr.mxu0 %v1529
        %1623 = vmatpush2.msra.mxu0 %v1528
        %1624 = vmatprep.subr.mxu0 %v1525
        %1625 = vmatpush2.msra.mxu0 %v1524
        %1626 = vmatprep.subr.mxu0 %v1521
        %1627 = vmatpush2.msra.mxu0 %v1520
        %1628 = vmatprep.subr.mxu0 %v1517
        %1629 = vmatpush2.msra.mxu0 %v1516
        %1630 = vmatprep.subr.mxu0 %v1513
        %1631 = vmatpush2.msra.mxu0 %v1512
        %1632 = vmatprep.subr.mxu0 %v1509
        %1633 = vmatpush2.msra.mxu0 %v1508
        %1634 = vmatprep.subr.mxu0 %v1505
        %1635 = vmatpush2.msra.mxu0 %v1504
        %1636 = vmatprep.subr.mxu0 %v1501
        %1637 = vmatpush2.msra.mxu0 %v1500
        %1638 = vmatprep.subr.mxu0 %v1497
        %1639 = vmatpush2.msra.mxu0 %v1496
        %1640 = vmatprep.subr.mxu0 %v1493
        %1641 = vmatpush2.msra.mxu0 %v1492
        %1642 = vmatprep.mubr.f32.mxu0 %v1427
        %1643 = vmatmul.mubr.f32.gmra.mxu0 %v1426
        %v1644 = vpop.f32.mrf.mxu0
        %v1645 = vadd.f32 %v1561, %v1644
        %v1646 = vpop.f32.mrf.mxu0
        %v1647 = vadd.f32 %v1565, %v1646
        %1648 = vdwg.mxu0
        %1649 = vmatprep.subr.mxu0 %v1491
        %1650 = vmatpush1.msra.mxu0 %v1490
        %1651 = vmatprep.subr.mxu0 %v1487
        %1652 = vmatpush1.msra.mxu0 %v1486
        %1653 = vmatprep.subr.mxu0 %v1483
        %1654 = vmatpush1.msra.mxu0 %v1482
        %1655 = vmatprep.subr.mxu0 %v1479
        %1656 = vmatpush1.msra.mxu0 %v1478
        %1657 = vmatprep.subr.mxu0 %v1475
        %1658 = vmatpush1.msra.mxu0 %v1474
        %1659 = vmatprep.subr.mxu0 %v1471
        %1660 = vmatpush1.msra.mxu0 %v1470
        %1661 = vmatprep.subr.mxu0 %v1467
        %1662 = vmatpush1.msra.mxu0 %v1466
        %1663 = vmatprep.subr.mxu0 %v1463
        %1664 = vmatpush1.msra.mxu0 %v1462
        %1665 = vmatprep.subr.mxu0 %v1459
        %1666 = vmatpush1.msra.mxu0 %v1458
        %1667 = vmatprep.subr.mxu0 %v1455
        %1668 = vmatpush1.msra.mxu0 %v1454
        %1669 = vmatprep.subr.mxu0 %v1451
        %1670 = vmatpush1.msra.mxu0 %v1450
        %1671 = vmatprep.subr.mxu0 %v1447
        %1672 = vmatpush1.msra.mxu0 %v1446
        %1673 = vmatprep.subr.mxu0 %v1443
        %1674 = vmatpush1.msra.mxu0 %v1442
        %1675 = vmatprep.subr.mxu0 %v1439
        %1676 = vmatpush1.msra.mxu0 %v1438
        %1677 = vmatprep.subr.mxu0 %v1435
        %1678 = vmatpush1.msra.mxu0 %v1434
        %1679 = vmatprep.subr.mxu0 %v1431
        %1680 = vmatpush1.msra.mxu0 %v1430
        %1681 = vmatprep.subr.mxu0 %v1555
        %1682 = vmatpush2.msra.mxu0 %v1554
        %1683 = vmatprep.subr.mxu0 %v1551
        %1684 = vmatpush2.msra.mxu0 %v1550
        %1685 = vmatprep.subr.mxu0 %v1547
        %1686 = vmatpush2.msra.mxu0 %v1546
        %1687 = vmatprep.subr.mxu0 %v1543
        %1688 = vmatpush2.msra.mxu0 %v1542
        %1689 = vmatprep.subr.mxu0 %v1539
        %1690 = vmatpush2.msra.mxu0 %v1538
        %1691 = vmatprep.subr.mxu0 %v1535
        %1692 = vmatpush2.msra.mxu0 %v1534
        %1693 = vmatprep.subr.mxu0 %v1531
        %1694 = vmatpush2.msra.mxu0 %v1530
        %1695 = vmatprep.subr.mxu0 %v1527
        %1696 = vmatpush2.msra.mxu0 %v1526
        %1697 = vmatprep.subr.mxu0 %v1523
        %1698 = vmatpush2.msra.mxu0 %v1522
        %1699 = vmatprep.subr.mxu0 %v1519
        %1700 = vmatpush2.msra.mxu0 %v1518
        %1701 = vmatprep.subr.mxu0 %v1515
        %1702 = vmatpush2.msra.mxu0 %v1514
        %1703 = vmatprep.subr.mxu0 %v1511
        %1704 = vmatpush2.msra.mxu0 %v1510
        %1705 = vmatprep.subr.mxu0 %v1507
        %1706 = vmatpush2.msra.mxu0 %v1506
        %1707 = vmatprep.subr.mxu0 %v1503
        %1708 = vmatpush2.msra.mxu0 %v1502
        %1709 = vmatprep.subr.mxu0 %v1499
        %1710 = vmatpush2.msra.mxu0 %v1498
        %1711 = vmatprep.subr.mxu0 %v1495
        %1712 = vmatpush2.msra.mxu0 %v1494
        %1713 = vmatprep.mubr.f32.mxu0 %v1427
        %1714 = vmatmul.mubr.f32.gmra.mxu0 %v1426
        %v1715 = vpop.f32.mrf.mxu0
        %v1716 = vadd.f32 %v1569, %v1715
        %v1717 = vpop.f32.mrf.mxu0
        %v1718 = vadd.f32 %v1573, %v1717
        %1719 = vdwg.mxu0
        %v1720 = vmul.f32 %v1716, 0.5
        %v1721 = vmul.f32 %v1718, 0.5
        %v1722 = vmul.f32 %v1720, 1.442695
        %v1723 = vpow.pop %v1722
        %v1724 = vmul.f32 %v1721, 1.442695
        %v1725 = vpow.pop %v1724
        %v1726 = vld [vmem:[%s661] sm:$0xff]
        %v1727 = vld [vmem:[%s661 + $0x8] sm:$0xff]
        %v1728 = vld [vmem:[%s661 + $0x10] sm:$0xff]
        %v1729 = vld [vmem:[%s661 + $0x18] sm:$0xff]
        %v1730 = vmul.f32 %v1726, %v1723
        %v1731 = vmul.f32 %v1727, %v1725
        %v1732 = vadd.f32 %v1645, %v1730
        %v1733 = vadd.f32 %v1647, %v1731
        %v1734 = vmul.f32 %v1728, %v1723
        %v1735 = vmul.f32 %v1729, %v1725
        %v1736 = vadd.f32 %v1645, %v1734
        %v1737 = vadd.f32 %v1647, %v1735
        %v1738 = vpack.c.bf16 %v1736, %v1736
        %v1739 = vpack.c.bf16 %v1737, %v1737
        %v1740 = vld [vmem:[%s674] sm:$0xff]
        %v1741 = vld [vmem:[%s674 + $0x8] sm:$0xff]
        %v1742 = vld [vmem:[%s674 + $0x10] sm:$0xff]
        %v1743 = vld [vmem:[%s674 + $0x18] sm:$0xff]
        %v1744 = vld [vmem:[%s674 + $0x20] sm:$0xff]
        %v1745 = vld [vmem:[%s674 + $0x28] sm:$0xff]
        %v1746 = vld [vmem:[%s674 + $0x30] sm:$0xff]
        %v1747 = vld [vmem:[%s674 + $0x38] sm:$0xff]
        %v1748 = vld [vmem:[%s674 + $0x40] sm:$0xff]
        %v1749 = vld [vmem:[%s674 + $0x48] sm:$0xff]
        %v1750 = vld [vmem:[%s674 + $0x50] sm:$0xff]
        %v1751 = vld [vmem:[%s674 + $0x58] sm:$0xff]
        %v1752 = vld [vmem:[%s674 + $0x60] sm:$0xff]
        %v1753 = vld [vmem:[%s674 + $0x68] sm:$0xff]
        %v1754 = vld [vmem:[%s674 + $0x70] sm:$0xff]
        %v1755 = vld [vmem:[%s674 + $0x78] sm:$0xff]
        %v1756 = vld [vmem:[%s674 + $0x80] sm:$0xff]
        %v1757 = vld [vmem:[%s674 + $0x88] sm:$0xff]
        %v1758 = vld [vmem:[%s674 + $0x90] sm:$0xff]
        %v1759 = vld [vmem:[%s674 + $0x98] sm:$0xff]
        %v1760 = vld [vmem:[%s674 + $0xa0] sm:$0xff]
        %v1761 = vld [vmem:[%s674 + $0xa8] sm:$0xff]
        %v1762 = vld [vmem:[%s674 + $0xb0] sm:$0xff]
        %v1763 = vld [vmem:[%s674 + $0xb8] sm:$0xff]
        %v1764 = vld [vmem:[%s674 + $0xc0] sm:$0xff]
        %v1765 = vld [vmem:[%s674 + $0xc8] sm:$0xff]
        %v1766 = vld [vmem:[%s674 + $0xd0] sm:$0xff]
        %v1767 = vld [vmem:[%s674 + $0xd8] sm:$0xff]
        %v1768 = vld [vmem:[%s674 + $0xe0] sm:$0xff]
        %v1769 = vld [vmem:[%s674 + $0xe8] sm:$0xff]
        %v1770 = vld [vmem:[%s674 + $0xf0] sm:$0xff]
        %v1771 = vld [vmem:[%s674 + $0xf8] sm:$0xff]
        %v1772 = vld [vmem:[%s678] sm:$0x3]
        %v1774 = vlaneseq
        %v1775 = vshrl.u32 %v1774, 7
        %v1776 = vsub.s32 0, %v1775
        %v1777 = vrot.slane %v1772, %v1776
        %v1778 = vlaneseq
        %v1779 = vshrl.u32 %v1778, 7
        %v1780 = vsub.s32 1, %v1779
        %v1781 = vrot.slane %v1772, %v1780
        %v1816 = vunpack.c.l.b16 %v1740
        %v1817 = vunpack.c.h.b16 %v1740
        %v1818 = vunpack.c.l.b16 %v1741
        %v1819 = vunpack.c.h.b16 %v1741
        %v1820 = vunpack.c.l.b16 %v1742
        %v1821 = vunpack.c.h.b16 %v1742
        %v1822 = vunpack.c.l.b16 %v1743
        %v1823 = vunpack.c.h.b16 %v1743
        %v1824 = vunpack.c.l.b16 %v1744
        %v1825 = vunpack.c.h.b16 %v1744
        %v1826 = vunpack.c.l.b16 %v1745
        %v1827 = vunpack.c.h.b16 %v1745
        %v1828 = vunpack.c.l.b16 %v1746
        %v1829 = vunpack.c.h.b16 %v1746
        %v1830 = vunpack.c.l.b16 %v1747
        %v1831 = vunpack.c.h.b16 %v1747
        %v1832 = vunpack.c.l.b16 %v1748
        %v1833 = vunpack.c.h.b16 %v1748
        %v1834 = vunpack.c.l.b16 %v1749
        %v1835 = vunpack.c.h.b16 %v1749
        %v1836 = vunpack.c.l.b16 %v1750
        %v1837 = vunpack.c.h.b16 %v1750
        %v1838 = vunpack.c.l.b16 %v1751
        %v1839 = vunpack.c.h.b16 %v1751
        %v1840 = vunpack.c.l.b16 %v1752
        %v1841 = vunpack.c.h.b16 %v1752
        %v1842 = vunpack.c.l.b16 %v1753
        %v1843 = vunpack.c.h.b16 %v1753
        %v1844 = vunpack.c.l.b16 %v1754
        %v1845 = vunpack.c.h.b16 %v1754
        %v1846 = vunpack.c.l.b16 %v1755
        %v1847 = vunpack.c.h.b16 %v1755
        %v1848 = vunpack.c.l.b16 %v1756
        %v1849 = vunpack.c.h.b16 %v1756
        %v1850 = vunpack.c.l.b16 %v1757
        %v1851 = vunpack.c.h.b16 %v1757
        %v1852 = vunpack.c.l.b16 %v1758
        %v1853 = vunpack.c.h.b16 %v1758
        %v1854 = vunpack.c.l.b16 %v1759
        %v1855 = vunpack.c.h.b16 %v1759
        %v1856 = vunpack.c.l.b16 %v1760
        %v1857 = vunpack.c.h.b16 %v1760
        %v1858 = vunpack.c.l.b16 %v1761
        %v1859 = vunpack.c.h.b16 %v1761
        %v1860 = vunpack.c.l.b16 %v1762
        %v1861 = vunpack.c.h.b16 %v1762
        %v1862 = vunpack.c.l.b16 %v1763
        %v1863 = vunpack.c.h.b16 %v1763
        %v1864 = vunpack.c.l.b16 %v1764
        %v1865 = vunpack.c.h.b16 %v1764
        %v1866 = vunpack.c.l.b16 %v1765
        %v1867 = vunpack.c.h.b16 %v1765
        %v1868 = vunpack.c.l.b16 %v1766
        %v1869 = vunpack.c.h.b16 %v1766
        %v1870 = vunpack.c.l.b16 %v1767
        %v1871 = vunpack.c.h.b16 %v1767
        %v1872 = vunpack.c.l.b16 %v1768
        %v1873 = vunpack.c.h.b16 %v1768
        %v1874 = vunpack.c.l.b16 %v1769
        %v1875 = vunpack.c.h.b16 %v1769
        %v1876 = vunpack.c.l.b16 %v1770
        %v1877 = vunpack.c.h.b16 %v1770
        %v1878 = vunpack.c.l.b16 %v1771
        %v1879 = vunpack.c.h.b16 %v1771
        %v1880 = vpack.c.b16 %v1818, %v1816
        %v1881 = vpack.c.b16 %v1819, %v1817
        %v1882 = vpack.c.b16 %v1822, %v1820
        %v1883 = vpack.c.b16 %v1823, %v1821
        %v1884 = vpack.c.b16 %v1826, %v1824
        %v1885 = vpack.c.b16 %v1827, %v1825
        %v1886 = vpack.c.b16 %v1830, %v1828
        %v1887 = vpack.c.b16 %v1831, %v1829
        %v1888 = vpack.c.b16 %v1834, %v1832
        %v1889 = vpack.c.b16 %v1835, %v1833
        %v1890 = vpack.c.b16 %v1838, %v1836
        %v1891 = vpack.c.b16 %v1839, %v1837
        %v1892 = vpack.c.b16 %v1842, %v1840
        %v1893 = vpack.c.b16 %v1843, %v1841
        %v1894 = vpack.c.b16 %v1846, %v1844
        %v1895 = vpack.c.b16 %v1847, %v1845
        %v1896 = vpack.c.b16 %v1850, %v1848
        %v1897 = vpack.c.b16 %v1851, %v1849
        %v1898 = vpack.c.b16 %v1854, %v1852
        %v1899 = vpack.c.b16 %v1855, %v1853
        %v1900 = vpack.c.b16 %v1858, %v1856
        %v1901 = vpack.c.b16 %v1859, %v1857
        %v1902 = vpack.c.b16 %v1862, %v1860
        %v1903 = vpack.c.b16 %v1863, %v1861
        %v1904 = vpack.c.b16 %v1866, %v1864
        %v1905 = vpack.c.b16 %v1867, %v1865
        %v1906 = vpack.c.b16 %v1870, %v1868
        %v1907 = vpack.c.b16 %v1871, %v1869
        %v1908 = vpack.c.b16 %v1874, %v1872
        %v1909 = vpack.c.b16 %v1875, %v1873
        %v1910 = vpack.c.b16 %v1878, %v1876
        %v1911 = vpack.c.b16 %v1879, %v1877
        %1944 = vmatprep.subr.bf16.mxu0 %v1895
        %1945 = vmatpush1.bf16.msra.mxu0 %v1894
        %1946 = vmatprep.subr.bf16.mxu0 %v1893
        %1947 = vmatpush1.bf16.msra.mxu0 %v1892
        %1948 = vmatprep.subr.bf16.mxu0 %v1891
        %1949 = vmatpush1.bf16.msra.mxu0 %v1890
        %1950 = vmatprep.subr.bf16.mxu0 %v1889
        %1951 = vmatpush1.bf16.msra.mxu0 %v1888
        %1952 = vmatprep.subr.bf16.mxu0 %v1887
        %1953 = vmatpush1.bf16.msra.mxu0 %v1886
        %1954 = vmatprep.subr.bf16.mxu0 %v1885
        %1955 = vmatpush1.bf16.msra.mxu0 %v1884
        %1956 = vmatprep.subr.bf16.mxu0 %v1883
        %1957 = vmatpush1.bf16.msra.mxu0 %v1882
        %1958 = vmatprep.subr.bf16.mxu0 %v1881
        %1959 = vmatpush1.bf16.msra.mxu0 %v1880
        %1960 = vmatprep.subr.bf16.mxu0 %v1911
        %1961 = vmatpush2.bf16.msra.mxu0 %v1910
        %1962 = vmatprep.subr.bf16.mxu0 %v1909
        %1963 = vmatpush2.bf16.msra.mxu0 %v1908
        %1964 = vmatprep.subr.bf16.mxu0 %v1907
        %1965 = vmatpush2.bf16.msra.mxu0 %v1906
        %1966 = vmatprep.subr.bf16.mxu0 %v1905
        %1967 = vmatpush2.bf16.msra.mxu0 %v1904
        %1968 = vmatprep.subr.bf16.mxu0 %v1903
        %1969 = vmatpush2.bf16.msra.mxu0 %v1902
        %1970 = vmatprep.subr.bf16.mxu0 %v1901
        %1971 = vmatpush2.bf16.msra.mxu0 %v1900
        %1972 = vmatprep.subr.bf16.mxu0 %v1899
        %1973 = vmatpush2.bf16.msra.mxu0 %v1898
        %1974 = vmatprep.subr.bf16.mxu0 %v1897
        %1975 = vmatpush2.bf16.msra.mxu0 %v1896
        %1976 = vmatprep.mubr.bf16.mxu0 %v1739
        %1977 = vmatmul.mubr.bf16.gmra.mxu0 %v1738
        %v1978 = vpop.f32.mrf.mxu0
        %v1979 = vadd.f32 %v1777, %v1978
        %v1980 = vpop.f32.mrf.mxu0
        %v1981 = vadd.f32 %v1781, %v1980
        %v1982 = vpop.f32.mrf.mxu0
        %v1983 = vpop.f32.mrf.mxu0
        %1984 = vdwg.mxu0
        %v1985 = vmax.f32 %v1979, 0.0
        %v1986 = vmax.f32 %v1981, 0.0
        %v1987 = vpack.c.bf16 %v1985, %v1985
        %v1988 = vpack.c.bf16 %v1986, %v1986
        %v1989 = vld [vmem:[%s553] sm:$0xff]
        %v1990 = vld [vmem:[%s553 + $0x8] sm:$0xff]
        %v1991 = vld [vmem:[%s553 + $0x10] sm:$0xff]
        %v1992 = vld [vmem:[%s553 + $0x18] sm:$0xff]
        %v1993 = vld [vmem:[%s553 + $0x20] sm:$0xff]
        %v1994 = vld [vmem:[%s553 + $0x28] sm:$0xff]
        %v1995 = vld [vmem:[%s553 + $0x30] sm:$0xff]
        %v1996 = vld [vmem:[%s553 + $0x38] sm:$0xff]
        %v1997 = vld [vmem:[%s553 + $0x40] sm:$0xff]
        %v1998 = vld [vmem:[%s553 + $0x48] sm:$0xff]
        %v1999 = vld [vmem:[%s553 + $0x50] sm:$0xff]
        %v2000 = vld [vmem:[%s553 + $0x58] sm:$0xff]
        %v2001 = vld [vmem:[%s553 + $0x60] sm:$0xff]
        %v2002 = vld [vmem:[%s553 + $0x68] sm:$0xff]
        %v2003 = vld [vmem:[%s553 + $0x70] sm:$0xff]
        %v2004 = vld [vmem:[%s553 + $0x78] sm:$0xff]
        %v2005 = vld [vmem:[%s553 + $0x80] sm:$0xff]
        %v2006 = vld [vmem:[%s553 + $0x88] sm:$0xff]
        %v2007 = vld [vmem:[%s553 + $0x90] sm:$0xff]
        %v2008 = vld [vmem:[%s553 + $0x98] sm:$0xff]
        %v2009 = vld [vmem:[%s553 + $0xa0] sm:$0xff]
        %v2010 = vld [vmem:[%s553 + $0xa8] sm:$0xff]
        %v2011 = vld [vmem:[%s553 + $0xb0] sm:$0xff]
        %v2012 = vld [vmem:[%s553 + $0xb8] sm:$0xff]
        %v2013 = vld [vmem:[%s553 + $0xc0] sm:$0xff]
        %v2014 = vld [vmem:[%s553 + $0xc8] sm:$0xff]
        %v2015 = vld [vmem:[%s553 + $0xd0] sm:$0xff]
        %v2016 = vld [vmem:[%s553 + $0xd8] sm:$0xff]
        %v2017 = vld [vmem:[%s553 + $0xe0] sm:$0xff]
        %v2018 = vld [vmem:[%s553 + $0xe8] sm:$0xff]
        %v2019 = vld [vmem:[%s553 + $0xf0] sm:$0xff]
        %v2020 = vld [vmem:[%s553 + $0xf8] sm:$0xff]
        %v2021 = vld [vmem:[%s553 + $0x100] sm:$0xff]
        %v2022 = vld [vmem:[%s553 + $0x108] sm:$0xff]
        %v2023 = vld [vmem:[%s553 + $0x110] sm:$0xff]
        %v2024 = vld [vmem:[%s553 + $0x118] sm:$0xff]
        %v2025 = vld [vmem:[%s553 + $0x120] sm:$0xff]
        %v2026 = vld [vmem:[%s553 + $0x128] sm:$0xff]
        %v2027 = vld [vmem:[%s553 + $0x130] sm:$0xff]
        %v2028 = vld [vmem:[%s553 + $0x138] sm:$0xff]
        %v2029 = vld [vmem:[%s553 + $0x140] sm:$0xff]
        %v2030 = vld [vmem:[%s553 + $0x148] sm:$0xff]
        %v2031 = vld [vmem:[%s553 + $0x150] sm:$0xff]
        %v2032 = vld [vmem:[%s553 + $0x158] sm:$0xff]
        %v2033 = vld [vmem:[%s553 + $0x160] sm:$0xff]
        %v2034 = vld [vmem:[%s553 + $0x168] sm:$0xff]
        %v2035 = vld [vmem:[%s553 + $0x170] sm:$0xff]
        %v2036 = vld [vmem:[%s553 + $0x178] sm:$0xff]
        %v2037 = vld [vmem:[%s553 + $0x180] sm:$0xff]
        %v2038 = vld [vmem:[%s553 + $0x188] sm:$0xff]
        %v2039 = vld [vmem:[%s553 + $0x190] sm:$0xff]
        %v2040 = vld [vmem:[%s553 + $0x198] sm:$0xff]
        %v2041 = vld [vmem:[%s553 + $0x1a0] sm:$0xff]
        %v2042 = vld [vmem:[%s553 + $0x1a8] sm:$0xff]
        %v2043 = vld [vmem:[%s553 + $0x1b0] sm:$0xff]
        %v2044 = vld [vmem:[%s553 + $0x1b8] sm:$0xff]
        %v2045 = vld [vmem:[%s553 + $0x1c0] sm:$0xff]
        %v2046 = vld [vmem:[%s553 + $0x1c8] sm:$0xff]
        %v2047 = vld [vmem:[%s553 + $0x1d0] sm:$0xff]
        %v2048 = vld [vmem:[%s553 + $0x1d8] sm:$0xff]
        %v2049 = vld [vmem:[%s553 + $0x1e0] sm:$0xff]
        %v2050 = vld [vmem:[%s553 + $0x1e8] sm:$0xff]
        %v2051 = vld [vmem:[%s553 + $0x1f0] sm:$0xff]
        %v2052 = vld [vmem:[%s553 + $0x1f8] sm:$0xff]
        %v2053 = vld [vmem:[%s553 + $0x200] sm:$0xff]
        %v2054 = vld [vmem:[%s553 + $0x208] sm:$0xff]
        %v2055 = vld [vmem:[%s553 + $0x210] sm:$0xff]
        %v2056 = vld [vmem:[%s553 + $0x218] sm:$0xff]
        %v2057 = vld [vmem:[%s553 + $0x220] sm:$0xff]
        %v2058 = vld [vmem:[%s553 + $0x228] sm:$0xff]
        %v2059 = vld [vmem:[%s553 + $0x230] sm:$0xff]
        %v2060 = vld [vmem:[%s553 + $0x238] sm:$0xff]
        %v2061 = vld [vmem:[%s553 + $0x240] sm:$0xff]
        %v2062 = vld [vmem:[%s553 + $0x248] sm:$0xff]
        %v2063 = vld [vmem:[%s553 + $0x250] sm:$0xff]
        %v2064 = vld [vmem:[%s553 + $0x258] sm:$0xff]
        %v2065 = vld [vmem:[%s553 + $0x260] sm:$0xff]
        %v2066 = vld [vmem:[%s553 + $0x268] sm:$0xff]
        %v2067 = vld [vmem:[%s553 + $0x270] sm:$0xff]
        %v2068 = vld [vmem:[%s553 + $0x278] sm:$0xff]
        %v2069 = vld [vmem:[%s553 + $0x280] sm:$0xff]
        %v2070 = vld [vmem:[%s553 + $0x288] sm:$0xff]
        %v2071 = vld [vmem:[%s553 + $0x290] sm:$0xff]
        %v2072 = vld [vmem:[%s553 + $0x298] sm:$0xff]
        %v2073 = vld [vmem:[%s553 + $0x2a0] sm:$0xff]
        %v2074 = vld [vmem:[%s553 + $0x2a8] sm:$0xff]
        %v2075 = vld [vmem:[%s553 + $0x2b0] sm:$0xff]
        %v2076 = vld [vmem:[%s553 + $0x2b8] sm:$0xff]
        %v2077 = vld [vmem:[%s553 + $0x2c0] sm:$0xff]
        %v2078 = vld [vmem:[%s553 + $0x2c8] sm:$0xff]
        %v2079 = vld [vmem:[%s553 + $0x2d0] sm:$0xff]
        %v2080 = vld [vmem:[%s553 + $0x2d8] sm:$0xff]
        %v2081 = vld [vmem:[%s553 + $0x2e0] sm:$0xff]
        %v2082 = vld [vmem:[%s553 + $0x2e8] sm:$0xff]
        %v2083 = vld [vmem:[%s553 + $0x2f0] sm:$0xff]
        %v2084 = vld [vmem:[%s553 + $0x2f8] sm:$0xff]
        %v2085 = vld [vmem:[%s682] sm:$0x3f]
        %v2087 = vlaneseq
        %v2088 = vshrl.u32 %v2087, 7
        %v2089 = vsub.s32 0, %v2088
        %v2090 = vrot.slane %v2085, %v2089
        %v2091 = vlaneseq
        %v2092 = vshrl.u32 %v2091, 7
        %v2093 = vsub.s32 1, %v2092
        %v2094 = vrot.slane %v2085, %v2093
        %v2095 = vlaneseq
        %v2096 = vshrl.u32 %v2095, 7
        %v2097 = vsub.s32 2, %v2096
        %v2098 = vrot.slane %v2085, %v2097
        %v2099 = vlaneseq
        %v2100 = vshrl.u32 %v2099, 7
        %v2101 = vsub.s32 3, %v2100
        %v2102 = vrot.slane %v2085, %v2101
        %v2103 = vlaneseq
        %v2104 = vshrl.u32 %v2103, 7
        %v2105 = vsub.s32 4, %v2104
        %v2106 = vrot.slane %v2085, %v2105
        %v2107 = vlaneseq
        %v2108 = vshrl.u32 %v2107, 7
        %v2109 = vsub.s32 5, %v2108
        %v2110 = vrot.slane %v2085, %v2109
        %v2213 = vunpack.c.l.b16 %v1989
        %v2214 = vunpack.c.h.b16 %v1989
        %v2215 = vunpack.c.l.b16 %v1990
        %v2216 = vunpack.c.h.b16 %v1990
        %v2217 = vunpack.c.l.b16 %v1991
        %v2218 = vunpack.c.h.b16 %v1991
        %v2219 = vunpack.c.l.b16 %v1992
        %v2220 = vunpack.c.h.b16 %v1992
        %v2221 = vunpack.c.l.b16 %v1993
        %v2222 = vunpack.c.h.b16 %v1993
        %v2223 = vunpack.c.l.b16 %v1994
        %v2224 = vunpack.c.h.b16 %v1994
        %v2225 = vunpack.c.l.b16 %v1995
        %v2226 = vunpack.c.h.b16 %v1995
        %v2227 = vunpack.c.l.b16 %v1996
        %v2228 = vunpack.c.h.b16 %v1996
        %v2229 = vunpack.c.l.b16 %v1997
        %v2230 = vunpack.c.h.b16 %v1997
        %v2231 = vunpack.c.l.b16 %v1998
        %v2232 = vunpack.c.h.b16 %v1998
        %v2233 = vunpack.c.l.b16 %v1999
        %v2234 = vunpack.c.h.b16 %v1999
        %v2235 = vunpack.c.l.b16 %v2000
        %v2236 = vunpack.c.h.b16 %v2000
        %v2237 = vunpack.c.l.b16 %v2001
        %v2238 = vunpack.c.h.b16 %v2001
        %v2239 = vunpack.c.l.b16 %v2002
        %v2240 = vunpack.c.h.b16 %v2002
        %v2241 = vunpack.c.l.b16 %v2003
        %v2242 = vunpack.c.h.b16 %v2003
        %v2243 = vunpack.c.l.b16 %v2004
        %v2244 = vunpack.c.h.b16 %v2004
        %v2245 = vunpack.c.l.b16 %v2005
        %v2246 = vunpack.c.h.b16 %v2005
        %v2247 = vunpack.c.l.b16 %v2006
        %v2248 = vunpack.c.h.b16 %v2006
        %v2249 = vunpack.c.l.b16 %v2007
        %v2250 = vunpack.c.h.b16 %v2007
        %v2251 = vunpack.c.l.b16 %v2008
        %v2252 = vunpack.c.h.b16 %v2008
        %v2253 = vunpack.c.l.b16 %v2009
        %v2254 = vunpack.c.h.b16 %v2009
        %v2255 = vunpack.c.l.b16 %v2010
        %v2256 = vunpack.c.h.b16 %v2010
        %v2257 = vunpack.c.l.b16 %v2011
        %v2258 = vunpack.c.h.b16 %v2011
        %v2259 = vunpack.c.l.b16 %v2012
        %v2260 = vunpack.c.h.b16 %v2012
        %v2261 = vunpack.c.l.b16 %v2013
        %v2262 = vunpack.c.h.b16 %v2013
        %v2263 = vunpack.c.l.b16 %v2014
        %v2264 = vunpack.c.h.b16 %v2014
        %v2265 = vunpack.c.l.b16 %v2015
        %v2266 = vunpack.c.h.b16 %v2015
        %v2267 = vunpack.c.l.b16 %v2016
        %v2268 = vunpack.c.h.b16 %v2016
        %v2269 = vunpack.c.l.b16 %v2017
        %v2270 = vunpack.c.h.b16 %v2017
        %v2271 = vunpack.c.l.b16 %v2018
        %v2272 = vunpack.c.h.b16 %v2018
        %v2273 = vunpack.c.l.b16 %v2019
        %v2274 = vunpack.c.h.b16 %v2019
        %v2275 = vunpack.c.l.b16 %v2020
        %v2276 = vunpack.c.h.b16 %v2020
        %v2277 = vunpack.c.l.b16 %v2021
        %v2278 = vunpack.c.h.b16 %v2021
        %v2279 = vunpack.c.l.b16 %v2022
        %v2280 = vunpack.c.h.b16 %v2022
        %v2281 = vunpack.c.l.b16 %v2023
        %v2282 = vunpack.c.h.b16 %v2023
        %v2283 = vunpack.c.l.b16 %v2024
        %v2284 = vunpack.c.h.b16 %v2024
        %v2285 = vunpack.c.l.b16 %v2025
        %v2286 = vunpack.c.h.b16 %v2025
        %v2287 = vunpack.c.l.b16 %v2026
        %v2288 = vunpack.c.h.b16 %v2026
        %v2289 = vunpack.c.l.b16 %v2027
        %v2290 = vunpack.c.h.b16 %v2027
        %v2291 = vunpack.c.l.b16 %v2028
        %v2292 = vunpack.c.h.b16 %v2028
        %v2293 = vunpack.c.l.b16 %v2029
        %v2294 = vunpack.c.h.b16 %v2029
        %v2295 = vunpack.c.l.b16 %v2030
        %v2296 = vunpack.c.h.b16 %v2030
        %v2297 = vunpack.c.l.b16 %v2031
        %v2298 = vunpack.c.h.b16 %v2031
        %v2299 = vunpack.c.l.b16 %v2032
        %v2300 = vunpack.c.h.b16 %v2032
        %v2301 = vunpack.c.l.b16 %v2033
        %v2302 = vunpack.c.h.b16 %v2033
        %v2303 = vunpack.c.l.b16 %v2034
        %v2304 = vunpack.c.h.b16 %v2034
        %v2305 = vunpack.c.l.b16 %v2035
        %v2306 = vunpack.c.h.b16 %v2035
        %v2307 = vunpack.c.l.b16 %v2036
        %v2308 = vunpack.c.h.b16 %v2036
        %v2309 = vunpack.c.l.b16 %v2037
        %v2310 = vunpack.c.h.b16 %v2037
        %v2311 = vunpack.c.l.b16 %v2038
        %v2312 = vunpack.c.h.b16 %v2038
        %v2313 = vunpack.c.l.b16 %v2039
        %v2314 = vunpack.c.h.b16 %v2039
        %v2315 = vunpack.c.l.b16 %v2040
        %v2316 = vunpack.c.h.b16 %v2040
        %v2317 = vunpack.c.l.b16 %v2041
        %v2318 = vunpack.c.h.b16 %v2041
        %v2319 = vunpack.c.l.b16 %v2042
        %v2320 = vunpack.c.h.b16 %v2042
        %v2321 = vunpack.c.l.b16 %v2043
        %v2322 = vunpack.c.h.b16 %v2043
        %v2323 = vunpack.c.l.b16 %v2044
        %v2324 = vunpack.c.h.b16 %v2044
        %v2325 = vunpack.c.l.b16 %v2045
        %v2326 = vunpack.c.h.b16 %v2045
        %v2327 = vunpack.c.l.b16 %v2046
        %v2328 = vunpack.c.h.b16 %v2046
        %v2329 = vunpack.c.l.b16 %v2047
        %v2330 = vunpack.c.h.b16 %v2047
        %v2331 = vunpack.c.l.b16 %v2048
        %v2332 = vunpack.c.h.b16 %v2048
        %v2333 = vunpack.c.l.b16 %v2049
        %v2334 = vunpack.c.h.b16 %v2049
        %v2335 = vunpack.c.l.b16 %v2050
        %v2336 = vunpack.c.h.b16 %v2050
        %v2337 = vunpack.c.l.b16 %v2051
        %v2338 = vunpack.c.h.b16 %v2051
        %v2339 = vunpack.c.l.b16 %v2052
        %v2340 = vunpack.c.h.b16 %v2052
        %v2341 = vunpack.c.l.b16 %v2053
        %v2342 = vunpack.c.h.b16 %v2053
        %v2343 = vunpack.c.l.b16 %v2054
        %v2344 = vunpack.c.h.b16 %v2054
        %v2345 = vunpack.c.l.b16 %v2055
        %v2346 = vunpack.c.h.b16 %v2055
        %v2347 = vunpack.c.l.b16 %v2056
        %v2348 = vunpack.c.h.b16 %v2056
        %v2349 = vunpack.c.l.b16 %v2057
        %v2350 = vunpack.c.h.b16 %v2057
        %v2351 = vunpack.c.l.b16 %v2058
        %v2352 = vunpack.c.h.b16 %v2058
        %v2353 = vunpack.c.l.b16 %v2059
        %v2354 = vunpack.c.h.b16 %v2059
        %v2355 = vunpack.c.l.b16 %v2060
        %v2356 = vunpack.c.h.b16 %v2060
        %v2357 = vunpack.c.l.b16 %v2061
        %v2358 = vunpack.c.h.b16 %v2061
        %v2359 = vunpack.c.l.b16 %v2062
        %v2360 = vunpack.c.h.b16 %v2062
        %v2361 = vunpack.c.l.b16 %v2063
        %v2362 = vunpack.c.h.b16 %v2063
        %v2363 = vunpack.c.l.b16 %v2064
        %v2364 = vunpack.c.h.b16 %v2064
        %v2365 = vunpack.c.l.b16 %v2065
        %v2366 = vunpack.c.h.b16 %v2065
        %v2367 = vunpack.c.l.b16 %v2066
        %v2368 = vunpack.c.h.b16 %v2066
        %v2369 = vunpack.c.l.b16 %v2067
        %v2370 = vunpack.c.h.b16 %v2067
        %v2371 = vunpack.c.l.b16 %v2068
        %v2372 = vunpack.c.h.b16 %v2068
        %v2373 = vunpack.c.l.b16 %v2069
        %v2374 = vunpack.c.h.b16 %v2069
        %v2375 = vunpack.c.l.b16 %v2070
        %v2376 = vunpack.c.h.b16 %v2070
        %v2377 = vunpack.c.l.b16 %v2071
        %v2378 = vunpack.c.h.b16 %v2071
        %v2379 = vunpack.c.l.b16 %v2072
        %v2380 = vunpack.c.h.b16 %v2072
        %v2381 = vunpack.c.l.b16 %v2073
        %v2382 = vunpack.c.h.b16 %v2073
        %v2383 = vunpack.c.l.b16 %v2074
        %v2384 = vunpack.c.h.b16 %v2074
        %v2385 = vunpack.c.l.b16 %v2075
        %v2386 = vunpack.c.h.b16 %v2075
        %v2387 = vunpack.c.l.b16 %v2076
        %v2388 = vunpack.c.h.b16 %v2076
        %v2389 = vunpack.c.l.b16 %v2077
        %v2390 = vunpack.c.h.b16 %v2077
        %v2391 = vunpack.c.l.b16 %v2078
        %v2392 = vunpack.c.h.b16 %v2078
        %v2393 = vunpack.c.l.b16 %v2079
        %v2394 = vunpack.c.h.b16 %v2079
        %v2395 = vunpack.c.l.b16 %v2080
        %v2396 = vunpack.c.h.b16 %v2080
        %v2397 = vunpack.c.l.b16 %v2081
        %v2398 = vunpack.c.h.b16 %v2081
        %v2399 = vunpack.c.l.b16 %v2082
        %v2400 = vunpack.c.h.b16 %v2082
        %v2401 = vunpack.c.l.b16 %v2083
        %v2402 = vunpack.c.h.b16 %v2083
        %v2403 = vunpack.c.l.b16 %v2084
        %v2404 = vunpack.c.h.b16 %v2084
        %v2405 = vpack.c.b16 %v2219, %v2213
        %v2406 = vpack.c.b16 %v2220, %v2214
        %v2407 = vpack.c.b16 %v2221, %v2215
        %v2408 = vpack.c.b16 %v2222, %v2216
        %v2409 = vpack.c.b16 %v2223, %v2217
        %v2410 = vpack.c.b16 %v2224, %v2218
        %v2411 = vpack.c.b16 %v2231, %v2225
        %v2412 = vpack.c.b16 %v2232, %v2226
        %v2413 = vpack.c.b16 %v2233, %v2227
        %v2414 = vpack.c.b16 %v2234, %v2228
        %v2415 = vpack.c.b16 %v2235, %v2229
        %v2416 = vpack.c.b16 %v2236, %v2230
        %v2417 = vpack.c.b16 %v2243, %v2237
        %v2418 = vpack.c.b16 %v2244, %v2238
        %v2419 = vpack.c.b16 %v2245, %v2239
        %v2420 = vpack.c.b16 %v2246, %v2240
        %v2421 = vpack.c.b16 %v2247, %v2241
        %v2422 = vpack.c.b16 %v2248, %v2242
        %v2423 = vpack.c.b16 %v2255, %v2249
        %v2424 = vpack.c.b16 %v2256, %v2250
        %v2425 = vpack.c.b16 %v2257, %v2251
        %v2426 = vpack.c.b16 %v2258, %v2252
        %v2427 = vpack.c.b16 %v2259, %v2253
        %v2428 = vpack.c.b16 %v2260, %v2254
        %v2429 = vpack.c.b16 %v2267, %v2261
        %v2430 = vpack.c.b16 %v2268, %v2262
        %v2431 = vpack.c.b16 %v2269, %v2263
        %v2432 = vpack.c.b16 %v2270, %v2264
        %v2433 = vpack.c.b16 %v2271, %v2265
        %v2434 = vpack.c.b16 %v2272, %v2266
        %v2435 = vpack.c.b16 %v2279, %v2273
        %v2436 = vpack.c.b16 %v2280, %v2274
        %v2437 = vpack.c.b16 %v2281, %v2275
        %v2438 = vpack.c.b16 %v2282, %v2276
        %v2439 = vpack.c.b16 %v2283, %v2277
        %v2440 = vpack.c.b16 %v2284, %v2278
        %v2441 = vpack.c.b16 %v2291, %v2285
        %v2442 = vpack.c.b16 %v2292, %v2286
        %v2443 = vpack.c.b16 %v2293, %v2287
        %v2444 = vpack.c.b16 %v2294, %v2288
        %v2445 = vpack.c.b16 %v2295, %v2289
        %v2446 = vpack.c.b16 %v2296, %v2290
        %v2447 = vpack.c.b16 %v2303, %v2297
        %v2448 = vpack.c.b16 %v2304, %v2298
        %v2449 = vpack.c.b16 %v2305, %v2299
        %v2450 = vpack.c.b16 %v2306, %v2300
        %v2451 = vpack.c.b16 %v2307, %v2301
        %v2452 = vpack.c.b16 %v2308, %v2302
        %v2453 = vpack.c.b16 %v2315, %v2309
        %v2454 = vpack.c.b16 %v2316, %v2310
        %v2455 = vpack.c.b16 %v2317, %v2311
        %v2456 = vpack.c.b16 %v2318, %v2312
        %v2457 = vpack.c.b16 %v2319, %v2313
        %v2458 = vpack.c.b16 %v2320, %v2314
        %v2459 = vpack.c.b16 %v2327, %v2321
        %v2460 = vpack.c.b16 %v2328, %v2322
        %v2461 = vpack.c.b16 %v2329, %v2323
        %v2462 = vpack.c.b16 %v2330, %v2324
        %v2463 = vpack.c.b16 %v2331, %v2325
        %v2464 = vpack.c.b16 %v2332, %v2326
        %v2465 = vpack.c.b16 %v2339, %v2333
        %v2466 = vpack.c.b16 %v2340, %v2334
        %v2467 = vpack.c.b16 %v2341, %v2335
        %v2468 = vpack.c.b16 %v2342, %v2336
        %v2469 = vpack.c.b16 %v2343, %v2337
        %v2470 = vpack.c.b16 %v2344, %v2338
        %v2471 = vpack.c.b16 %v2351, %v2345
        %v2472 = vpack.c.b16 %v2352, %v2346
        %v2473 = vpack.c.b16 %v2353, %v2347
        %v2474 = vpack.c.b16 %v2354, %v2348
        %v2475 = vpack.c.b16 %v2355, %v2349
        %v2476 = vpack.c.b16 %v2356, %v2350
        %v2477 = vpack.c.b16 %v2363, %v2357
        %v2478 = vpack.c.b16 %v2364, %v2358
        %v2479 = vpack.c.b16 %v2365, %v2359
        %v2480 = vpack.c.b16 %v2366, %v2360
        %v2481 = vpack.c.b16 %v2367, %v2361
        %v2482 = vpack.c.b16 %v2368, %v2362
        %v2483 = vpack.c.b16 %v2375, %v2369
        %v2484 = vpack.c.b16 %v2376, %v2370
        %v2485 = vpack.c.b16 %v2377, %v2371
        %v2486 = vpack.c.b16 %v2378, %v2372
        %v2487 = vpack.c.b16 %v2379, %v2373
        %v2488 = vpack.c.b16 %v2380, %v2374
        %v2489 = vpack.c.b16 %v2387, %v2381
        %v2490 = vpack.c.b16 %v2388, %v2382
        %v2491 = vpack.c.b16 %v2389, %v2383
        %v2492 = vpack.c.b16 %v2390, %v2384
        %v2493 = vpack.c.b16 %v2391, %v2385
        %v2494 = vpack.c.b16 %v2392, %v2386
        %v2495 = vpack.c.b16 %v2399, %v2393
        %v2496 = vpack.c.b16 %v2400, %v2394
        %v2497 = vpack.c.b16 %v2401, %v2395
        %v2498 = vpack.c.b16 %v2402, %v2396
        %v2499 = vpack.c.b16 %v2403, %v2397
        %v2500 = vpack.c.b16 %v2404, %v2398
        %2597 = vmatprep.subr.bf16.mxu0 %v2448
        %2598 = vmatpush1.bf16.msra.mxu0 %v2447
        %2599 = vmatprep.subr.bf16.mxu0 %v2442
        %2600 = vmatpush1.bf16.msra.mxu0 %v2441
        %2601 = vmatprep.subr.bf16.mxu0 %v2436
        %2602 = vmatpush1.bf16.msra.mxu0 %v2435
        %2603 = vmatprep.subr.bf16.mxu0 %v2430
        %2604 = vmatpush1.bf16.msra.mxu0 %v2429
        %2605 = vmatprep.subr.bf16.mxu0 %v2424
        %2606 = vmatpush1.bf16.msra.mxu0 %v2423
        %2607 = vmatprep.subr.bf16.mxu0 %v2418
        %2608 = vmatpush1.bf16.msra.mxu0 %v2417
        %2609 = vmatprep.subr.bf16.mxu0 %v2412
        %2610 = vmatpush1.bf16.msra.mxu0 %v2411
        %2611 = vmatprep.subr.bf16.mxu0 %v2406
        %2612 = vmatpush1.bf16.msra.mxu0 %v2405
        %2613 = vmatprep.subr.bf16.mxu0 %v2496
        %2614 = vmatpush2.bf16.msra.mxu0 %v2495
        %2615 = vmatprep.subr.bf16.mxu0 %v2490
        %2616 = vmatpush2.bf16.msra.mxu0 %v2489
        %2617 = vmatprep.subr.bf16.mxu0 %v2484
        %2618 = vmatpush2.bf16.msra.mxu0 %v2483
        %2619 = vmatprep.subr.bf16.mxu0 %v2478
        %2620 = vmatpush2.bf16.msra.mxu0 %v2477
        %2621 = vmatprep.subr.bf16.mxu0 %v2472
        %2622 = vmatpush2.bf16.msra.mxu0 %v2471
        %2623 = vmatprep.subr.bf16.mxu0 %v2466
        %2624 = vmatpush2.bf16.msra.mxu0 %v2465
        %2625 = vmatprep.subr.bf16.mxu0 %v2460
        %2626 = vmatpush2.bf16.msra.mxu0 %v2459
        %2627 = vmatprep.subr.bf16.mxu0 %v2454
        %2628 = vmatpush2.bf16.msra.mxu0 %v2453
        %2629 = vmatprep.mubr.bf16.mxu0 %v1988
        %2630 = vmatmul.mubr.bf16.gmra.mxu0 %v1987
        %v2631 = vpop.f32.mrf.mxu0
        %v2632 = vadd.f32 %v2090, %v2631
        %v2633 = vpop.f32.mrf.mxu0
        %v2634 = vadd.f32 %v2094, %v2633
        %v2635 = vpop.f32.mrf.mxu0
        %v2636 = vpop.f32.mrf.mxu0
        %2637 = vdwg.mxu0
        %2638 = vmatprep.subr.bf16.mxu0 %v2450
        %2639 = vmatpush1.bf16.msra.mxu0 %v2449
        %2640 = vmatprep.subr.bf16.mxu0 %v2444
        %2641 = vmatpush1.bf16.msra.mxu0 %v2443
        %2642 = vmatprep.subr.bf16.mxu0 %v2438
        %2643 = vmatpush1.bf16.msra.mxu0 %v2437
        %2644 = vmatprep.subr.bf16.mxu0 %v2432
        %2645 = vmatpush1.bf16.msra.mxu0 %v2431
        %2646 = vmatprep.subr.bf16.mxu0 %v2426
        %2647 = vmatpush1.bf16.msra.mxu0 %v2425
        %2648 = vmatprep.subr.bf16.mxu0 %v2420
        %2649 = vmatpush1.bf16.msra.mxu0 %v2419
        %2650 = vmatprep.subr.bf16.mxu0 %v2414
        %2651 = vmatpush1.bf16.msra.mxu0 %v2413
        %2652 = vmatprep.subr.bf16.mxu0 %v2408
        %2653 = vmatpush1.bf16.msra.mxu0 %v2407
        %2654 = vmatprep.subr.bf16.mxu0 %v2498
        %2655 = vmatpush2.bf16.msra.mxu0 %v2497
        %2656 = vmatprep.subr.bf16.mxu0 %v2492
        %2657 = vmatpush2.bf16.msra.mxu0 %v2491
        %2658 = vmatprep.subr.bf16.mxu0 %v2486
        %2659 = vmatpush2.bf16.msra.mxu0 %v2485
        %2660 = vmatprep.subr.bf16.mxu0 %v2480
        %2661 = vmatpush2.bf16.msra.mxu0 %v2479
        %2662 = vmatprep.subr.bf16.mxu0 %v2474
        %2663 = vmatpush2.bf16.msra.mxu0 %v2473
        %2664 = vmatprep.subr.bf16.mxu0 %v2468
        %2665 = vmatpush2.bf16.msra.mxu0 %v2467
        %2666 = vmatprep.subr.bf16.mxu0 %v2462
        %2667 = vmatpush2.bf16.msra.mxu0 %v2461
        %2668 = vmatprep.subr.bf16.mxu0 %v2456
        %2669 = vmatpush2.bf16.msra.mxu0 %v2455
        %2670 = vmatprep.mubr.bf16.mxu0 %v1988
        %2671 = vmatmul.mubr.bf16.gmra.mxu0 %v1987
        %v2672 = vpop.f32.mrf.mxu0
        %v2673 = vadd.f32 %v2098, %v2672
        %v2674 = vpop.f32.mrf.mxu0
        %v2675 = vadd.f32 %v2102, %v2674
        %v2676 = vpop.f32.mrf.mxu0
        %v2677 = vpop.f32.mrf.mxu0
        %2678 = vdwg.mxu0
        %2679 = vmatprep.subr.bf16.mxu0 %v2452
        %2680 = vmatpush1.bf16.msra.mxu0 %v2451
        %2681 = vmatprep.subr.bf16.mxu0 %v2446
        %2682 = vmatpush1.bf16.msra.mxu0 %v2445
        %2683 = vmatprep.subr.bf16.mxu0 %v2440
        %2684 = vmatpush1.bf16.msra.mxu0 %v2439
        %2685 = vmatprep.subr.bf16.mxu0 %v2434
        %2686 = vmatpush1.bf16.msra.mxu0 %v2433
        %2687 = vmatprep.subr.bf16.mxu0 %v2428
        %2688 = vmatpush1.bf16.msra.mxu0 %v2427
        %2689 = vmatprep.subr.bf16.mxu0 %v2422
        %2690 = vmatpush1.bf16.msra.mxu0 %v2421
        %2691 = vmatprep.subr.bf16.mxu0 %v2416
        %2692 = vmatpush1.bf16.msra.mxu0 %v2415
        %2693 = vmatprep.subr.bf16.mxu0 %v2410
        %2694 = vmatpush1.bf16.msra.mxu0 %v2409
        %2695 = vmatprep.subr.bf16.mxu0 %v2500
        %2696 = vmatpush2.bf16.msra.mxu0 %v2499
        %2697 = vmatprep.subr.bf16.mxu0 %v2494
        %2698 = vmatpush2.bf16.msra.mxu0 %v2493
        %2699 = vmatprep.subr.bf16.mxu0 %v2488
        %2700 = vmatpush2.bf16.msra.mxu0 %v2487
        %2701 = vmatprep.subr.bf16.mxu0 %v2482
        %2702 = vmatpush2.bf16.msra.mxu0 %v2481
        %2703 = vmatprep.subr.bf16.mxu0 %v2476
        %2704 = vmatpush2.bf16.msra.mxu0 %v2475
        %2705 = vmatprep.subr.bf16.mxu0 %v2470
        %2706 = vmatpush2.bf16.msra.mxu0 %v2469
        %2707 = vmatprep.subr.bf16.mxu0 %v2464
        %2708 = vmatpush2.bf16.msra.mxu0 %v2463
        %2709 = vmatprep.subr.bf16.mxu0 %v2458
        %2710 = vmatpush2.bf16.msra.mxu0 %v2457
        %2711 = vmatprep.mubr.bf16.mxu0 %v1988
        %2712 = vmatmul.mubr.bf16.gmra.mxu0 %v1987
        %v2713 = vpop.f32.mrf.mxu0
        %v2714 = vadd.f32 %v2106, %v2713
        %v2715 = vpop.f32.mrf.mxu0
        %v2716 = vadd.f32 %v2110, %v2715
        %v2717 = vpop.f32.mrf.mxu0
        %v2718 = vpop.f32.mrf.mxu0
        %2719 = vdwg.mxu0
        %2720 = vst [vmem:[%s687] sm:$0xff] %v2632
        %2721 = vst [vmem:[%s687 + $0x8] sm:$0xff] %v2634
        %2722 = vst [vmem:[%s687 + $0x10] sm:$0xff] %v2673
        %2723 = vst [vmem:[%s687 + $0x18] sm:$0xff] %v2675
        %2724 = vst [vmem:[%s687 + $0x20] sm:$0xff] %v2714
        %2725 = vst [vmem:[%s687 + $0x28] sm:$0xff] %v2716
        %2726 = vst [vmem:[%s692] sm:$0xff] %v1732
        %2727 = vst [vmem:[%s692 + $0x8] sm:$0xff] %v1733
        %2728 = vst [vmem:[%s697] sm:$0xff] %v1645
        %2729 = vst [vmem:[%s697 + $0x8] sm:$0xff] %v1647
        %2730 = vst [vmem:[%s702] sm:$0xff] %v1716
        %2731 = vst [vmem:[%s702 + $0x8] sm:$0xff] %v1718
        %p2732 = scmp.lt.s32.totalorder %s31, 1
        %s2733 = scalar_select %p2732, %s31, 1
        %s2734 = smul.addr %s2733, 6
        %s2735 = smul.addr %s2734, 8
        %s2736 = scalar_lea.vmem %s10, %s2735
        %p2737 = scmp.lt.s32.totalorder %s31, 1
        %s2738 = scalar_select %p2737, %s31, 1
        %s2739 = smul.addr %s2738, 2
        %s2740 = smul.addr %s2739, 8
        %s2741 = scalar_lea.vmem %s11, %s2740
        %p2742 = scmp.lt.s32.totalorder %s31, 1
        %s2743 = scalar_select %p2742, %s31, 1
        %s2744 = smul.addr %s2743, 2
        %s2745 = smul.addr %s2744, 8
        %s2746 = scalar_lea.vmem %s12, %s2745
        %p2747 = scmp.lt.s32.totalorder %s31, 1
        %s2748 = scalar_select %p2747, %s31, 1
        %s2749 = smul.addr %s2748, 2
        %s2750 = smul.addr %s2749, 8
        %s2751 = scalar_lea.vmem %s13, %s2750
        // Predicated region
        $region73: #{mcvae_forward.1} parent=59 // pred_check
          %p2752 = pneg %p309
        $region74: #{mcvae_forward.1} parent=59 // pred_check_branch
          %2754 = sbr.rel (%p2752) target = $region76
        $region75: #{mcvae_forward.1} parent=59 // pred_region
          _
        $region76: #{mcvae_forward.1} parent=59 // pred_fallthru
          _
        // Predicated region
        $region77: #{mcvae_forward.1} parent=59 // pred_check
          %p2755 = pneg %p335
        $region78: #{mcvae_forward.1} parent=59 // pred_check_branch
          %2757 = sbr.rel (%p2755) target = $region80
        $region79: #{mcvae_forward.1} parent=59 // pred_region
          _
        $region80: #{mcvae_forward.1} parent=59 // pred_fallthru
          _
        // Predicated region
        $region81: #{mcvae_forward.1} parent=59 // pred_check
          %p2758 = pneg %p361
        $region82: #{mcvae_forward.1} parent=59 // pred_check_branch
          %2760 = sbr.rel (%p2758) target = $region84
        $region83: #{mcvae_forward.1} parent=59 // pred_region
          _
        $region84: #{mcvae_forward.1} parent=59 // pred_fallthru
          _
        // Predicated region
        $region85: #{mcvae_forward.1} parent=59 // pred_check
          %p2761 = pneg %p387
        $region86: #{mcvae_forward.1} parent=59 // pred_check_branch
          %2763 = sbr.rel (%p2761) target = $region88
        $region87: #{mcvae_forward.1} parent=59 // pred_region
          _
        $region88: #{mcvae_forward.1} parent=59 // pred_fallthru
          _
      $region60: #{mcvae_forward.1} parent=5 // pred_fallthru
        _
      %p2764 = scmp.le.s32.totalorder 2, %s26
      // Predicated region
      $region89: #{mcvae_forward.1} parent=5 // pred_check
        %p2765 = pneg %p2764
      $region90: #{mcvae_forward.1} parent=5 // pred_check_branch
        %2767 = sbr.rel (%p2765) target = $region92
      $region91: #{mcvae_forward.1} parent=5 // pred_region
        %s2768 = ssub.s32 %s26, 2
        // Predicated region
        $region93: #{mcvae_forward.1} parent=91 // pred_check
          %p2769 = pneg %p315
        $region94: #{mcvae_forward.1} parent=91 // pred_check_branch
          %2771 = sbr.rel (%p2769) target = $region96
        $region95: #{mcvae_forward.1} parent=91 // pred_region
          %p2772 = scmp.lt.s32.totalorder %s32, 1
          %s2773 = scalar_select %p2772, %s32, 1
          %s2774 = smul.addr %s2773, 6
          %s2775 = smul.addr %s2774, 8
          %s2776 = scalar_lea.vmem %s10, %s2775
        $region96: #{mcvae_forward.1} parent=91 // pred_fallthru
          _
        // Predicated region
        $region97: #{mcvae_forward.1} parent=91 // pred_check
          %p2777 = pneg %p341
        $region98: #{mcvae_forward.1} parent=91 // pred_check_branch
          %2779 = sbr.rel (%p2777) target = $region100
        $region99: #{mcvae_forward.1} parent=91 // pred_region
          %p2780 = scmp.lt.s32.totalorder %s32, 1
          %s2781 = scalar_select %p2780, %s32, 1
          %s2782 = smul.addr %s2781, 2
          %s2783 = smul.addr %s2782, 8
          %s2784 = scalar_lea.vmem %s11, %s2783
        $region100: #{mcvae_forward.1} parent=91 // pred_fallthru
          _
        // Predicated region
        $region101: #{mcvae_forward.1} parent=91 // pred_check
          %p2785 = pneg %p367
        $region102: #{mcvae_forward.1} parent=91 // pred_check_branch
          %2787 = sbr.rel (%p2785) target = $region104
        $region103: #{mcvae_forward.1} parent=91 // pred_region
          %p2788 = scmp.lt.s32.totalorder %s32, 1
          %s2789 = scalar_select %p2788, %s32, 1
          %s2790 = smul.addr %s2789, 2
          %s2791 = smul.addr %s2790, 8
          %s2792 = scalar_lea.vmem %s12, %s2791
        $region104: #{mcvae_forward.1} parent=91 // pred_fallthru
          _
        // Predicated region
        $region105: #{mcvae_forward.1} parent=91 // pred_check
          %p2793 = pneg %p393
        $region106: #{mcvae_forward.1} parent=91 // pred_check_branch
          %2795 = sbr.rel (%p2793) target = $region108
        $region107: #{mcvae_forward.1} parent=91 // pred_region
          %p2796 = scmp.lt.s32.totalorder %s32, 1
          %s2797 = scalar_select %p2796, %s32, 1
          %s2798 = smul.addr %s2797, 2
          %s2799 = smul.addr %s2798, 8
          %s2800 = scalar_lea.vmem %s13, %s2799
        $region108: #{mcvae_forward.1} parent=91 // pred_fallthru
          _
      $region92: #{mcvae_forward.1} parent=5 // pred_fallthru
        _
    $region6: #{mcvae_forward.1} parent=1 // loop_footer
      %s30 = sadd.s32 1, %s26
    $region7: #{mcvae_forward.1} parent=1 // loop_footer_branch
      %25 = sbr.rel target = $region3
    $region8: #{mcvae_forward.1} parent=1 // loop_exit
      _
    %2801 = vsyncpa [#allocation3], 1
    %s2802 = scalar_lea.sflag [#allocation3], 1
    %2803 = vsyncpa %s2802, 1
    %2804 = vsyncpa [#allocation5], 1
    %s2805 = scalar_lea.sflag [#allocation5], 1
    %2806 = vsyncpa %s2805, 1

</llo_original>
